<compile_context>
chip_gen: v7x
topology: tpu7x:2x2x1
jax: 0.10.0
libtpu: 0.0.40
codegen_flags: <defaults>
</compile_context>

<pallas_src>
import functools

import jax
import jax.numpy as jnp
from jax.experimental import pallas as pl
from jax.experimental.pallas import tpu as pltpu


# ----------------------------------------------------------------------------
# Small helpers
# ----------------------------------------------------------------------------
def _leaky(h):
    return jnp.where(h >= 0, h, 0.2 * h)


def _tile(n, tile_n):
    tn = min(tile_n, n)
    assert n % tn == 0, f"num_points={n} must be divisible by the N tile {tn}"
    return tn


def _wspec(arr):
    """BlockSpec for a small weight/bias array: whole array, constant block index."""
    zeros = (0,) * arr.ndim
    return pl.BlockSpec(arr.shape, lambda b, n, _z=zeros: _z)


def _cparams(sems, vmem_limit=None):
    kw = dict(dimension_semantics=sems)
    if vmem_limit is not None:
        kw["vmem_limit_bytes"] = int(vmem_limit)
    return pltpu.CompilerParams(**kw)


# ----------------------------------------------------------------------------
# Pallas kernels
# ----------------------------------------------------------------------------
def _pq_kernel(x_ref, wa_ref, wq_ref, bq_ref, p_ref, q_ref):
    """p = x @ Wa', q = x @ (Wb' - Wa') + shift  (BN scale already folded into W)."""
    x = x_ref[...].astype(jnp.bfloat16)
    p = jnp.dot(x, wa_ref[...], preferred_element_type=jnp.float32)
    q = jnp.dot(x, wq_ref[...], preferred_element_type=jnp.float32) + bq_ref[...]
    p_ref[...] = p.astype(p_ref.dtype)
    q_ref[...] = q.astype(q_ref.dtype)


# ---- edge tails, pre-gathered p (fallback path; neighbour axis K leads) -----
def _edge1_pre_kernel(p_ref, q_ref, out_ref):
    h = _leaky(p_ref[...] + q_ref[...][None])                   # (K, tn, C1) bf16
    out_ref[...] = jnp.max(h, axis=0).astype(out_ref.dtype)


def _edge2_pre_kernel(p_ref, q_ref, w2_ref, b2_ref, out_ref):
    h = _leaky(p_ref[...] + q_ref[...][None])                   # (K, tn, C1) bf16
    kk, tn, c1 = h.shape
    h2 = jnp.dot(h.reshape(kk * tn, c1), w2_ref[...],
                 preferred_element_type=jnp.float32)
    h2 = _leaky(h2 + b2_ref[...]).astype(jnp.bfloat16)
    out_ref[...] = jnp.max(h2.reshape(kk, tn, -1), axis=0).astype(out_ref.dtype)


# ---- edge tails with in-kernel gather (whole-batch p resident in VMEM) ------
def _gather_rows(p_ref, idx_ref):
    n_full, c1 = p_ref.shape
    tn, kk = idx_ref.shape
    idx = jnp.broadcast_to(idx_ref[...].reshape(tn * kk, 1), (tn * kk, c1))
    nbr = jnp.take_along_axis(p_ref[...], idx, axis=0)          # (tn*K, C1) bf16
    return nbr.reshape(tn, kk, c1)


def _edge1_gat_kernel(p_ref, idx_ref, q_ref, out_ref):
    h = _leaky(_gather_rows(p_ref, idx_ref) + q_ref[...][:, None, :])
    out_ref[...] = jnp.max(h, axis=1).astype(out_ref.dtype)


def _edge2_gat_kernel(p_ref, idx_ref, q_ref, w2_ref, b2_ref, out_ref):
    h = _leaky(_gather_rows(p_ref, idx_ref) + q_ref[...][:, None, :])
    tn, kk, c1 = h.shape
    h2 = jnp.dot(h.reshape(tn * kk, c1), w2_ref[...],
                 preferred_element_type=jnp.float32)
    h2 = _leaky(h2 + b2_ref[...]).astype(jnp.bfloat16)
    out_ref[...] = jnp.max(h2.reshape(tn, kk, -1), axis=1).astype(out_ref.dtype)


def _global_feat_kernel(x_ref, w_ref, b_ref, out_ref):
    """conv6 (folded BN) + LeakyReLU with running point-max in the resident output."""
    h = jnp.dot(x_ref[...], w_ref[...], preferred_element_type=jnp.float32)
    h = _leaky(h + b_ref[...])
    tmax = jnp.max(h, axis=0, keepdims=True)

    @pl.when(pl.program_id(1) == 0)
    def _():
        out_ref[...] = tmax.astype(out_ref.dtype)

    @pl.when(pl.program_id(1) > 0)
    def _():
        out_ref[...] = jnp.maximum(out_ref[...], tmax.astype(out_ref.dtype))


def _head_kernel(x_ref, gb_ref, w7_ref, w8_ref, b8_ref, w9_ref, out_ref):
    """Fused conv7 + conv8 + (eval dropout = id) + conv9; the global-vector term and b7
    are pre-folded into gb; intermediates are cast to bf16 right after each LeakyReLU."""
    h = jnp.dot(x_ref[...], w7_ref[...], preferred_element_type=jnp.float32)
    h = _leaky(h + gb_ref[...]).astype(jnp.bfloat16)            # conv7
    h = jnp.dot(h, w8_ref[...], preferred_element_type=jnp.float32)
    h = _leaky(h + b8_ref[...]).astype(jnp.bfloat16)            # conv8
    out_ref[...] = jnp.dot(h, w9_ref[...],                      # conv9
                           preferred_element_type=jnp.float32).astype(out_ref.dtype)


# ----------------------------------------------------------------------------
# Pallas wrappers: grid = (batch, N // tile_n)
# ----------------------------------------------------------------------------
def pq_conv(x, pq_params, tile_n, vmem_limit=None):
    wa, wq, bq = pq_params
    B, N, Cin = x.shape
    C1 = wa.shape[1]
    tn = _tile(N, tile_n)
    row_spec = pl.BlockSpec((None, tn, C1), lambda b, n: (b, n, 0))
    return pl.pallas_call(
        _pq_kernel,
        grid=(B, N // tn),
        in_specs=[pl.BlockSpec((None, tn, Cin), lambda b, n: (b, n, 0)),
                  _wspec(wa), _wspec(wq), _wspec(bq)],
        out_specs=(row_spec, row_spec),
        out_shape=(jax.ShapeDtypeStruct((B, N, C1), jnp.bfloat16),
                   jax.ShapeDtypeStruct((B, N, C1), jnp.bfloat16)),
        compiler_params=_cparams(("parallel", "parallel"), vmem_limit),
    )(x, wa, wq, bq)


def edge_tail_pre(p_gathered, q, layer2, tile_n, vmem_limit=None):
    """p_gathered: (B, K, N, C1) bf16 (neighbour-major), q: (B, N, C1) bf16."""
    B, K, N, C1 = p_gathered.shape
    tn = _tile(N, tile_n)
    p_spec = pl.BlockSpec((None, K, tn, C1), lambda b, n: (b, 0, n, 0))
    q_spec = pl.BlockSpec((None, tn, C1), lambda b, n: (b, n, 0))
    if layer2 is not None:
        w2, b2 = layer2
        c_out = w2.shape[1]
        kernel = _edge2_pre_kernel
        in_specs = [p_spec, q_spec, _wspec(w2), _wspec(b2)]
        operands = (p_gathered, q, w2, b2)
    else:
        c_out = C1
        kernel = _edge1_pre_kernel
        in_specs = [p_spec, q_spec]
        operands = (p_gathered, q)
    return pl.pallas_call(
        kernel,
        grid=(B, N // tn),
        in_specs=in_specs,
        out_specs=pl.BlockSpec((None, tn, c_out), lambda b, n: (b, n, 0)),
        out_shape=jax.ShapeDtypeStruct((B, N, c_out), jnp.bfloat16),
        compiler_params=_cparams(("parallel", "parallel"), vmem_limit),
    )(*operands)


def edge_tail_gather(p, idx, q, layer2, tile_n, vmem_limit=None):
    """p: (B, N, C1) bf16 (whole batch resident per grid step), idx: (B, N, K) int32."""
    B, N, C1 = p.shape
    K = idx.shape[-1]
    tn = _tile(N, tile_n)
    p_spec = pl.BlockSpec((None, N, C1), lambda b, n: (b, 0, 0))
    idx_spec = pl.BlockSpec((None, tn, K), lambda b, n: (b, n, 0))
    q_spec = pl.BlockSpec((None, tn, C1), lambda b, n: (b, n, 0))
    if layer2 is not None:
        w2, b2 = layer2
        c_out = w2.shape[1]
        kernel = _edge2_gat_kernel
        in_specs = [p_spec, idx_spec, q_spec, _wspec(w2), _wspec(b2)]
        operands = (p, idx, q, w2, b2)
    else:
        c_out = C1
        kernel = _edge1_gat_kernel
        in_specs = [p_spec, idx_spec, q_spec]
        operands = (p, idx, q)
    return pl.pallas_call(
        kernel,
        grid=(B, N // tn),
        in_specs=in_specs,
        out_specs=pl.BlockSpec((None, tn, c_out), lambda b, n: (b, n, 0)),
        out_shape=jax.ShapeDtypeStruct((B, N, c_out), jnp.bfloat16),
        compiler_params=_cparams(("parallel", "parallel"), vmem_limit),
    )(*operands)


def global_feature(xcat, conv6_params, tile_n, vmem_limit=None):
    w6, b6 = conv6_params
    B, N, C = xcat.shape
    emb = w6.shape[1]
    tn = _tile(N, tile_n)
    return pl.pallas_call(
        _global_feat_kernel,
        grid=(B, N // tn),
        in_specs=[pl.BlockSpec((None, tn, C), lambda b, n: (b, n, 0)),
                  _wspec(w6), _wspec(b6)],
        out_specs=pl.BlockSpec((None, 1, emb), lambda b, n: (b, 0, 0)),
        out_shape=jax.ShapeDtypeStruct((B, 1, emb), jnp.float32),
        compiler_params=_cparams(("parallel", "arbitrary"), vmem_limit),
    )(xcat, w6, b6)


def seg_head(xcat, gbias, hp, tile_n, vmem_limit=None):
    B, N, C = xcat.shape
    c7 = hp['w7x'].shape[1]
    n_cls = hp['w9'].shape[1]
    tn = _tile(N, tile_n)
    return pl.pallas_call(
        _head_kernel,
        grid=(B, N // tn),
        in_specs=[pl.BlockSpec((None, tn, C), lambda b, n: (b, n, 0)),
                  pl.BlockSpec((None, 1, c7), lambda b, n: (b, 0, 0)),
                  _wspec(hp['w7x']), _wspec(hp['w8']), _wspec(hp['b8']),
                  _wspec(hp['w9'])],
        out_specs=pl.BlockSpec((None, tn, n_cls), lambda b, n: (b, n, 0)),
        out_shape=jax.ShapeDtypeStruct((B, N, n_cls), jnp.float32),
        compiler_params=_cparams(("parallel", "parallel"), vmem_limit),
    )(xcat, gbias, hp['w7x'], hp['w8'], hp['b8'], hp['w9'])


# ----------------------------------------------------------------------------
# XLA glue: kNN (data-dependent top-k) + optional gather fallback
# ----------------------------------------------------------------------------
def knn_idx(feat, k):
    """feat: (B, N, C) -> (B, N, k) nearest-neighbour indices (includes self)."""
    f = feat.astype(jnp.float32)
    inner = jnp.einsum('bnc,bmc->bnm', f, f, preferred_element_type=jnp.float32)
    sq = jnp.sum(f * f, axis=-1)
    neg_dist = 2.0 * inner - sq[:, :, None] - sq[:, None, :]     # -||xi - xj||^2
    # TODO(synk): Pallas tiled pairwise-distance + running-top-k kernel.
    return jax.lax.top_k(neg_dist, k)[1]


def edge_block(x_feat, knn_feat, pq_params, layer2, k, tile_n, in_kernel_gather,
               vmem_limit=None):
    """One EdgeConv block: kNN -> p/q point convs -> neighbour gather -> Pallas tail."""
    idx = knn_idx(knn_feat, k)                                   # (B, N, k)
    p, q = pq_conv(x_feat, pq_params, tile_n, vmem_limit)        # (B, N, C1) bf16 each
    if in_kernel_gather:
        out = edge_tail_gather(p, idx, q, layer2, tile_n, vmem_limit)
    else:
        idx_t = jnp.transpose(idx, (0, 2, 1))                    # (B, k, N)
        p_g = jax.vmap(lambda pb, ib: pb[ib])(p, idx_t)          # (B, k, N, C1) bf16
        out = edge_tail_pre(p_g, q, layer2, tile_n, vmem_limit)
    return out, idx


# ----------------------------------------------------------------------------
# Probe: does this Mosaic backend support the in-kernel sublane gather?
# ----------------------------------------------------------------------------
def _gather_probe_kernel(p_ref, idx_ref, o_ref):
    tn, kk = idx_ref.shape
    c = p_ref.shape[-1]
    idx = jnp.broadcast_to(idx_ref[...].reshape(tn * kk, 1), (tn * kk, c))
    o_ref[...] = jnp.take_along_axis(p_ref[...], idx, axis=0)


def supports_in_kernel_gather(n, k, c, tile_n):
    """Compile + run + numerically verify a minimal dynamic-gather kernel."""
    tn = _tile(n, tile_n)
    try:
        kp, ki = jax.random.split(jax.random.PRNGKey(42))
        p = jax.random.normal(kp, (n, c), dtype=jnp.float32).astype(jnp.bfloat16)
        idx = jax.random.randint(ki, (tn, k), 0, n, dtype=jnp.int32)
        fn = pl.pallas_call(
            _gather_probe_kernel,
            out_shape=jax.ShapeDtypeStruct((tn * k, c), jnp.bfloat16))
        got = jax.jit(fn)(p, idx)
        want = p[idx.reshape(-1)]
        return bool(jnp.all(got == want))
    except Exception:
        return False


# ----------------------------------------------------------------------------
# Parameters (deterministic synthetic init; BN -> (scale, shift), eval mode)
# ----------------------------------------------------------------------------
def _make_conv(key, cin, cout):
    return jax.random.normal(key, (cin, cout), dtype=jnp.float32) / jnp.sqrt(float(cin))


def _make_bn(key, c, eps=1e-5):
    k1, k2, k3, k4 = jax.random.split(key, 4)
    gamma = 1.0 + 0.1 * jax.random.normal(k1, (c,), dtype=jnp.float32)
    beta = 0.1 * jax.random.normal(k2, (c,), dtype=jnp.float32)
    mean = 0.1 * jax.random.normal(k3, (c,), dtype=jnp.float32)
    var = jnp.abs(jax.random.normal(k4, (c,), dtype=jnp.float32)) + 0.5
    scale = gamma / jnp.sqrt(var + eps)
    shift = beta - mean * scale
    return scale.reshape(1, c), shift.reshape(1, c)


def init_params(key, emb_dims):
    shapes = {
        'conv1': (18, 64), 'conv2': (64, 64), 'conv3': (128, 64),
        'conv4': (64, 64), 'conv5': (128, 64), 'conv6': (192, emb_dims),
        'conv7': (emb_dims + 192, 512), 'conv8': (512, 256), 'conv9': (256, 13),
    }
    params = {}
    keys = jax.random.split(key, 2 * len(shapes))
    for i, (name, (cin, cout)) in enumerate(shapes.items()):
        w = _make_conv(keys[2 * i], cin, cout)
        if name == 'conv9':                       # conv9: no BN / activation / bias
            s = jnp.ones((1, cout), jnp.float32)
            b = jnp.zeros((1, cout), jnp.float32)
        else:
            s, b = _make_bn(keys[2 * i + 1], cout)
        params[name] = (w, s, b)
    return params


def prepare_params(params, emb_dims):
    """Fold BN scale into conv weights, split weights for the conv-linearity rewrite,
    and cast matmul operands to bf16 (biases stay f32)."""
    bf = jnp.bfloat16
    prep = {}
    for first, second, name in (('conv1', 'conv2', 'edge1'),
                                ('conv3', 'conv4', 'edge2'),
                                ('conv5', None, 'edge3')):
        w1, s1, b1 = params[first]
        c = w1.shape[0] // 2
        w1f = w1 * s1                                             # fold BN scale
        wa = w1f[:c]                                              # applies to (x_j - x_i)
        wq = w1f[c:] - w1f[:c]                                    # linearity rewrite
        prep[name + '_pq'] = (wa.astype(bf), wq.astype(bf), b1)
        if second is not None:
            w2, s2, b2 = params[second]
            prep[name + '_l2'] = ((w2 * s2).astype(bf), b2)
        else:
            prep[name + '_l2'] = None

    w6, s6, b6 = params['conv6']
    prep['conv6'] = ((w6 * s6).astype(bf), b6)                    # single (192, emb)

    w7, s7, b7 = params['conv7']
    w8, s8, b8 = params['conv8']
    w9, _, _ = params['conv9']
    w7f = (w7 * s7).astype(bf)
    e = emb_dims
    prep['head'] = dict(
        w7g=w7f[:e],          # global-vector rows, folded into gbias outside the kernel
        w7x=w7f[e:],          # (192, 512) rows for the x1|x2|x3 concat
        b7=b7,
        w8=(w8 * s8).astype(bf), b8=b8, w9=w9.astype(bf))
    return prep


# ----------------------------------------------------------------------------
# Full forward pass
# ----------------------------------------------------------------------------
def dgcnn_sem_seg_forward(x_bcn, prep, k, tile_n=512, in_kernel_gather=False,
                          vmem_limit=None):
    """x_bcn: (B, 9, N) exactly like the PyTorch module.  Returns dict."""
    x = jnp.transpose(x_bcn, (0, 2, 1)).astype(jnp.float32)              # (B, N, 9)

    x1, i1 = edge_block(x, x[..., 6:], prep['edge1_pq'], prep['edge1_l2'],
                        k, tile_n, in_kernel_gather, vmem_limit)
    x2, i2 = edge_block(x1, x1, prep['edge2_pq'], prep['edge2_l2'],
                        k, tile_n, in_kernel_gather, vmem_limit)
    x3, i3 = edge_block(x2, x2, prep['edge3_pq'], prep['edge3_l2'],
                        k, tile_n, in_kernel_gather, vmem_limit)

    xcat = jnp.concatenate([x1, x2, x3], axis=-1)                        # (B, N, 192)
    g = global_feature(xcat, prep['conv6'], tile_n, vmem_limit)          # (B, 1, emb)

    hp = prep['head']
    gbias = jnp.einsum('boe,ec->boc', g.astype(jnp.bfloat16), hp['w7g'],
                       preferred_element_type=jnp.float32) + hp['b7']    # (B, 1, 512)
    pred = seg_head(xcat, gbias, hp, tile_n, vmem_limit)                 # (B, N, 13)

    return {'input_pc': x_bcn,
            'prediction': jnp.transpose(pred, (0, 2, 1)),
            '_x1': x1, '_x2': x2, '_x3': x3,
            '_idx1': i1, '_idx2': i2, '_idx3': i3}


# ----------------------------------------------------------------------------
# Plain-JAX reference (same numerics path), consumed stage-wise with shared indices
# ----------------------------------------------------------------------------
def _bmm(a, w):
    return jnp.einsum('...c,cd->...d', a.astype(jnp.bfloat16), w,
                      preferred_element_type=jnp.float32)


def ref_edge_block(x_feat, idx, pq_params, layer2):
    wa, wq, bq = pq_params
    p = _bmm(x_feat, wa).astype(jnp.bfloat16)
    q = (_bmm(x_feat, wq) + bq).astype(jnp.bfloat16)
    p_g = jax.vmap(lambda pb, ib: pb[ib])(p, idx)                        # (B, N, k, C1)
    h = _leaky(p_g.astype(jnp.float32) + q[:, :, None, :].astype(jnp.float32))
    if layer2 is not None:
        w2, b2 = layer2
        h = _leaky(jnp.einsum('bnkc,cd->bnkd', h.astype(jnp.bfloat16), w2,
                              preferred_element_type=jnp.float32) + b2)
    return jnp.max(h, axis=2).astype(jnp.bfloat16)


def ref_head(x1, x2, x3, prep):
    w6, b6 = prep['conv6']
    hp = prep['head']
    xcat = jnp.concatenate([x1, x2, x3], axis=-1)
    g = jnp.max(_leaky(_bmm(xcat, w6) + b6), axis=1, keepdims=True)      # (B, 1, emb)
    gbias = _bmm(g, hp['w7g']) + hp['b7']
    h = _leaky(_bmm(xcat, hp['w7x']) + gbias)
    h = _leaky(_bmm(h, hp['w8']) + hp['b8'])
    return jnp.transpose(_bmm(h, hp['w9']), (0, 2, 1))


# ----------------------------------------------------------------------------
if __name__ == "__main__":
    # Small, shape-consistent config: cfg.k=8, cfg.emb_dims=64, eval-mode dropout.
    B, C_IN, N = 2, 9, 64
    K_NN, EMB_DIMS = 8, 64
    TILE_N = 512                      # clamped to N inside the wrappers

    root = jax.random.PRNGKey(0)
    kx, kp = jax.random.split(root)
    x = jax.random.normal(kx, (B, C_IN, N), dtype=jnp.float32)
    params = init_params(kp, EMB_DIMS)
    prep = prepare_params(params, EMB_DIMS)

    def rel_err(a, b):
        a = jnp.asarray(a, jnp.float32)
        b = jnp.asarray(b, jnp.float32)
        return float(jnp.max(jnp.abs(a - b)) / jnp.maximum(1.0, jnp.max(jnp.abs(b))))

    def run_path(in_kernel_gather):
        fwd = jax.jit(functools.partial(dgcnn_sem_seg_forward, k=K_NN, tile_n=TILE_N,
                                        in_kernel_gather=in_kernel_gather))
        results = fwd(x, prep)
        pred = jax.block_until_ready(results['prediction'])
        assert pred.shape == (B, 13, N), pred.shape
        assert results['input_pc'].shape == (B, C_IN, N)

        # (1) stage-wise validation: the reference consumes the SAME kNN indices and the
        #     SAME upstream activations, so only Pallas-vs-XLA bf16 matmul rounding
        #     contributes to the error (no near-tie neighbour reordering).
        x_pts = jnp.transpose(x, (0, 2, 1)).astype(jnp.float32)
        x1, x2, x3 = results['_x1'], results['_x2'], results['_x3']
        i1, i2, i3 = results['_idx1'], results['_idx2'], results['_idx3']
        checks = (
            ('edge1', x1, ref_edge_block(x_pts, i1, prep['edge1_pq'], prep['edge1_l2'])),
            ('edge2', x2, ref_edge_block(x1, i2, prep['edge2_pq'], prep['edge2_l2'])),
            ('edge3', x3, ref_edge_block(x2, i3, prep['edge3_pq'], prep['edge3_l2'])),
            ('head', pred, ref_head(x1, x2, x3, prep)),
        )
        mode = 'gather' if in_kernel_gather else 'pregather'
        for name, got, want in checks:
            err = rel_err(got, want)
            assert err < 3e-2, f"{name} [{mode}] mismatch vs reference: {err}"
        return results

    use_gather = supports_in_kernel_gather(N, K_NN, 64, TILE_N)
    results = None
    if use_gather:
        try:
            results = run_path(True)
        except Exception:          # fall back to the proven XLA-gather path
            results = None
    if results is None:
        results = run_path(False)

    # (2) f32 check that the conv-linearity rewrite equals the original
    #     concat(x_j - x_i, x_i) @ W formulation (first edge conv, shared indices).
    hi = jax.lax.Precision.HIGHEST
    xt = jnp.transpose(x, (0, 2, 1)).astype(jnp.float32)                  # (B, N, 9)
    w1, s1, b1 = params['conv1']
    w1f = w1 * s1
    idx0 = knn_idx(xt[..., 6:], K_NN)
    neigh = jax.vmap(lambda pb, ib: pb[ib])(xt, idx0)                     # (B, N, k, 9)
    ctr = xt[:, :, None, :]
    edge = jnp.concatenate([neigh - ctr, jnp.broadcast_to(ctr, neigh.shape)], axis=-1)
    concat_form = jnp.einsum('bnkc,cd->bnkd', edge, w1f, precision=hi) + b1
    p0 = jnp.einsum('bnc,cd->bnd', xt, w1f[:9], precision=hi)
    q0 = jnp.einsum('bnc,cd->bnd', xt, w1f[9:] - w1f[:9], precision=hi) + b1
    pq_form = jax.vmap(lambda pb, ib: pb[ib])(p0, idx0) + q0[:, :, None, :]
    alg_err = float(jnp.max(jnp.abs(concat_form - pq_form)))
    assert alg_err < 1e-3, f"linearity rewrite mismatch: {alg_err}"

    print("KERNEL_OK")
</pallas_src>

<mosaic_0001>
module attributes {stable_mosaic.version = 11 : i64} {
  func.func @_gather_probe_kernel(%arg0: memref<64x64xbf16, #tpu.memory_space<vmem>>, %arg1: memref<64x8xi32, #tpu.memory_space<vmem>>, %arg2: memref<512x64xbf16, #tpu.memory_space<vmem>>) attributes {dimension_semantics = [], scalar_prefetch = 0 : i64, scratch_operands = 0 : i64, tpu.core_type = #tpu.core_type<tc>} {
    %c0 = arith.constant 0 : index
    %c0_0 = arith.constant 0 : index
    %0 = vector.load %arg1[%c0, %c0_0] : memref<64x8xi32, #tpu.memory_space<vmem>>, vector<64x8xi32>
    %1 = vector.shape_cast %0 : vector<64x8xi32> to vector<512x1xi32>
    %2 = vector.shape_cast %1 : vector<512x1xi32> to vector<512x1xi32>
    %3 = vector.broadcast %2 : vector<512x1xi32> to vector<512x64xi32>
    %c0_1 = arith.constant 0 : index
    %c0_2 = arith.constant 0 : index
    %4 = vector.load %arg0[%c0_1, %c0_2] : memref<64x64xbf16, #tpu.memory_space<vmem>>, vector<64x64xbf16>
    %c0_i32 = arith.constant 0 : i32
    %5 = vector.broadcast %c0_i32 : i32 to vector<512x64xi32>
    %6 = arith.cmpi slt, %3, %5 : vector<512x64xi32>
    %c64_i32 = arith.constant 64 : i32
    %7 = vector.broadcast %c64_i32 : i32 to vector<512x64xi32>
    %8 = arith.addi %3, %7 : vector<512x64xi32>
    %9 = arith.select %6, %8, %3 : vector<512x64xi1>, vector<512x64xi32>
    %10 = vector.shape_cast %9 : vector<512x64xi32> to vector<512x64x1xi32>
    %11 = vector.shape_cast %10 : vector<512x64x1xi32> to vector<512x64xi32>
    %12 = tpu.dynamic_gather %4[%11] in [0] : vector<64x64xbf16>, vector<512x64xi32> -> vector<512x64xbf16>
    %c0_3 = arith.constant 0 : index
    %c0_4 = arith.constant 0 : index
    %13 = vector.load %arg2[%c0_3, %c0_4] : memref<512x64xbf16, #tpu.memory_space<vmem>>, vector<512x64xbf16>
    tpu.vector_store %arg2[%c0_3, %c0_4], %12 {strides = array<i32>} : memref<512x64xbf16, #tpu.memory_space<vmem>>, vector<512x64xbf16>,
    return
  }
}

module attributes {stable_mosaic.version = 11 : i64} {
  func.func @_pq_kernel(%arg0: i32, %arg1: i32, %arg2: memref<1x64x9xf32, #tpu.memory_space<vmem>>, %arg3: memref<9x64xbf16, #tpu.memory_space<vmem>>, %arg4: memref<9x64xbf16, #tpu.memory_space<vmem>>, %arg5: memref<1x64xf32, #tpu.memory_space<vmem>>, %arg6: memref<1x64x64xbf16, #tpu.memory_space<vmem>>, %arg7: memref<1x64x64xbf16, #tpu.memory_space<vmem>>) attributes {dimension_semantics = [#tpu.dimension_semantics<parallel>, #tpu.dimension_semantics<parallel>], iteration_bounds = array<i64: 2, 1>, scalar_prefetch = 0 : i64, scratch_operands = 0 : i64, tpu.core_type = #tpu.core_type<tc>, window_params = [{transform_indices = @transform_0, window_bounds = array<i64: 1, 64, 9>}, {pipeline_mode = #tpu.pipeline_mode<synchronous>, transform_indices = @transform_1, window_bounds = array<i64: 9, 64>}, {pipeline_mode = #tpu.pipeline_mode<synchronous>, transform_indices = @transform_2, window_bounds = array<i64: 9, 64>}, {pipeline_mode = #tpu.pipeline_mode<synchronous>, transform_indices = @transform_3, window_bounds = array<i64: 1, 64>}, {transform_indices = @transform_4, window_bounds = array<i64: 1, 64, 64>}, {transform_indices = @transform_5, window_bounds = array<i64: 1, 64, 64>}]} {
    %c0 = arith.constant 0 : index
    %c0_0 = arith.constant 0 : index
    %c0_1 = arith.constant 0 : index
    %0 = vector.load %arg2[%c0, %c0_0, %c0_1] : memref<1x64x9xf32, #tpu.memory_space<vmem>>, vector<1x64x9xf32>
    %1 = vector.shape_cast %0 : vector<1x64x9xf32> to vector<64x9xf32>
    %2 = arith.truncf %1 : vector<64x9xf32> to vector<64x9xbf16>
    %c0_2 = arith.constant 0 : index
    %c0_3 = arith.constant 0 : index
    %3 = vector.load %arg3[%c0_2, %c0_3] : memref<9x64xbf16, #tpu.memory_space<vmem>>, vector<9x64xbf16>
    %cst = arith.constant dense<0.000000e+00> : vector<64x64xf32>
    %4 = tpu.matmul %2, %3, %cst {dimension_numbers = #tpu.dot_dimension_numbers<[1], [0], [0], [1], [0, 0, 1, 1], [], []>} : vector<64x9xbf16>, vector<9x64xbf16>, vector<64x64xf32> -> vector<64x64xf32>
    %c0_4 = arith.constant 0 : index
    %c0_5 = arith.constant 0 : index
    %5 = vector.load %arg4[%c0_4, %c0_5] : memref<9x64xbf16, #tpu.memory_space<vmem>>, vector<9x64xbf16>
    %cst_6 = arith.constant dense<0.000000e+00> : vector<64x64xf32>
    %6 = tpu.matmul %2, %5, %cst_6 {dimension_numbers = #tpu.dot_dimension_numbers<[1], [0], [0], [1], [0, 0, 1, 1], [], []>} : vector<64x9xbf16>, vector<9x64xbf16>, vector<64x64xf32> -> vector<64x64xf32>
    %c0_7 = arith.constant 0 : index
    %c0_8 = arith.constant 0 : index
    %7 = vector.load %arg5[%c0_7, %c0_8] : memref<1x64xf32, #tpu.memory_space<vmem>>, vector<1x64xf32>
    %8 = vector.broadcast %7 : vector<1x64xf32> to vector<64x64xf32>
    %9 = arith.addf %6, %8 : vector<64x64xf32>
    %10 = arith.truncf %4 : vector<64x64xf32> to vector<64x64xbf16>
    %c0_9 = arith.constant 0 : index
    %c0_10 = arith.constant 0 : index
    %c0_11 = arith.constant 0 : index
    %11 = vector.load %arg6[%c0_9, %c0_10, %c0_11] : memref<1x64x64xbf16, #tpu.memory_space<vmem>>, vector<1x64x64xbf16>
    %12 = vector.shape_cast %11 : vector<1x64x64xbf16> to vector<64x64xbf16>
    %13 = vector.shape_cast %10 : vector<64x64xbf16> to vector<1x64x64xbf16>
    tpu.vector_store %arg6[%c0_9, %c0_10, %c0_11], %13 {strides = array<i32>} : memref<1x64x64xbf16, #tpu.memory_space<vmem>>, vector<1x64x64xbf16>,
    %14 = arith.truncf %9 : vector<64x64xf32> to vector<64x64xbf16>
    %c0_12 = arith.constant 0 : index
    %c0_13 = arith.constant 0 : index
    %c0_14 = arith.constant 0 : index
    %15 = vector.load %arg7[%c0_12, %c0_13, %c0_14] : memref<1x64x64xbf16, #tpu.memory_space<vmem>>, vector<1x64x64xbf16>
    %16 = vector.shape_cast %15 : vector<1x64x64xbf16> to vector<64x64xbf16>
    %17 = vector.shape_cast %14 : vector<64x64xbf16> to vector<1x64x64xbf16>
    tpu.vector_store %arg7[%c0_12, %c0_13, %c0_14], %17 {strides = array<i32>} : memref<1x64x64xbf16, #tpu.memory_space<vmem>>, vector<1x64x64xbf16>,
    return
  }
  func.func @transform_0(%arg0: i32, %arg1: i32) -> (i32, i32, i32) {
    %c0_i32 = arith.constant 0 : i32
    %c0_i32_0 = arith.constant 0 : i32
    return %arg0, %arg1, %c0_i32 : i32, i32, i32
  }
  func.func @transform_1(%arg0: i32, %arg1: i32) -> (i32, i32) {
    %c0_i32 = arith.constant 0 : i32
    %c0_i32_0 = arith.constant 0 : i32
    %c0_i32_1 = arith.constant 0 : i32
    return %c0_i32, %c0_i32_0 : i32, i32
  }
  func.func @transform_2(%arg0: i32, %arg1: i32) -> (i32, i32) {
    %c0_i32 = arith.constant 0 : i32
    %c0_i32_0 = arith.constant 0 : i32
    %c0_i32_1 = arith.constant 0 : i32
    return %c0_i32, %c0_i32_0 : i32, i32
  }
  func.func @transform_3(%arg0: i32, %arg1: i32) -> (i32, i32) {
    %c0_i32 = arith.constant 0 : i32
    %c0_i32_0 = arith.constant 0 : i32
    %c0_i32_1 = arith.constant 0 : i32
    return %c0_i32, %c0_i32_0 : i32, i32
  }
  func.func @transform_4(%arg0: i32, %arg1: i32) -> (i32, i32, i32) {
    %c0_i32 = arith.constant 0 : i32
    %c0_i32_0 = arith.constant 0 : i32
    return %arg0, %arg1, %c0_i32 : i32, i32, i32
  }
  func.func @transform_5(%arg0: i32, %arg1: i32) -> (i32, i32, i32) {
    %c0_i32 = arith.constant 0 : i32
    %c0_i32_0 = arith.constant 0 : i32
    return %arg0, %arg1, %c0_i32 : i32, i32, i32
  }
}

module attributes {stable_mosaic.version = 11 : i64} {
  func.func @_edge2_pre_kernel(%arg0: i32, %arg1: i32, %arg2: memref<1x8x64x64xbf16, #tpu.memory_space<vmem>>, %arg3: memref<1x64x64xbf16, #tpu.memory_space<vmem>>, %arg4: memref<64x64xbf16, #tpu.memory_space<vmem>>, %arg5: memref<1x64xf32, #tpu.memory_space<vmem>>, %arg6: memref<1x64x64xbf16, #tpu.memory_space<vmem>>) attributes {dimension_semantics = [#tpu.dimension_semantics<parallel>, #tpu.dimension_semantics<parallel>], iteration_bounds = array<i64: 2, 1>, scalar_prefetch = 0 : i64, scratch_operands = 0 : i64, tpu.core_type = #tpu.core_type<tc>, window_params = [{transform_indices = @transform_0, window_bounds = array<i64: 1, 8, 64, 64>}, {transform_indices = @transform_1, window_bounds = array<i64: 1, 64, 64>}, {pipeline_mode = #tpu.pipeline_mode<synchronous>, transform_indices = @transform_2, window_bounds = array<i64: 64, 64>}, {pipeline_mode = #tpu.pipeline_mode<synchronous>, transform_indices = @transform_3, window_bounds = array<i64: 1, 64>}, {transform_indices = @transform_4, window_bounds = array<i64: 1, 64, 64>}]} {
    %c0 = arith.constant 0 : index
    %c0_0 = arith.constant 0 : index
    %c0_1 = arith.constant 0 : index
    %c0_2 = arith.constant 0 : index
    %0 = vector.load %arg2[%c0, %c0_0, %c0_1, %c0_2] : memref<1x8x64x64xbf16, #tpu.memory_space<vmem>>, vector<1x8x64x64xbf16>
    %1 = vector.shape_cast %0 : vector<1x8x64x64xbf16> to vector<8x64x64xbf16>
    %c0_3 = arith.constant 0 : index
    %c0_4 = arith.constant 0 : index
    %c0_5 = arith.constant 0 : index
    %2 = vector.load %arg3[%c0_3, %c0_4, %c0_5] : memref<1x64x64xbf16, #tpu.memory_space<vmem>>, vector<1x64x64xbf16>
    %3 = vector.shape_cast %2 : vector<1x64x64xbf16> to vector<64x64xbf16>
    %4 = vector.shape_cast %3 : vector<64x64xbf16> to vector<1x64x64xbf16>
    %5 = vector.broadcast %4 : vector<1x64x64xbf16> to vector<8x64x64xbf16>
    %6 = arith.addf %1, %5 : vector<8x64x64xbf16>
    %cst = arith.constant 0.000000e+00 : bf16
    %7 = vector.broadcast %cst : bf16 to vector<8x64x64xbf16>
    %8 = arith.cmpf oge, %6, %7 : vector<8x64x64xbf16>
    %cst_6 = arith.constant 2.001950e-01 : bf16
    %9 = vector.broadcast %cst_6 : bf16 to vector<8x64x64xbf16>
    %10 = arith.mulf %9, %6 : vector<8x64x64xbf16>
    %11 = arith.select %8, %6, %10 : vector<8x64x64xi1>, vector<8x64x64xbf16>
    %12 = vector.shape_cast %11 : vector<8x64x64xbf16> to vector<512x64xbf16>
    %c0_7 = arith.constant 0 : index
    %c0_8 = arith.constant 0 : index
    %13 = vector.load %arg4[%c0_7, %c0_8] : memref<64x64xbf16, #tpu.memory_space<vmem>>, vector<64x64xbf16>
    %cst_9 = arith.constant dense<0.000000e+00> : vector<512x64xf32>
    %14 = tpu.matmul %12, %13, %cst_9 {dimension_numbers = #tpu.dot_dimension_numbers<[1], [0], [0], [1], [0, 0, 1, 1], [], []>} : vector<512x64xbf16>, vector<64x64xbf16>, vector<512x64xf32> -> vector<512x64xf32>
    %c0_10 = arith.constant 0 : index
    %c0_11 = arith.constant 0 : index
    %15 = vector.load %arg5[%c0_10, %c0_11] : memref<1x64xf32, #tpu.memory_space<vmem>>, vector<1x64xf32>
    %16 = vector.broadcast %15 : vector<1x64xf32> to vector<512x64xf32>
    %17 = arith.addf %14, %16 : vector<512x64xf32>
    %cst_12 = arith.constant 0.000000e+00 : f32
    %18 = vector.broadcast %cst_12 : f32 to vector<512x64xf32>
    %19 = arith.cmpf oge, %17, %18 : vector<512x64xf32>
    %cst_13 = arith.constant 2.000000e-01 : f32
    %20 = vector.broadcast %cst_13 : f32 to vector<512x64xf32>
    %21 = arith.mulf %20, %17 : vector<512x64xf32>
    %22 = arith.select %19, %17, %21 : vector<512x64xi1>, vector<512x64xf32>
    %23 = arith.truncf %22 : vector<512x64xf32> to vector<512x64xbf16>
    %24 = vector.shape_cast %23 : vector<512x64xbf16> to vector<8x64x64xbf16>
    %cst_14 = arith.constant dense<0xFF80> : vector<64x64xbf16>
    %25 = vector.multi_reduction <maximumf>, %24, %cst_14 [0] : vector<8x64x64xbf16> to vector<64x64xbf16>
    %c0_15 = arith.constant 0 : index
    %c0_16 = arith.constant 0 : index
    %c0_17 = arith.constant 0 : index
    %26 = vector.load %arg6[%c0_15, %c0_16, %c0_17] : memref<1x64x64xbf16, #tpu.memory_space<vmem>>, vector<1x64x64xbf16>
    %27 = vector.shape_cast %26 : vector<1x64x64xbf16> to vector<64x64xbf16>
    %28 = vector.shape_cast %25 : vector<64x64xbf16> to vector<1x64x64xbf16>
    tpu.vector_store %arg6[%c0_15, %c0_16, %c0_17], %28 {strides = array<i32>} : memref<1x64x64xbf16, #tpu.memory_space<vmem>>, vector<1x64x64xbf16>,
    return
  }
  func.func @transform_0(%arg0: i32, %arg1: i32) -> (i32, i32, i32, i32) {
    %c0_i32 = arith.constant 0 : i32
    %c0_i32_0 = arith.constant 0 : i32
    %c0_i32_1 = arith.constant 0 : i32
    return %arg0, %c0_i32, %arg1, %c0_i32_0 : i32, i32, i32, i32
  }
  func.func @transform_1(%arg0: i32, %arg1: i32) -> (i32, i32, i32) {
    %c0_i32 = arith.constant 0 : i32
    %c0_i32_0 = arith.constant 0 : i32
    return %arg0, %arg1, %c0_i32 : i32, i32, i32
  }
  func.func @transform_2(%arg0: i32, %arg1: i32) -> (i32, i32) {
    %c0_i32 = arith.constant 0 : i32
    %c0_i32_0 = arith.constant 0 : i32
    %c0_i32_1 = arith.constant 0 : i32
    return %c0_i32, %c0_i32_0 : i32, i32
  }
  func.func @transform_3(%arg0: i32, %arg1: i32) -> (i32, i32) {
    %c0_i32 = arith.constant 0 : i32
    %c0_i32_0 = arith.constant 0 : i32
    %c0_i32_1 = arith.constant 0 : i32
    return %c0_i32, %c0_i32_0 : i32, i32
  }
  func.func @transform_4(%arg0: i32, %arg1: i32) -> (i32, i32, i32) {
    %c0_i32 = arith.constant 0 : i32
    %c0_i32_0 = arith.constant 0 : i32
    return %arg0, %arg1, %c0_i32 : i32, i32, i32
  }
}

module attributes {stable_mosaic.version = 11 : i64} {
  func.func @_pq_kernel(%arg0: i32, %arg1: i32, %arg2: memref<1x64x64xbf16, #tpu.memory_space<vmem>>, %arg3: memref<64x64xbf16, #tpu.memory_space<vmem>>, %arg4: memref<64x64xbf16, #tpu.memory_space<vmem>>, %arg5: memref<1x64xf32, #tpu.memory_space<vmem>>, %arg6: memref<1x64x64xbf16, #tpu.memory_space<vmem>>, %arg7: memref<1x64x64xbf16, #tpu.memory_space<vmem>>) attributes {dimension_semantics = [#tpu.dimension_semantics<parallel>, #tpu.dimension_semantics<parallel>], iteration_bounds = array<i64: 2, 1>, scalar_prefetch = 0 : i64, scratch_operands = 0 : i64, tpu.core_type = #tpu.core_type<tc>, window_params = [{transform_indices = @transform_0, window_bounds = array<i64: 1, 64, 64>}, {pipeline_mode = #tpu.pipeline_mode<synchronous>, transform_indices = @transform_1, window_bounds = array<i64: 64, 64>}, {pipeline_mode = #tpu.pipeline_mode<synchronous>, transform_indices = @transform_2, window_bounds = array<i64: 64, 64>}, {pipeline_mode = #tpu.pipeline_mode<synchronous>, transform_indices = @transform_3, window_bounds = array<i64: 1, 64>}, {transform_indices = @transform_4, window_bounds = array<i64: 1, 64, 64>}, {transform_indices = @transform_5, window_bounds = array<i64: 1, 64, 64>}]} {
    %c0 = arith.constant 0 : index
    %c0_0 = arith.constant 0 : index
    %c0_1 = arith.constant 0 : index
    %0 = vector.load %arg2[%c0, %c0_0, %c0_1] : memref<1x64x64xbf16, #tpu.memory_space<vmem>>, vector<1x64x64xbf16>
    %1 = vector.shape_cast %0 : vector<1x64x64xbf16> to vector<64x64xbf16>
    %c0_2 = arith.constant 0 : index
    %c0_3 = arith.constant 0 : index
    %2 = vector.load %arg3[%c0_2, %c0_3] : memref<64x64xbf16, #tpu.memory_space<vmem>>, vector<64x64xbf16>
    %cst = arith.constant dense<0.000000e+00> : vector<64x64xf32>
    %3 = tpu.matmul %1, %2, %cst {dimension_numbers = #tpu.dot_dimension_numbers<[1], [0], [0], [1], [0, 0, 1, 1], [], []>} : vector<64x64xbf16>, vector<64x64xbf16>, vector<64x64xf32> -> vector<64x64xf32>
    %c0_4 = arith.constant 0 : index
    %c0_5 = arith.constant 0 : index
    %4 = vector.load %arg4[%c0_4, %c0_5] : memref<64x64xbf16, #tpu.memory_space<vmem>>, vector<64x64xbf16>
    %cst_6 = arith.constant dense<0.000000e+00> : vector<64x64xf32>
    %5 = tpu.matmul %1, %4, %cst_6 {dimension_numbers = #tpu.dot_dimension_numbers<[1], [0], [0], [1], [0, 0, 1, 1], [], []>} : vector<64x64xbf16>, vector<64x64xbf16>, vector<64x64xf32> -> vector<64x64xf32>
    %c0_7 = arith.constant 0 : index
    %c0_8 = arith.constant 0 : index
    %6 = vector.load %arg5[%c0_7, %c0_8] : memref<1x64xf32, #tpu.memory_space<vmem>>, vector<1x64xf32>
    %7 = vector.broadcast %6 : vector<1x64xf32> to vector<64x64xf32>
    %8 = arith.addf %5, %7 : vector<64x64xf32>
    %9 = arith.truncf %3 : vector<64x64xf32> to vector<64x64xbf16>
    %c0_9 = arith.constant 0 : index
    %c0_10 = arith.constant 0 : index
    %c0_11 = arith.constant 0 : index
    %10 = vector.load %arg6[%c0_9, %c0_10, %c0_11] : memref<1x64x64xbf16, #tpu.memory_space<vmem>>, vector<1x64x64xbf16>
    %11 = vector.shape_cast %10 : vector<1x64x64xbf16> to vector<64x64xbf16>
    %12 = vector.shape_cast %9 : vector<64x64xbf16> to vector<1x64x64xbf16>
    tpu.vector_store %arg6[%c0_9, %c0_10, %c0_11], %12 {strides = array<i32>} : memref<1x64x64xbf16, #tpu.memory_space<vmem>>, vector<1x64x64xbf16>,
    %13 = arith.truncf %8 : vector<64x64xf32> to vector<64x64xbf16>
    %c0_12 = arith.constant 0 : index
    %c0_13 = arith.constant 0 : index
    %c0_14 = arith.constant 0 : index
    %14 = vector.load %arg7[%c0_12, %c0_13, %c0_14] : memref<1x64x64xbf16, #tpu.memory_space<vmem>>, vector<1x64x64xbf16>
    %15 = vector.shape_cast %14 : vector<1x64x64xbf16> to vector<64x64xbf16>
    %16 = vector.shape_cast %13 : vector<64x64xbf16> to vector<1x64x64xbf16>
    tpu.vector_store %arg7[%c0_12, %c0_13, %c0_14], %16 {strides = array<i32>} : memref<1x64x64xbf16, #tpu.memory_space<vmem>>, vector<1x64x64xbf16>,
    return
  }
  func.func @transform_0(%arg0: i32, %arg1: i32) -> (i32, i32, i32) {
    %c0_i32 = arith.constant 0 : i32
    %c0_i32_0 = arith.constant 0 : i32
    return %arg0, %arg1, %c0_i32 : i32, i32, i32
  }
  func.func @transform_1(%arg0: i32, %arg1: i32) -> (i32, i32) {
    %c0_i32 = arith.constant 0 : i32
    %c0_i32_0 = arith.constant 0 : i32
    %c0_i32_1 = arith.constant 0 : i32
    return %c0_i32, %c0_i32_0 : i32, i32
  }
  func.func @transform_2(%arg0: i32, %arg1: i32) -> (i32, i32) {
    %c0_i32 = arith.constant 0 : i32
    %c0_i32_0 = arith.constant 0 : i32
    %c0_i32_1 = arith.constant 0 : i32
    return %c0_i32, %c0_i32_0 : i32, i32
  }
  func.func @transform_3(%arg0: i32, %arg1: i32) -> (i32, i32) {
    %c0_i32 = arith.constant 0 : i32
    %c0_i32_0 = arith.constant 0 : i32
    %c0_i32_1 = arith.constant 0 : i32
    return %c0_i32, %c0_i32_0 : i32, i32
  }
  func.func @transform_4(%arg0: i32, %arg1: i32) -> (i32, i32, i32) {
    %c0_i32 = arith.constant 0 : i32
    %c0_i32_0 = arith.constant 0 : i32
    return %arg0, %arg1, %c0_i32 : i32, i32, i32
  }
  func.func @transform_5(%arg0: i32, %arg1: i32) -> (i32, i32, i32) {
    %c0_i32 = arith.constant 0 : i32
    %c0_i32_0 = arith.constant 0 : i32
    return %arg0, %arg1, %c0_i32 : i32, i32, i32
  }
}

module attributes {stable_mosaic.version = 11 : i64} {
  func.func @_edge1_pre_kernel(%arg0: i32, %arg1: i32, %arg2: memref<1x8x64x64xbf16, #tpu.memory_space<vmem>>, %arg3: memref<1x64x64xbf16, #tpu.memory_space<vmem>>, %arg4: memref<1x64x64xbf16, #tpu.memory_space<vmem>>) attributes {dimension_semantics = [#tpu.dimension_semantics<parallel>, #tpu.dimension_semantics<parallel>], iteration_bounds = array<i64: 2, 1>, scalar_prefetch = 0 : i64, scratch_operands = 0 : i64, tpu.core_type = #tpu.core_type<tc>, window_params = [{transform_indices = @transform_0, window_bounds = array<i64: 1, 8, 64, 64>}, {transform_indices = @transform_1, window_bounds = array<i64: 1, 64, 64>}, {transform_indices = @transform_2, window_bounds = array<i64: 1, 64, 64>}]} {
    %c0 = arith.constant 0 : index
    %c0_0 = arith.constant 0 : index
    %c0_1 = arith.constant 0 : index
    %c0_2 = arith.constant 0 : index
    %0 = vector.load %arg2[%c0, %c0_0, %c0_1, %c0_2] : memref<1x8x64x64xbf16, #tpu.memory_space<vmem>>, vector<1x8x64x64xbf16>
    %1 = vector.shape_cast %0 : vector<1x8x64x64xbf16> to vector<8x64x64xbf16>
    %c0_3 = arith.constant 0 : index
    %c0_4 = arith.constant 0 : index
    %c0_5 = arith.constant 0 : index
    %2 = vector.load %arg3[%c0_3, %c0_4, %c0_5] : memref<1x64x64xbf16, #tpu.memory_space<vmem>>, vector<1x64x64xbf16>
    %3 = vector.shape_cast %2 : vector<1x64x64xbf16> to vector<64x64xbf16>
    %4 = vector.shape_cast %3 : vector<64x64xbf16> to vector<1x64x64xbf16>
    %5 = vector.broadcast %4 : vector<1x64x64xbf16> to vector<8x64x64xbf16>
    %6 = arith.addf %1, %5 : vector<8x64x64xbf16>
    %cst = arith.constant 0.000000e+00 : bf16
    %7 = vector.broadcast %cst : bf16 to vector<8x64x64xbf16>
    %8 = arith.cmpf oge, %6, %7 : vector<8x64x64xbf16>
    %cst_6 = arith.constant 2.001950e-01 : bf16
    %9 = vector.broadcast %cst_6 : bf16 to vector<8x64x64xbf16>
    %10 = arith.mulf %9, %6 : vector<8x64x64xbf16>
    %11 = arith.select %8, %6, %10 : vector<8x64x64xi1>, vector<8x64x64xbf16>
    %cst_7 = arith.constant dense<0xFF80> : vector<64x64xbf16>
    %12 = vector.multi_reduction <maximumf>, %11, %cst_7 [0] : vector<8x64x64xbf16> to vector<64x64xbf16>
    %c0_8 = arith.constant 0 : index
    %c0_9 = arith.constant 0 : index
    %c0_10 = arith.constant 0 : index
    %13 = vector.load %arg4[%c0_8, %c0_9, %c0_10] : memref<1x64x64xbf16, #tpu.memory_space<vmem>>, vector<1x64x64xbf16>
    %14 = vector.shape_cast %13 : vector<1x64x64xbf16> to vector<64x64xbf16>
    %15 = vector.shape_cast %12 : vector<64x64xbf16> to vector<1x64x64xbf16>
    tpu.vector_store %arg4[%c0_8, %c0_9, %c0_10], %15 {strides = array<i32>} : memref<1x64x64xbf16, #tpu.memory_space<vmem>>, vector<1x64x64xbf16>,
    return
  }
  func.func @transform_0(%arg0: i32, %arg1: i32) -> (i32, i32, i32, i32) {
    %c0_i32 = arith.constant 0 : i32
    %c0_i32_0 = arith.constant 0 : i32
    %c0_i32_1 = arith.constant 0 : i32
    return %arg0, %c0_i32, %arg1, %c0_i32_0 : i32, i32, i32, i32
  }
  func.func @transform_1(%arg0: i32, %arg1: i32) -> (i32, i32, i32) {
    %c0_i32 = arith.constant 0 : i32
    %c0_i32_0 = arith.constant 0 : i32
    return %arg0, %arg1, %c0_i32 : i32, i32, i32
  }
  func.func @transform_2(%arg0: i32, %arg1: i32) -> (i32, i32, i32) {
    %c0_i32 = arith.constant 0 : i32
    %c0_i32_0 = arith.constant 0 : i32
    return %arg0, %arg1, %c0_i32 : i32, i32, i32
  }
}

module attributes {stable_mosaic.version = 11 : i64} {
  func.func @_global_feat_kernel(%arg0: i32, %arg1: i32, %arg2: memref<1x64x192xbf16, #tpu.memory_space<vmem>>, %arg3: memref<192x64xbf16, #tpu.memory_space<vmem>>, %arg4: memref<1x64xf32, #tpu.memory_space<vmem>>, %arg5: memref<1x1x64xf32, #tpu.memory_space<vmem>>) attributes {dimension_semantics = [#tpu.dimension_semantics<parallel>, #tpu.dimension_semantics<arbitrary>], iteration_bounds = array<i64: 2, 1>, scalar_prefetch = 0 : i64, scratch_operands = 0 : i64, tpu.core_type = #tpu.core_type<tc>, window_params = [{transform_indices = @transform_0, window_bounds = array<i64: 1, 64, 192>}, {pipeline_mode = #tpu.pipeline_mode<synchronous>, transform_indices = @transform_1, window_bounds = array<i64: 192, 64>}, {pipeline_mode = #tpu.pipeline_mode<synchronous>, transform_indices = @transform_2, window_bounds = array<i64: 1, 64>}, {transform_indices = @transform_3, window_bounds = array<i64: 1, 1, 64>}]} {
    %c0 = arith.constant 0 : index
    %c0_0 = arith.constant 0 : index
    %c0_1 = arith.constant 0 : index
    %0 = vector.load %arg2[%c0, %c0_0, %c0_1] : memref<1x64x192xbf16, #tpu.memory_space<vmem>>, vector<1x64x192xbf16>
    %1 = vector.shape_cast %0 : vector<1x64x192xbf16> to vector<64x192xbf16>
    %c0_2 = arith.constant 0 : index
    %c0_3 = arith.constant 0 : index
    %2 = vector.load %arg3[%c0_2, %c0_3] : memref<192x64xbf16, #tpu.memory_space<vmem>>, vector<192x64xbf16>
    %cst = arith.constant dense<0.000000e+00> : vector<64x64xf32>
    %3 = tpu.matmul %1, %2, %cst {dimension_numbers = #tpu.dot_dimension_numbers<[1], [0], [0], [1], [0, 0, 1, 1], [], []>} : vector<64x192xbf16>, vector<192x64xbf16>, vector<64x64xf32> -> vector<64x64xf32>
    %c0_4 = arith.constant 0 : index
    %c0_5 = arith.constant 0 : index
    %4 = vector.load %arg4[%c0_4, %c0_5] : memref<1x64xf32, #tpu.memory_space<vmem>>, vector<1x64xf32>
    %5 = vector.broadcast %4 : vector<1x64xf32> to vector<64x64xf32>
    %6 = arith.addf %3, %5 : vector<64x64xf32>
    %cst_6 = arith.constant 0.000000e+00 : f32
    %7 = vector.broadcast %cst_6 : f32 to vector<64x64xf32>
    %8 = arith.cmpf oge, %6, %7 : vector<64x64xf32>
    %cst_7 = arith.constant 2.000000e-01 : f32
    %9 = vector.broadcast %cst_7 : f32 to vector<64x64xf32>
    %10 = arith.mulf %9, %6 : vector<64x64xf32>
    %11 = arith.select %8, %6, %10 : vector<64x64xi1>, vector<64x64xf32>
    %cst_8 = arith.constant dense<0xFF800000> : vector<64xf32>
    %12 = vector.multi_reduction <maximumf>, %11, %cst_8 [0] : vector<64x64xf32> to vector<64xf32>
    %13 = vector.shape_cast %12 : vector<64xf32> to vector<1x64xf32>
    %c0_i32 = arith.constant 0 : i32
    %14 = arith.cmpi eq, %arg1, %c0_i32 : i32
    %15 = arith.extui %14 : i1 to i32
    %c0_i32_9 = arith.constant 0 : i32
    %16 = arith.cmpi ne, %15, %c0_i32_9 : i32
    scf.if %16 {
      %c0_12 = arith.constant 0 : index
      %c0_13 = arith.constant 0 : index
      %c0_14 = arith.constant 0 : index
      %20 = vector.load %arg5[%c0_12, %c0_13, %c0_14] : memref<1x1x64xf32, #tpu.memory_space<vmem>>, vector<1x1x64xf32>
      %21 = vector.shape_cast %20 : vector<1x1x64xf32> to vector<1x64xf32>
      %22 = vector.shape_cast %13 : vector<1x64xf32> to vector<1x1x64xf32>
      tpu.vector_store %arg5[%c0_12, %c0_13, %c0_14], %22 {strides = array<i32>} : memref<1x1x64xf32, #tpu.memory_space<vmem>>, vector<1x1x64xf32>,
    } else {
    }
    %c0_i32_10 = arith.constant 0 : i32
    %17 = arith.cmpi sgt, %arg1, %c0_i32_10 : i32
    %18 = arith.extui %17 : i1 to i32
    %c0_i32_11 = arith.constant 0 : i32
    %19 = arith.cmpi ne, %18, %c0_i32_11 : i32
    scf.if %19 {
      %c0_12 = arith.constant 0 : index
      %c0_13 = arith.constant 0 : index
      %c0_14 = arith.constant 0 : index
      %20 = vector.load %arg5[%c0_12, %c0_13, %c0_14] : memref<1x1x64xf32, #tpu.memory_space<vmem>>, vector<1x1x64xf32>
      %21 = vector.shape_cast %20 : vector<1x1x64xf32> to vector<1x64xf32>
      %22 = arith.maximumf %21, %13 : vector<1x64xf32>
      %c0_15 = arith.constant 0 : index
      %c0_16 = arith.constant 0 : index
      %c0_17 = arith.constant 0 : index
      %23 = vector.load %arg5[%c0_15, %c0_16, %c0_17] : memref<1x1x64xf32, #tpu.memory_space<vmem>>, vector<1x1x64xf32>
      %24 = vector.shape_cast %23 : vector<1x1x64xf32> to vector<1x64xf32>
      %25 = vector.shape_cast %22 : vector<1x64xf32> to vector<1x1x64xf32>
      tpu.vector_store %arg5[%c0_15, %c0_16, %c0_17], %25 {strides = array<i32>} : memref<1x1x64xf32, #tpu.memory_space<vmem>>, vector<1x1x64xf32>,
    } else {
    }
    return
  }
  func.func @transform_0(%arg0: i32, %arg1: i32) -> (i32, i32, i32) {
    %c0_i32 = arith.constant 0 : i32
    %c0_i32_0 = arith.constant 0 : i32
    return %arg0, %arg1, %c0_i32 : i32, i32, i32
  }
  func.func @transform_1(%arg0: i32, %arg1: i32) -> (i32, i32) {
    %c0_i32 = arith.constant 0 : i32
    %c0_i32_0 = arith.constant 0 : i32
    %c0_i32_1 = arith.constant 0 : i32
    return %c0_i32, %c0_i32_0 : i32, i32
  }
  func.func @transform_2(%arg0: i32, %arg1: i32) -> (i32, i32) {
    %c0_i32 = arith.constant 0 : i32
    %c0_i32_0 = arith.constant 0 : i32
    %c0_i32_1 = arith.constant 0 : i32
    return %c0_i32, %c0_i32_0 : i32, i32
  }
  func.func @transform_3(%arg0: i32, %arg1: i32) -> (i32, i32, i32) {
    %c0_i32 = arith.constant 0 : i32
    %c0_i32_0 = arith.constant 0 : i32
    %c0_i32_1 = arith.constant 0 : i32
    return %arg0, %c0_i32, %c0_i32_0 : i32, i32, i32
  }
}

module attributes {stable_mosaic.version = 11 : i64} {
  func.func @_head_kernel(%arg0: i32, %arg1: i32, %arg2: memref<1x64x192xbf16, #tpu.memory_space<vmem>>, %arg3: memref<1x1x512xf32, #tpu.memory_space<vmem>>, %arg4: memref<192x512xbf16, #tpu.memory_space<vmem>>, %arg5: memref<512x256xbf16, #tpu.memory_space<vmem>>, %arg6: memref<1x256xf32, #tpu.memory_space<vmem>>, %arg7: memref<256x13xbf16, #tpu.memory_space<vmem>>, %arg8: memref<1x64x13xf32, #tpu.memory_space<vmem>>) attributes {dimension_semantics = [#tpu.dimension_semantics<parallel>, #tpu.dimension_semantics<parallel>], iteration_bounds = array<i64: 2, 1>, scalar_prefetch = 0 : i64, scratch_operands = 0 : i64, tpu.core_type = #tpu.core_type<tc>, window_params = [{transform_indices = @transform_0, window_bounds = array<i64: 1, 64, 192>}, {transform_indices = @transform_1, window_bounds = array<i64: 1, 1, 512>}, {pipeline_mode = #tpu.pipeline_mode<synchronous>, transform_indices = @transform_2, window_bounds = array<i64: 192, 512>}, {pipeline_mode = #tpu.pipeline_mode<synchronous>, transform_indices = @transform_3, window_bounds = array<i64: 512, 256>}, {pipeline_mode = #tpu.pipeline_mode<synchronous>, transform_indices = @transform_4, window_bounds = array<i64: 1, 256>}, {pipeline_mode = #tpu.pipeline_mode<synchronous>, transform_indices = @transform_5, window_bounds = array<i64: 256, 13>}, {transform_indices = @transform_6, window_bounds = array<i64: 1, 64, 13>}]} {
    %c0 = arith.constant 0 : index
    %c0_0 = arith.constant 0 : index
    %c0_1 = arith.constant 0 : index
    %0 = vector.load %arg2[%c0, %c0_0, %c0_1] : memref<1x64x192xbf16, #tpu.memory_space<vmem>>, vector<1x64x192xbf16>
    %1 = vector.shape_cast %0 : vector<1x64x192xbf16> to vector<64x192xbf16>
    %c0_2 = arith.constant 0 : index
    %c0_3 = arith.constant 0 : index
    %2 = vector.load %arg4[%c0_2, %c0_3] : memref<192x512xbf16, #tpu.memory_space<vmem>>, vector<192x512xbf16>
    %cst = arith.constant dense<0.000000e+00> : vector<64x512xf32>
    %3 = tpu.matmul %1, %2, %cst {dimension_numbers = #tpu.dot_dimension_numbers<[1], [0], [0], [1], [0, 0, 1, 1], [], []>} : vector<64x192xbf16>, vector<192x512xbf16>, vector<64x512xf32> -> vector<64x512xf32>
    %c0_4 = arith.constant 0 : index
    %c0_5 = arith.constant 0 : index
    %c0_6 = arith.constant 0 : index
    %4 = vector.load %arg3[%c0_4, %c0_5, %c0_6] : memref<1x1x512xf32, #tpu.memory_space<vmem>>, vector<1x1x512xf32>
    %5 = vector.shape_cast %4 : vector<1x1x512xf32> to vector<1x512xf32>
    %6 = vector.broadcast %5 : vector<1x512xf32> to vector<64x512xf32>
    %7 = arith.addf %3, %6 : vector<64x512xf32>
    %cst_7 = arith.constant 0.000000e+00 : f32
    %8 = vector.broadcast %cst_7 : f32 to vector<64x512xf32>
    %9 = arith.cmpf oge, %7, %8 : vector<64x512xf32>
    %cst_8 = arith.constant 2.000000e-01 : f32
    %10 = vector.broadcast %cst_8 : f32 to vector<64x512xf32>
    %11 = arith.mulf %10, %7 : vector<64x512xf32>
    %12 = arith.select %9, %7, %11 : vector<64x512xi1>, vector<64x512xf32>
    %13 = arith.truncf %12 : vector<64x512xf32> to vector<64x512xbf16>
    %c0_9 = arith.constant 0 : index
    %c0_10 = arith.constant 0 : index
    %14 = vector.load %arg5[%c0_9, %c0_10] : memref<512x256xbf16, #tpu.memory_space<vmem>>, vector<512x256xbf16>
    %cst_11 = arith.constant dense<0.000000e+00> : vector<64x256xf32>
    %15 = tpu.matmul %13, %14, %cst_11 {dimension_numbers = #tpu.dot_dimension_numbers<[1], [0], [0], [1], [0, 0, 1, 1], [], []>} : vector<64x512xbf16>, vector<512x256xbf16>, vector<64x256xf32> -> vector<64x256xf32>
    %c0_12 = arith.constant 0 : index
    %c0_13 = arith.constant 0 : index
    %16 = vector.load %arg6[%c0_12, %c0_13] : memref<1x256xf32, #tpu.memory_space<vmem>>, vector<1x256xf32>
    %17 = vector.broadcast %16 : vector<1x256xf32> to vector<64x256xf32>
    %18 = arith.addf %15, %17 : vector<64x256xf32>
    %cst_14 = arith.constant 0.000000e+00 : f32
    %19 = vector.broadcast %cst_14 : f32 to vector<64x256xf32>
    %20 = arith.cmpf oge, %18, %19 : vector<64x256xf32>
    %cst_15 = arith.constant 2.000000e-01 : f32
    %21 = vector.broadcast %cst_15 : f32 to vector<64x256xf32>
    %22 = arith.mulf %21, %18 : vector<64x256xf32>
    %23 = arith.select %20, %18, %22 : vector<64x256xi1>, vector<64x256xf32>
    %24 = arith.truncf %23 : vector<64x256xf32> to vector<64x256xbf16>
    %c0_16 = arith.constant 0 : index
    %c0_17 = arith.constant 0 : index
    %25 = vector.load %arg7[%c0_16, %c0_17] : memref<256x13xbf16, #tpu.memory_space<vmem>>, vector<256x13xbf16>
    %cst_18 = arith.constant dense<0.000000e+00> : vector<64x13xf32>
    %26 = tpu.matmul %24, %25, %cst_18 {dimension_numbers = #tpu.dot_dimension_numbers<[1], [0], [0], [1], [0, 0, 1, 1], [], []>} : vector<64x256xbf16>, vector<256x13xbf16>, vector<64x13xf32> -> vector<64x13xf32>
    %c0_19 = arith.constant 0 : index
    %c0_20 = arith.constant 0 : index
    %c0_21 = arith.constant 0 : index
    %27 = vector.load %arg8[%c0_19, %c0_20, %c0_21] : memref<1x64x13xf32, #tpu.memory_space<vmem>>, vector<1x64x13xf32>
    %28 = vector.shape_cast %27 : vector<1x64x13xf32> to vector<64x13xf32>
    %29 = vector.shape_cast %26 : vector<64x13xf32> to vector<1x64x13xf32>
    tpu.vector_store %arg8[%c0_19, %c0_20, %c0_21], %29 {strides = array<i32>} : memref<1x64x13xf32, #tpu.memory_space<vmem>>, vector<1x64x13xf32>,
    return
  }
  func.func @transform_0(%arg0: i32, %arg1: i32) -> (i32, i32, i32) {
    %c0_i32 = arith.constant 0 : i32
    %c0_i32_0 = arith.constant 0 : i32
    return %arg0, %arg1, %c0_i32 : i32, i32, i32
  }
  func.func @transform_1(%arg0: i32, %arg1: i32) -> (i32, i32, i32) {
    %c0_i32 = arith.constant 0 : i32
    %c0_i32_0 = arith.constant 0 : i32
    %c0_i32_1 = arith.constant 0 : i32
    return %arg0, %c0_i32, %c0_i32_0 : i32, i32, i32
  }
  func.func @transform_2(%arg0: i32, %arg1: i32) -> (i32, i32) {
    %c0_i32 = arith.constant 0 : i32
    %c0_i32_0 = arith.constant 0 : i32
    %c0_i32_1 = arith.constant 0 : i32
    return %c0_i32, %c0_i32_0 : i32, i32
  }
  func.func @transform_3(%arg0: i32, %arg1: i32) -> (i32, i32) {
    %c0_i32 = arith.constant 0 : i32
    %c0_i32_0 = arith.constant 0 : i32
    %c0_i32_1 = arith.constant 0 : i32
    return %c0_i32, %c0_i32_0 : i32, i32
  }
  func.func @transform_4(%arg0: i32, %arg1: i32) -> (i32, i32) {
    %c0_i32 = arith.constant 0 : i32
    %c0_i32_0 = arith.constant 0 : i32
    %c0_i32_1 = arith.constant 0 : i32
    return %c0_i32, %c0_i32_0 : i32, i32
  }
  func.func @transform_5(%arg0: i32, %arg1: i32) -> (i32, i32) {
    %c0_i32 = arith.constant 0 : i32
    %c0_i32_0 = arith.constant 0 : i32
    %c0_i32_1 = arith.constant 0 : i32
    return %c0_i32, %c0_i32_0 : i32, i32
  }
  func.func @transform_6(%arg0: i32, %arg1: i32) -> (i32, i32, i32) {
    %c0_i32 = arith.constant 0 : i32
    %c0_i32_0 = arith.constant 0 : i32
    return %arg0, %arg1, %c0_i32 : i32, i32, i32
  }
}

</mosaic_0001>

<llo_original>
// kernel: dgcnn_sem_seg_forward.8
$region0: #{dgcnn_sem_seg_forward.8}
  #allocation0 [shape = 'u32[]', space=smem, size = 0x4, offset = 0x4, fixed_abs, tag = 'smem constant byte address 0x4 - core index']
  #allocation1 [shape = 'u32[144,128]{1,0:T(1,128)}', space=vmem, size = 0x12000, scoped, tag = 'internal scratch']
  %s0 = inlined_call_operand.vmem [shape: f32[2,64,9], index: 0, kind: input, shape index: {}]
  %s1 = inlined_call_operand.vmem [shape: bf16[9,64], index: 1, kind: input, shape index: {}]
  %s2 = inlined_call_operand.vmem [shape: bf16[9,64], index: 2, kind: input, shape index: {}]
  %s3 = inlined_call_operand.vmem [shape: f32[1,64], index: 3, kind: input, shape index: {}]
  %s4 = inlined_call_operand.vmem [shape: bf16[2,64,64], index: 4, kind: output, shape index: {0}]
  %s5 = inlined_call_operand.vmem [shape: bf16[2,64,64], index: 5, kind: output, shape index: {1}]
  %6 = xla_tuple %s4, %s5
  %s7 = sld [smem:[#allocation0]]
  $region57: #{dgcnn_sem_seg_forward.8} parent=0
    _
  %s9 = ssub.s32 1, %s7
  %s10 = scalar_select 0, %s9, %s7
  loop: start=0, step=1, limit=4
  $region2: #{dgcnn_sem_seg_forward.8} parent=0 // loop_pre_header
    _
  $region3: #{dgcnn_sem_seg_forward.8} parent=0 // loop_header
    %s12 = sphi 0, %s16
    %p13 = scmp.ge.s32.totalorder %s12, 4
    %s19 = sphi 0, %s31
    %s20 = sphi 0, %s27
    %s21 = sphi 0, %s19
    %s22 = sphi 0, %s20
    %s23 = sphi 0, %s21
    %s24 = sphi 0, %s22
    %s36 = sphi 0, %s38
    %s39 = sphi 0, %s36
    %s40 = sphi 0, %s39
    %s56 = sphi 0, %s40
    %s60 = sphi 0, %s60
    %s62 = sphi 0, %s60
    %s63 = sphi 0, %s62
    %s77 = sphi 0, %s63
    %s81 = sphi 0, %s81
    %s83 = sphi 0, %s81
    %s84 = sphi 0, %s83
    %s98 = sphi 0, %s84
    %s102 = sphi 0, %s102
    %s104 = sphi 0, %s102
    %s105 = sphi 0, %s104
    %s119 = sphi 0, %s105
    %s127 = sphi 0, %s129
    %s130 = sphi 0, %s127
    %s131 = sphi 0, %s130
    %s147 = sphi 0, %s131
    %s155 = sphi 0, %s157
    %s158 = sphi 0, %s155
    %s159 = sphi 0, %s158
    %s175 = sphi 0, %s159
  $region4: #{dgcnn_sem_seg_forward.8} parent=0 // loop_header_branch
    %15 = sbr.rel (%p13) target = $region8
  $region5: #{dgcnn_sem_seg_forward.8} parent=0 // loop_body
    %s17 = ssub.s32 %s12, 1
    %s18 = ssub.s32 %s12, 2
    %s25 = sadd.s32 1, %s20
    %p26 = scmp.ge.s32.totalorder %s25, 1
    %s27 = scalar_select %p26, 0, %s25
    %s28 = sadd.s32 1, %s19
    %s29 = scalar_select %p26, %s28, %s19
    %p30 = scmp.ge.s32.totalorder %s29, 2
    %s31 = scalar_select %p30, 0, %s29
    %s32 = ssub.s32 %s19, %s31
    %s33 = ssub.s32 %s20, %s27
    %s34 = sor.u32 %s32, %s33
    %p35 = scmp.eq.s32.totalorder %s34, 0
    %s37 = sadd.s32 %s36, 1
    %s38 = scalar_select %p35, %s36, %s37
    %p41 = pneg %p35
    %p42 = scmp.eq.s32.totalorder %s12, 1
    %p43 = por %p41, %p42
    %p44 = scmp.ne.s32.totalorder %s36, %s39
    %p45 = scmp.eq.s32.totalorder %s12, 0
    %p46 = por %p44, %p45
    %p47 = scmp.ne.s32.totalorder %s36, %s39
    %p48 = scmp.eq.s32.totalorder %s17, 1
    %p49 = por %p47, %p48
    %p50 = scmp.ne.s32.totalorder %s39, %s40
    %p51 = scmp.eq.s32.totalorder %s17, 0
    %p52 = por %p50, %p51
    %p53 = scmp.ne.s32.totalorder %s39, %s40
    %p54 = scmp.eq.s32.totalorder %s18, 1
    %p55 = por %p53, %p54
    %p57 = scmp.ne.s32.totalorder %s40, %s56
    %p58 = scmp.eq.s32.totalorder %s18, 0
    %p59 = por %p57, %p58
    %s61 = sadd.s32 %s60, 1
    %p64 = scmp.eq.s32.totalorder %s12, 1
    %p65 = scmp.ne.s32.totalorder %s60, %s62
    %p66 = scmp.eq.s32.totalorder %s12, 0
    %p67 = por %p65, %p66
    %p68 = scmp.ne.s32.totalorder %s60, %s62
    %p69 = scmp.eq.s32.totalorder %s17, 1
    %p70 = por %p68, %p69
    %p71 = scmp.ne.s32.totalorder %s62, %s63
    %p72 = scmp.eq.s32.totalorder %s17, 0
    %p73 = por %p71, %p72
    %p74 = scmp.ne.s32.totalorder %s62, %s63
    %p75 = scmp.eq.s32.totalorder %s18, 1
    %p76 = por %p74, %p75
    %p78 = scmp.ne.s32.totalorder %s63, %s77
    %p79 = scmp.eq.s32.totalorder %s18, 0
    %p80 = por %p78, %p79
    %s82 = sadd.s32 %s81, 1
    %p85 = scmp.eq.s32.totalorder %s12, 1
    %p86 = scmp.ne.s32.totalorder %s81, %s83
    %p87 = scmp.eq.s32.totalorder %s12, 0
    %p88 = por %p86, %p87
    %p89 = scmp.ne.s32.totalorder %s81, %s83
    %p90 = scmp.eq.s32.totalorder %s17, 1
    %p91 = por %p89, %p90
    %p92 = scmp.ne.s32.totalorder %s83, %s84
    %p93 = scmp.eq.s32.totalorder %s17, 0
    %p94 = por %p92, %p93
    %p95 = scmp.ne.s32.totalorder %s83, %s84
    %p96 = scmp.eq.s32.totalorder %s18, 1
    %p97 = por %p95, %p96
    %p99 = scmp.ne.s32.totalorder %s84, %s98
    %p100 = scmp.eq.s32.totalorder %s18, 0
    %p101 = por %p99, %p100
    %s103 = sadd.s32 %s102, 1
    %p106 = scmp.eq.s32.totalorder %s12, 1
    %p107 = scmp.ne.s32.totalorder %s102, %s104
    %p108 = scmp.eq.s32.totalorder %s12, 0
    %p109 = por %p107, %p108
    %p110 = scmp.ne.s32.totalorder %s102, %s104
    %p111 = scmp.eq.s32.totalorder %s17, 1
    %p112 = por %p110, %p111
    %p113 = scmp.ne.s32.totalorder %s104, %s105
    %p114 = scmp.eq.s32.totalorder %s17, 0
    %p115 = por %p113, %p114
    %p116 = scmp.ne.s32.totalorder %s104, %s105
    %p117 = scmp.eq.s32.totalorder %s18, 1
    %p118 = por %p116, %p117
    %p120 = scmp.ne.s32.totalorder %s105, %s119
    %p121 = scmp.eq.s32.totalorder %s18, 0
    %p122 = por %p120, %p121
    %s123 = ssub.s32 %s19, %s31
    %s124 = ssub.s32 %s20, %s27
    %s125 = sor.u32 %s123, %s124
    %p126 = scmp.eq.s32.totalorder %s125, 0
    %s128 = sadd.s32 %s127, 1
    %s129 = scalar_select %p126, %s127, %s128
    %p132 = pneg %p126
    %p133 = scmp.eq.s32.totalorder %s12, 1
    %p134 = por %p132, %p133
    %p135 = scmp.ne.s32.totalorder %s127, %s130
    %p136 = scmp.eq.s32.totalorder %s12, 0
    %p137 = por %p135, %p136
    %p138 = scmp.ne.s32.totalorder %s127, %s130
    %p139 = scmp.eq.s32.totalorder %s17, 1
    %p140 = por %p138, %p139
    %p141 = scmp.ne.s32.totalorder %s130, %s131
    %p142 = scmp.eq.s32.totalorder %s17, 0
    %p143 = por %p141, %p142
    %p144 = scmp.ne.s32.totalorder %s130, %s131
    %p145 = scmp.eq.s32.totalorder %s18, 1
    %p146 = por %p144, %p145
    %p148 = scmp.ne.s32.totalorder %s131, %s147
    %p149 = scmp.eq.s32.totalorder %s18, 0
    %p150 = por %p148, %p149
    %s151 = ssub.s32 %s19, %s31
    %s152 = ssub.s32 %s20, %s27
    %s153 = sor.u32 %s151, %s152
    %p154 = scmp.eq.s32.totalorder %s153, 0
    %s156 = sadd.s32 %s155, 1
    %s157 = scalar_select %p154, %s155, %s156
    %p160 = pneg %p154
    %p161 = scmp.eq.s32.totalorder %s12, 1
    %p162 = por %p160, %p161
    %p163 = scmp.ne.s32.totalorder %s155, %s158
    %p164 = scmp.eq.s32.totalorder %s12, 0
    %p165 = por %p163, %p164
    %p166 = scmp.ne.s32.totalorder %s155, %s158
    %p167 = scmp.eq.s32.totalorder %s17, 1
    %p168 = por %p166, %p167
    %p169 = scmp.ne.s32.totalorder %s158, %s159
    %p170 = scmp.eq.s32.totalorder %s17, 0
    %p171 = por %p169, %p170
    %p172 = scmp.ne.s32.totalorder %s158, %s159
    %p173 = scmp.eq.s32.totalorder %s18, 1
    %p174 = por %p172, %p173
    %p176 = scmp.ne.s32.totalorder %s159, %s175
    %p177 = scmp.eq.s32.totalorder %s18, 0
    %p178 = por %p176, %p177
    %p179 = scmp.le.s32.totalorder 1, %s12
    %p180 = scmp.lt.s32.totalorder %s12, 3
    %p181 = pnand %p179, %p180
    %p182 = pneg %p181
    // Predicated region
    $region9: #{dgcnn_sem_seg_forward.8} parent=5 // pred_check
      _
    $region10: #{dgcnn_sem_seg_forward.8} parent=5 // pred_check_branch
      %184 = sbr.rel (%p181) target = $region12
    $region11: #{dgcnn_sem_seg_forward.8} parent=5 // pred_region
      %s185 = ssub.s32 %s12, 1
      // Predicated region
      $region13: #{dgcnn_sem_seg_forward.8} parent=11 // pred_check
        %p186 = pneg %p73
      $region14: #{dgcnn_sem_seg_forward.8} parent=11 // pred_check_branch
        %188 = sbr.rel (%p186) target = $region16
      $region15: #{dgcnn_sem_seg_forward.8} parent=11 // pred_region
        _
      $region16: #{dgcnn_sem_seg_forward.8} parent=11 // pred_fallthru
        _
      // Predicated region
      $region17: #{dgcnn_sem_seg_forward.8} parent=11 // pred_check
        %p189 = pneg %p94
      $region18: #{dgcnn_sem_seg_forward.8} parent=11 // pred_check_branch
        %191 = sbr.rel (%p189) target = $region20
      $region19: #{dgcnn_sem_seg_forward.8} parent=11 // pred_region
        _
      $region20: #{dgcnn_sem_seg_forward.8} parent=11 // pred_fallthru
        _
      // Predicated region
      $region21: #{dgcnn_sem_seg_forward.8} parent=11 // pred_check
        %p192 = pneg %p115
      $region22: #{dgcnn_sem_seg_forward.8} parent=11 // pred_check_branch
        %194 = sbr.rel (%p192) target = $region24
      $region23: #{dgcnn_sem_seg_forward.8} parent=11 // pred_region
        _
      $region24: #{dgcnn_sem_seg_forward.8} parent=11 // pred_fallthru
        _
    $region12: #{dgcnn_sem_seg_forward.8} parent=5 // pred_fallthru
      _
    %p195 = scmp.lt.s32.totalorder %s12, 2
    // Predicated region
    $region25: #{dgcnn_sem_seg_forward.8} parent=5 // pred_check
      %p196 = pneg %p195
    $region26: #{dgcnn_sem_seg_forward.8} parent=5 // pred_check_branch
      %198 = sbr.rel (%p196) target = $region28
    $region27: #{dgcnn_sem_seg_forward.8} parent=5 // pred_region
      // Predicated region
      $region29: #{dgcnn_sem_seg_forward.8} parent=27 // pred_check
        %p199 = pneg %p46
      $region30: #{dgcnn_sem_seg_forward.8} parent=27 // pred_check_branch
        %201 = sbr.rel (%p199) target = $region32
      $region31: #{dgcnn_sem_seg_forward.8} parent=27 // pred_region
        %s202 = smul.u32 8, %s20
        %p203 = scmp.lt.s32.totalorder %s19, 1
        %s204 = scalar_select %p203, %s19, 1
        %p205 = scmp.lt.s32.totalorder %s202, 7
        %s206 = scalar_select %p205, %s202, 7
        %s207 = smul.addr %s204, 8
        %s208 = sadd.s32 %s206, %s207
        %s209 = smul.addr %s208, 8
        %s210 = scalar_lea.vmem %s0, %s209
        %s211 = smul.u32 8, %s20
      $region32: #{dgcnn_sem_seg_forward.8} parent=27 // pred_fallthru
        _
    $region28: #{dgcnn_sem_seg_forward.8} parent=5 // pred_fallthru
      _
    %p212 = scmp.le.s32.totalorder 1, %s12
    %p213 = scmp.lt.s32.totalorder %s12, 3
    %p214 = pnand %p212, %p213
    %p215 = pneg %p214
    // Predicated region
    $region33: #{dgcnn_sem_seg_forward.8} parent=5 // pred_check
      _
    $region34: #{dgcnn_sem_seg_forward.8} parent=5 // pred_check_branch
      %217 = sbr.rel (%p214) target = $region36
    $region35: #{dgcnn_sem_seg_forward.8} parent=5 // pred_region
      %s218 = ssub.s32 %s12, 1
      %s219 = smul.u32 8, %s22
      %p220 = scmp.lt.s32.totalorder %s21, 1
      %s221 = scalar_select %p220, %s21, 1
      %p222 = scmp.lt.s32.totalorder %s219, 7
      %s223 = scalar_select %p222, %s219, 7
      %s224 = smul.addr %s221, 8
      %s225 = sadd.s32 %s223, %s224
      %s226 = smul.addr %s225, 8
      %s227 = scalar_lea.vmem %s0, %s226
      %p228 = pneg %p52
      %p229 = pneg %p49
      %p230 = pneg %p73
      %p231 = pneg %p70
      %p232 = pneg %p94
      %p233 = pneg %p91
      %p234 = pneg %p115
      %p235 = pneg %p112
      %p236 = pneg %p143
      %p237 = pneg %p140
      %s238 = smul.u32 8, %s22
      %p239 = scmp.lt.s32.totalorder %s21, 1
      %s240 = scalar_select %p239, %s21, 1
      %p241 = scmp.lt.s32.totalorder %s238, 7
      %s242 = scalar_select %p241, %s238, 7
      %s243 = smul.addr %s240, 8
      %s244 = sadd.s32 %s242, %s243
      %s245 = smul.addr %s244, 4
      %s246 = scalar_lea.vmem %s4, %s245
      %p247 = pneg %p171
      %p248 = pneg %p168
      %s249 = smul.u32 8, %s22
      %p250 = scmp.lt.s32.totalorder %s21, 1
      %s251 = scalar_select %p250, %s21, 1
      %p252 = scmp.lt.s32.totalorder %s249, 7
      %s253 = scalar_select %p252, %s249, 7
      %s254 = smul.addr %s251, 8
      %s255 = sadd.s32 %s253, %s254
      %s256 = smul.addr %s255, 4
      %s257 = scalar_lea.vmem %s5, %s256
      %s258 = smul.u32 8, %s22
      %p259 = scmp.lt.s32.totalorder %s21, 1
      %s260 = scalar_select %p259, %s21, 1
      %p261 = scmp.lt.s32.totalorder %s258, 7
      %s262 = scalar_select %p261, %s258, 7
      %s263 = smul.addr %s260, 8
      %s264 = sadd.s32 %s262, %s263
      %s265 = smul.addr %s264, 8
      %s266 = scalar_lea.vmem %s0, %s265
      %s267 = smul.u32 8, %s22
      %s268 = smul.u32 8, %s22
      %p269 = scmp.lt.s32.totalorder %s21, 1
      %s270 = scalar_select %p269, %s21, 1
      %p271 = scmp.lt.s32.totalorder %s268, 7
      %s272 = scalar_select %p271, %s268, 7
      %s273 = smul.addr %s270, 8
      %s274 = sadd.s32 %s272, %s273
      %s275 = smul.addr %s274, 4
      %s276 = scalar_lea.vmem %s4, %s275
      %s277 = smul.u32 8, %s22
      %s278 = smul.u32 8, %s22
      %p279 = scmp.lt.s32.totalorder %s21, 1
      %s280 = scalar_select %p279, %s21, 1
      %p281 = scmp.lt.s32.totalorder %s278, 7
      %s282 = scalar_select %p281, %s278, 7
      %s283 = smul.addr %s280, 8
      %s284 = sadd.s32 %s282, %s283
      %s285 = smul.addr %s284, 4
      %s286 = scalar_lea.vmem %s5, %s285
      %s287 = smul.u32 8, %s22
      %v289 = vld [vmem:[%s266] sm:$0xff]
      %v290 = vld [vmem:[%s266 + $0x8] sm:$0xff]
      %v291 = vld [vmem:[%s266 + $0x10] sm:$0xff]
      %v292 = vld [vmem:[%s266 + $0x18] sm:$0xff]
      %v293 = vld [vmem:[%s266 + $0x20] sm:$0xff]
      %v294 = vld [vmem:[%s266 + $0x28] sm:$0xff]
      %v295 = vld [vmem:[%s266 + $0x30] sm:$0xff]
      %v296 = vld [vmem:[%s266 + $0x38] sm:$0xff]
      %v297 = vpack.c.bf16 %v290, %v289
      %v298 = vpack.c.bf16 %v292, %v291
      %v299 = vpack.c.bf16 %v294, %v293
      %v300 = vpack.c.bf16 %v296, %v295
      %v301 = vld [vmem:[%s1] sm:$0xf]
      %v302 = vld [vmem:[%s1 + $0x4] sm:$0x1]
      %v305 = vunpack.c.l.b16 %v301
      %v306 = vunpack.c.l.b16 %v302
      %v307 = vpack.c.b16 %v306, %v305
      %vm308 = vcmask 72704
      %v310 = vsel %vm308, %v297, 0
      %v313 = vsel %vm308, %v298, 0
      %v316 = vsel %vm308, %v299, 0
      %v319 = vsel %vm308, %v300, 0
      %vm321 = vcmask 1043456
      %vm322 = vcmask 1044480
      %v323 = vsel %vm321, 4294967295, 65535
      %v324 = vsel %vm322, %v323, 0
      %v326 = vand.u32 %v307, %v324
      %328 = vmatprep.subr.bf16.mxu0 0
      %329 = vmatpush1.bf16.msra.mxu0 %v326
      %330 = vmatprep.subr.bf16.mxu0 0
      %331 = vmatpush1.bf16.msra.mxu0 0
      %332 = vmatprep.subr.bf16.mxu0 0
      %333 = vmatpush1.bf16.msra.mxu0 0
      %334 = vmatprep.subr.bf16.mxu0 0
      %335 = vmatpush1.bf16.msra.mxu0 0
      %336 = vmatprep.subr.bf16.mxu0 0
      %337 = vmatpush1.bf16.msra.mxu0 0
      %338 = vmatprep.subr.bf16.mxu0 0
      %339 = vmatpush1.bf16.msra.mxu0 0
      %340 = vmatprep.subr.bf16.mxu0 0
      %341 = vmatpush1.bf16.msra.mxu0 0
      %342 = vmatprep.subr.bf16.mxu0 0
      %343 = vmatpush1.bf16.msra.mxu0 0
      %344 = vmatprep.subr.bf16.mxu0 0
      %345 = vmatpush1.bf16.msra.mxu0 0
      %346 = vmatprep.subr.bf16.mxu0 0
      %347 = vmatpush1.bf16.msra.mxu0 0
      %348 = vmatprep.subr.bf16.mxu0 0
      %349 = vmatpush1.bf16.msra.mxu0 0
      %350 = vmatprep.subr.bf16.mxu0 0
      %351 = vmatpush1.bf16.msra.mxu0 0
      %352 = vmatprep.subr.bf16.mxu0 0
      %353 = vmatpush1.bf16.msra.mxu0 0
      %354 = vmatprep.subr.bf16.mxu0 0
      %355 = vmatpush1.bf16.msra.mxu0 0
      %356 = vmatprep.subr.bf16.mxu0 0
      %357 = vmatpush1.bf16.msra.mxu0 0
      %358 = vmatprep.subr.bf16.mxu0 0
      %359 = vmatpush1.bf16.msra.mxu0 0
      %360 = vmatprep.mubr.bf16.mxu0 0
      %361 = vmatmul.mubr.bf16.gmra.mrb[0].mxu0 %v310
      %v362 = vpop.f32.mrb[0].mxu0
      %v363 = vadd.f32 0.0, %v362
      %v364 = vpop.f32.mrb[0].mxu0
      %v365 = vpop.f32.mrb[0].mxu0
      %v366 = vadd.f32 0.0, %v365
      %v367 = vpop.f32.mrb[0].mxu0
      %368 = vmatprep.mubr.bf16.mxu0 0
      %369 = vmatmul.mubr.bf16.gmra.mrb[0].mxu0 %v313
      %v370 = vpop.f32.mrb[0].mxu0
      %v371 = vadd.f32 0.0, %v370
      %v372 = vpop.f32.mrb[0].mxu0
      %v373 = vpop.f32.mrb[0].mxu0
      %v374 = vadd.f32 0.0, %v373
      %v375 = vpop.f32.mrb[0].mxu0
      %376 = vmatprep.mubr.bf16.mxu0 0
      %377 = vmatmul.mubr.bf16.gmra.mrb[0].mxu0 %v316
      %v378 = vpop.f32.mrb[0].mxu0
      %v379 = vadd.f32 0.0, %v378
      %v380 = vpop.f32.mrb[0].mxu0
      %v381 = vpop.f32.mrb[0].mxu0
      %v382 = vadd.f32 0.0, %v381
      %v383 = vpop.f32.mrb[0].mxu0
      %384 = vmatprep.mubr.bf16.mxu0 0
      %385 = vmatmul.mubr.bf16.gmra.mrb[0].mxu0 %v319
      %v386 = vpop.f32.mrb[0].mxu0
      %v387 = vadd.f32 0.0, %v386
      %v388 = vpop.f32.mrb[0].mxu0
      %v389 = vpop.f32.mrb[0].mxu0
      %v390 = vadd.f32 0.0, %v389
      %v391 = vpop.f32.mrb[0].mxu0
      %392 = vdwg.mxu0
      %v393 = vld [vmem:[%s2] sm:$0xf]
      %v394 = vld [vmem:[%s2 + $0x4] sm:$0x1]
      %v395 = vld [vmem:[%s3] sm:$0x1]
      %v397 = vlaneseq
      %v398 = vshrl.u32 %v397, 7
      %v399 = vsub.s32 0, %v398
      %v400 = vrot.slane %v395, %v399
      %v404 = vunpack.c.l.b16 %v393
      %v405 = vunpack.c.l.b16 %v394
      %v406 = vpack.c.b16 %v405, %v404
      %v408 = vand.u32 %v406, %v324
      %410 = vmatprep.subr.bf16.mxu0 0
      %411 = vmatpush1.bf16.msra.mxu0 %v408
      %412 = vmatprep.subr.bf16.mxu0 0
      %413 = vmatpush1.bf16.msra.mxu0 0
      %414 = vmatprep.subr.bf16.mxu0 0
      %415 = vmatpush1.bf16.msra.mxu0 0
      %416 = vmatprep.subr.bf16.mxu0 0
      %417 = vmatpush1.bf16.msra.mxu0 0
      %418 = vmatprep.subr.bf16.mxu0 0
      %419 = vmatpush1.bf16.msra.mxu0 0
      %420 = vmatprep.subr.bf16.mxu0 0
      %421 = vmatpush1.bf16.msra.mxu0 0
      %422 = vmatprep.subr.bf16.mxu0 0
      %423 = vmatpush1.bf16.msra.mxu0 0
      %424 = vmatprep.subr.bf16.mxu0 0
      %425 = vmatpush1.bf16.msra.mxu0 0
      %426 = vmatprep.subr.bf16.mxu0 0
      %427 = vmatpush1.bf16.msra.mxu0 0
      %428 = vmatprep.subr.bf16.mxu0 0
      %429 = vmatpush1.bf16.msra.mxu0 0
      %430 = vmatprep.subr.bf16.mxu0 0
      %431 = vmatpush1.bf16.msra.mxu0 0
      %432 = vmatprep.subr.bf16.mxu0 0
      %433 = vmatpush1.bf16.msra.mxu0 0
      %434 = vmatprep.subr.bf16.mxu0 0
      %435 = vmatpush1.bf16.msra.mxu0 0
      %436 = vmatprep.subr.bf16.mxu0 0
      %437 = vmatpush1.bf16.msra.mxu0 0
      %438 = vmatprep.subr.bf16.mxu0 0
      %439 = vmatpush1.bf16.msra.mxu0 0
      %440 = vmatprep.subr.bf16.mxu0 0
      %441 = vmatpush1.bf16.msra.mxu0 0
      %442 = vmatprep.mubr.bf16.mxu0 0
      %443 = vmatmul.mubr.bf16.gmra.mrb[0].mxu0 %v310
      %v444 = vpop.f32.mrb[0].mxu0
      %v445 = vadd.f32 %v400, %v444
      %v446 = vpop.f32.mrb[0].mxu0
      %v447 = vpop.f32.mrb[0].mxu0
      %v448 = vadd.f32 %v400, %v447
      %v449 = vpop.f32.mrb[0].mxu0
      %450 = vmatprep.mubr.bf16.mxu0 0
      %451 = vmatmul.mubr.bf16.gmra.mrb[0].mxu0 %v313
      %v452 = vpop.f32.mrb[0].mxu0
      %v453 = vadd.f32 %v400, %v452
      %v454 = vpop.f32.mrb[0].mxu0
      %v455 = vpop.f32.mrb[0].mxu0
      %v456 = vadd.f32 %v400, %v455
      %v457 = vpop.f32.mrb[0].mxu0
      %458 = vmatprep.mubr.bf16.mxu0 0
      %459 = vmatmul.mubr.bf16.gmra.mrb[0].mxu0 %v316
      %v460 = vpop.f32.mrb[0].mxu0
      %v461 = vadd.f32 %v400, %v460
      %v462 = vpop.f32.mrb[0].mxu0
      %v463 = vpop.f32.mrb[0].mxu0
      %v464 = vadd.f32 %v400, %v463
      %v465 = vpop.f32.mrb[0].mxu0
      %466 = vmatprep.mubr.bf16.mxu0 0
      %467 = vmatmul.mubr.bf16.gmra.mrb[0].mxu0 %v319
      %v468 = vpop.f32.mrb[0].mxu0
      %v469 = vadd.f32 %v400, %v468
      %v470 = vpop.f32.mrb[0].mxu0
      %v471 = vpop.f32.mrb[0].mxu0
      %v472 = vadd.f32 %v400, %v471
      %v473 = vpop.f32.mrb[0].mxu0
      %474 = vdwg.mxu0
      %v475 = vpack.c.bf16 %v366, %v363
      %v476 = vpack.c.bf16 %v374, %v371
      %v477 = vpack.c.bf16 %v382, %v379
      %v478 = vpack.c.bf16 %v390, %v387
      %v483 = vunpack.c.l.b16 %v475
      %v484 = vunpack.c.h.b16 %v475
      %v485 = vunpack.c.l.b16 %v476
      %v486 = vunpack.c.h.b16 %v476
      %v487 = vunpack.c.l.b16 %v477
      %v488 = vunpack.c.h.b16 %v477
      %v489 = vunpack.c.l.b16 %v478
      %v490 = vunpack.c.h.b16 %v478
      %v491 = vpack.c.b16 %v483, %v483
      %v492 = vpack.c.b16 %v484, %v484
      %v493 = vpack.c.b16 %v485, %v485
      %v494 = vpack.c.b16 %v486, %v486
      %v495 = vpack.c.b16 %v487, %v487
      %v496 = vpack.c.b16 %v488, %v488
      %v497 = vpack.c.b16 %v489, %v489
      %v498 = vpack.c.b16 %v490, %v490
      %vm507 = vcmask 519168
      %508 = vst.msk [vmem:[%s276] sm:$0xf] %vm507, %v491
      %509 = vst.msk [vmem:[%s276 + $0x4] sm:$0xf] %vm507, %v492
      %510 = vst.msk [vmem:[%s276 + $0x8] sm:$0xf] %vm507, %v493
      %511 = vst.msk [vmem:[%s276 + $0xc] sm:$0xf] %vm507, %v494
      %512 = vst.msk [vmem:[%s276 + $0x10] sm:$0xf] %vm507, %v495
      %513 = vst.msk [vmem:[%s276 + $0x14] sm:$0xf] %vm507, %v496
      %514 = vst.msk [vmem:[%s276 + $0x18] sm:$0xf] %vm507, %v497
      %515 = vst.msk [vmem:[%s276 + $0x1c] sm:$0xf] %vm507, %v498
      %v516 = vpack.c.bf16 %v448, %v445
      %v517 = vpack.c.bf16 %v456, %v453
      %v518 = vpack.c.bf16 %v464, %v461
      %v519 = vpack.c.bf16 %v472, %v469
      %v524 = vunpack.c.l.b16 %v516
      %v525 = vunpack.c.h.b16 %v516
      %v526 = vunpack.c.l.b16 %v517
      %v527 = vunpack.c.h.b16 %v517
      %v528 = vunpack.c.l.b16 %v518
      %v529 = vunpack.c.h.b16 %v518
      %v530 = vunpack.c.l.b16 %v519
      %v531 = vunpack.c.h.b16 %v519
      %v532 = vpack.c.b16 %v524, %v524
      %v533 = vpack.c.b16 %v525, %v525
      %v534 = vpack.c.b16 %v526, %v526
      %v535 = vpack.c.b16 %v527, %v527
      %v536 = vpack.c.b16 %v528, %v528
      %v537 = vpack.c.b16 %v529, %v529
      %v538 = vpack.c.b16 %v530, %v530
      %v539 = vpack.c.b16 %v531, %v531
      %548 = vst.msk [vmem:[%s286] sm:$0xf] %vm507, %v532
      %549 = vst.msk [vmem:[%s286 + $0x4] sm:$0xf] %vm507, %v533
      %550 = vst.msk [vmem:[%s286 + $0x8] sm:$0xf] %vm507, %v534
      %551 = vst.msk [vmem:[%s286 + $0xc] sm:$0xf] %vm507, %v535
      %552 = vst.msk [vmem:[%s286 + $0x10] sm:$0xf] %vm507, %v536
      %553 = vst.msk [vmem:[%s286 + $0x14] sm:$0xf] %vm507, %v537
      %554 = vst.msk [vmem:[%s286 + $0x18] sm:$0xf] %vm507, %v538
      %555 = vst.msk [vmem:[%s286 + $0x1c] sm:$0xf] %vm507, %v539
      %s556 = smul.u32 8, %s22
      %p557 = scmp.lt.s32.totalorder %s21, 1
      %s558 = scalar_select %p557, %s21, 1
      %p559 = scmp.lt.s32.totalorder %s556, 7
      %s560 = scalar_select %p559, %s556, 7
      %s561 = smul.addr %s558, 8
      %s562 = sadd.s32 %s560, %s561
      %s563 = smul.addr %s562, 4
      %s564 = scalar_lea.vmem %s4, %s563
      %s565 = smul.u32 8, %s22
      %p566 = scmp.lt.s32.totalorder %s21, 1
      %s567 = scalar_select %p566, %s21, 1
      %p568 = scmp.lt.s32.totalorder %s565, 7
      %s569 = scalar_select %p568, %s565, 7
      %s570 = smul.addr %s567, 8
      %s571 = sadd.s32 %s569, %s570
      %s572 = smul.addr %s571, 4
      %s573 = scalar_lea.vmem %s5, %s572
      // Predicated region
      $region37: #{dgcnn_sem_seg_forward.8} parent=35 // pred_check
        %p574 = pneg %p140
      $region38: #{dgcnn_sem_seg_forward.8} parent=35 // pred_check_branch
        %576 = sbr.rel (%p574) target = $region40
      $region39: #{dgcnn_sem_seg_forward.8} parent=35 // pred_region
        %s577 = smul.u32 8, %s22
      $region40: #{dgcnn_sem_seg_forward.8} parent=35 // pred_fallthru
        _
      // Predicated region
      $region41: #{dgcnn_sem_seg_forward.8} parent=35 // pred_check
        %p578 = pneg %p168
      $region42: #{dgcnn_sem_seg_forward.8} parent=35 // pred_check_branch
        %580 = sbr.rel (%p578) target = $region44
      $region43: #{dgcnn_sem_seg_forward.8} parent=35 // pred_region
        %s581 = smul.u32 8, %s22
      $region44: #{dgcnn_sem_seg_forward.8} parent=35 // pred_fallthru
        _
    $region36: #{dgcnn_sem_seg_forward.8} parent=5 // pred_fallthru
      _
    %p582 = scmp.le.s32.totalorder 2, %s12
    // Predicated region
    $region45: #{dgcnn_sem_seg_forward.8} parent=5 // pred_check
      %p583 = pneg %p582
    $region46: #{dgcnn_sem_seg_forward.8} parent=5 // pred_check_branch
      %585 = sbr.rel (%p583) target = $region48
    $region47: #{dgcnn_sem_seg_forward.8} parent=5 // pred_region
      %s586 = ssub.s32 %s12, 2
      // Predicated region
      $region49: #{dgcnn_sem_seg_forward.8} parent=47 // pred_check
        %p587 = pneg %p146
      $region50: #{dgcnn_sem_seg_forward.8} parent=47 // pred_check_branch
        %589 = sbr.rel (%p587) target = $region52
      $region51: #{dgcnn_sem_seg_forward.8} parent=47 // pred_region
        %s590 = smul.u32 8, %s24
        %p591 = scmp.lt.s32.totalorder %s23, 1
        %s592 = scalar_select %p591, %s23, 1
        %p593 = scmp.lt.s32.totalorder %s590, 7
        %s594 = scalar_select %p593, %s590, 7
        %s595 = smul.addr %s592, 8
        %s596 = sadd.s32 %s594, %s595
        %s597 = smul.addr %s596, 4
        %s598 = scalar_lea.vmem %s4, %s597
      $region52: #{dgcnn_sem_seg_forward.8} parent=47 // pred_fallthru
        _
      // Predicated region
      $region53: #{dgcnn_sem_seg_forward.8} parent=47 // pred_check
        %p599 = pneg %p174
      $region54: #{dgcnn_sem_seg_forward.8} parent=47 // pred_check_branch
        %601 = sbr.rel (%p599) target = $region56
      $region55: #{dgcnn_sem_seg_forward.8} parent=47 // pred_region
        %s602 = smul.u32 8, %s24
        %p603 = scmp.lt.s32.totalorder %s23, 1
        %s604 = scalar_select %p603, %s23, 1
        %p605 = scmp.lt.s32.totalorder %s602, 7
        %s606 = scalar_select %p605, %s602, 7
        %s607 = smul.addr %s604, 8
        %s608 = sadd.s32 %s606, %s607
        %s609 = smul.addr %s608, 4
        %s610 = scalar_lea.vmem %s5, %s609
      $region56: #{dgcnn_sem_seg_forward.8} parent=47 // pred_fallthru
        _
    $region48: #{dgcnn_sem_seg_forward.8} parent=5 // pred_fallthru
      _
  $region6: #{dgcnn_sem_seg_forward.8} parent=0 // loop_footer
    %s16 = sadd.s32 1, %s12
  $region7: #{dgcnn_sem_seg_forward.8} parent=0 // loop_footer_branch
    %11 = sbr.rel target = $region3
  $region8: #{dgcnn_sem_seg_forward.8} parent=0 // loop_exit
    _

// kernel: dgcnn_sem_seg_forward.9
$region0: #{dgcnn_sem_seg_forward.9}
  #allocation0 [shape = 'u32[]', space=smem, size = 0x4, offset = 0x4, fixed_abs, tag = 'smem constant byte address 0x4 - core index']
  #allocation1 [shape = 'u32[144,128]{1,0:T(1,128)}', space=vmem, size = 0x12000, scoped, tag = 'internal scratch']
  %s0 = inlined_call_operand.vmem [shape: bf16[2,8,64,64], index: 0, kind: input, shape index: {}]
  %s1 = inlined_call_operand.vmem [shape: bf16[2,64,64], index: 1, kind: input, shape index: {}]
  %s2 = inlined_call_operand.vmem [shape: bf16[64,64], index: 2, kind: input, shape index: {}]
  %s3 = inlined_call_operand.vmem [shape: f32[1,64], index: 3, kind: input, shape index: {}]
  %s4 = inlined_call_operand.vmem [shape: bf16[2,64,64], index: 4, kind: output, shape index: {}]
  %s5 = sld [smem:[#allocation0]]
  $region49: #{dgcnn_sem_seg_forward.9} parent=0
    _
  %s7 = ssub.s32 1, %s5
  %s8 = scalar_select 0, %s7, %s5
  loop: start=0, step=1, limit=4
  $region2: #{dgcnn_sem_seg_forward.9} parent=0 // loop_pre_header
    _
  $region3: #{dgcnn_sem_seg_forward.9} parent=0 // loop_header
    %s10 = sphi 0, %s14
    %p11 = scmp.ge.s32.totalorder %s10, 4
    %s17 = sphi 0, %s29
    %s18 = sphi 0, %s25
    %s19 = sphi 0, %s17
    %s20 = sphi 0, %s18
    %s21 = sphi 0, %s19
    %s22 = sphi 0, %s20
    %s34 = sphi 0, %s36
    %s37 = sphi 0, %s34
    %s38 = sphi 0, %s37
    %s54 = sphi 0, %s38
    %s62 = sphi 0, %s64
    %s65 = sphi 0, %s62
    %s66 = sphi 0, %s65
    %s82 = sphi 0, %s66
    %s86 = sphi 0, %s86
    %s88 = sphi 0, %s86
    %s89 = sphi 0, %s88
    %s103 = sphi 0, %s89
    %s107 = sphi 0, %s107
    %s109 = sphi 0, %s107
    %s110 = sphi 0, %s109
    %s124 = sphi 0, %s110
    %s132 = sphi 0, %s134
    %s135 = sphi 0, %s132
    %s136 = sphi 0, %s135
    %s152 = sphi 0, %s136
  $region4: #{dgcnn_sem_seg_forward.9} parent=0 // loop_header_branch
    %13 = sbr.rel (%p11) target = $region8
  $region5: #{dgcnn_sem_seg_forward.9} parent=0 // loop_body
    %s15 = ssub.s32 %s10, 1
    %s16 = ssub.s32 %s10, 2
    %s23 = sadd.s32 1, %s18
    %p24 = scmp.ge.s32.totalorder %s23, 1
    %s25 = scalar_select %p24, 0, %s23
    %s26 = sadd.s32 1, %s17
    %s27 = scalar_select %p24, %s26, %s17
    %p28 = scmp.ge.s32.totalorder %s27, 2
    %s29 = scalar_select %p28, 0, %s27
    %s30 = ssub.s32 %s17, %s29
    %s31 = ssub.s32 %s18, %s25
    %s32 = sor.u32 %s30, %s31
    %p33 = scmp.eq.s32.totalorder %s32, 0
    %s35 = sadd.s32 %s34, 1
    %s36 = scalar_select %p33, %s34, %s35
    %p39 = pneg %p33
    %p40 = scmp.eq.s32.totalorder %s10, 1
    %p41 = por %p39, %p40
    %p42 = scmp.ne.s32.totalorder %s34, %s37
    %p43 = scmp.eq.s32.totalorder %s10, 0
    %p44 = por %p42, %p43
    %p45 = scmp.ne.s32.totalorder %s34, %s37
    %p46 = scmp.eq.s32.totalorder %s15, 1
    %p47 = por %p45, %p46
    %p48 = scmp.ne.s32.totalorder %s37, %s38
    %p49 = scmp.eq.s32.totalorder %s15, 0
    %p50 = por %p48, %p49
    %p51 = scmp.ne.s32.totalorder %s37, %s38
    %p52 = scmp.eq.s32.totalorder %s16, 1
    %p53 = por %p51, %p52
    %p55 = scmp.ne.s32.totalorder %s38, %s54
    %p56 = scmp.eq.s32.totalorder %s16, 0
    %p57 = por %p55, %p56
    %s58 = ssub.s32 %s17, %s29
    %s59 = ssub.s32 %s18, %s25
    %s60 = sor.u32 %s58, %s59
    %p61 = scmp.eq.s32.totalorder %s60, 0
    %s63 = sadd.s32 %s62, 1
    %s64 = scalar_select %p61, %s62, %s63
    %p67 = pneg %p61
    %p68 = scmp.eq.s32.totalorder %s10, 1
    %p69 = por %p67, %p68
    %p70 = scmp.ne.s32.totalorder %s62, %s65
    %p71 = scmp.eq.s32.totalorder %s10, 0
    %p72 = por %p70, %p71
    %p73 = scmp.ne.s32.totalorder %s62, %s65
    %p74 = scmp.eq.s32.totalorder %s15, 1
    %p75 = por %p73, %p74
    %p76 = scmp.ne.s32.totalorder %s65, %s66
    %p77 = scmp.eq.s32.totalorder %s15, 0
    %p78 = por %p76, %p77
    %p79 = scmp.ne.s32.totalorder %s65, %s66
    %p80 = scmp.eq.s32.totalorder %s16, 1
    %p81 = por %p79, %p80
    %p83 = scmp.ne.s32.totalorder %s66, %s82
    %p84 = scmp.eq.s32.totalorder %s16, 0
    %p85 = por %p83, %p84
    %s87 = sadd.s32 %s86, 1
    %p90 = scmp.eq.s32.totalorder %s10, 1
    %p91 = scmp.ne.s32.totalorder %s86, %s88
    %p92 = scmp.eq.s32.totalorder %s10, 0
    %p93 = por %p91, %p92
    %p94 = scmp.ne.s32.totalorder %s86, %s88
    %p95 = scmp.eq.s32.totalorder %s15, 1
    %p96 = por %p94, %p95
    %p97 = scmp.ne.s32.totalorder %s88, %s89
    %p98 = scmp.eq.s32.totalorder %s15, 0
    %p99 = por %p97, %p98
    %p100 = scmp.ne.s32.totalorder %s88, %s89
    %p101 = scmp.eq.s32.totalorder %s16, 1
    %p102 = por %p100, %p101
    %p104 = scmp.ne.s32.totalorder %s89, %s103
    %p105 = scmp.eq.s32.totalorder %s16, 0
    %p106 = por %p104, %p105
    %s108 = sadd.s32 %s107, 1
    %p111 = scmp.eq.s32.totalorder %s10, 1
    %p112 = scmp.ne.s32.totalorder %s107, %s109
    %p113 = scmp.eq.s32.totalorder %s10, 0
    %p114 = por %p112, %p113
    %p115 = scmp.ne.s32.totalorder %s107, %s109
    %p116 = scmp.eq.s32.totalorder %s15, 1
    %p117 = por %p115, %p116
    %p118 = scmp.ne.s32.totalorder %s109, %s110
    %p119 = scmp.eq.s32.totalorder %s15, 0
    %p120 = por %p118, %p119
    %p121 = scmp.ne.s32.totalorder %s109, %s110
    %p122 = scmp.eq.s32.totalorder %s16, 1
    %p123 = por %p121, %p122
    %p125 = scmp.ne.s32.totalorder %s110, %s124
    %p126 = scmp.eq.s32.totalorder %s16, 0
    %p127 = por %p125, %p126
    %s128 = ssub.s32 %s17, %s29
    %s129 = ssub.s32 %s18, %s25
    %s130 = sor.u32 %s128, %s129
    %p131 = scmp.eq.s32.totalorder %s130, 0
    %s133 = sadd.s32 %s132, 1
    %s134 = scalar_select %p131, %s132, %s133
    %p137 = pneg %p131
    %p138 = scmp.eq.s32.totalorder %s10, 1
    %p139 = por %p137, %p138
    %p140 = scmp.ne.s32.totalorder %s132, %s135
    %p141 = scmp.eq.s32.totalorder %s10, 0
    %p142 = por %p140, %p141
    %p143 = scmp.ne.s32.totalorder %s132, %s135
    %p144 = scmp.eq.s32.totalorder %s15, 1
    %p145 = por %p143, %p144
    %p146 = scmp.ne.s32.totalorder %s135, %s136
    %p147 = scmp.eq.s32.totalorder %s15, 0
    %p148 = por %p146, %p147
    %p149 = scmp.ne.s32.totalorder %s135, %s136
    %p150 = scmp.eq.s32.totalorder %s16, 1
    %p151 = por %p149, %p150
    %p153 = scmp.ne.s32.totalorder %s136, %s152
    %p154 = scmp.eq.s32.totalorder %s16, 0
    %p155 = por %p153, %p154
    %p156 = scmp.le.s32.totalorder 1, %s10
    %p157 = scmp.lt.s32.totalorder %s10, 3
    %p158 = pnand %p156, %p157
    %p159 = pneg %p158
    // Predicated region
    $region9: #{dgcnn_sem_seg_forward.9} parent=5 // pred_check
      _
    $region10: #{dgcnn_sem_seg_forward.9} parent=5 // pred_check_branch
      %161 = sbr.rel (%p158) target = $region12
    $region11: #{dgcnn_sem_seg_forward.9} parent=5 // pred_region
      %s162 = ssub.s32 %s10, 1
      // Predicated region
      $region13: #{dgcnn_sem_seg_forward.9} parent=11 // pred_check
        %p163 = pneg %p99
      $region14: #{dgcnn_sem_seg_forward.9} parent=11 // pred_check_branch
        %165 = sbr.rel (%p163) target = $region16
      $region15: #{dgcnn_sem_seg_forward.9} parent=11 // pred_region
        _
      $region16: #{dgcnn_sem_seg_forward.9} parent=11 // pred_fallthru
        _
      // Predicated region
      $region17: #{dgcnn_sem_seg_forward.9} parent=11 // pred_check
        %p166 = pneg %p120
      $region18: #{dgcnn_sem_seg_forward.9} parent=11 // pred_check_branch
        %168 = sbr.rel (%p166) target = $region20
      $region19: #{dgcnn_sem_seg_forward.9} parent=11 // pred_region
        _
      $region20: #{dgcnn_sem_seg_forward.9} parent=11 // pred_fallthru
        _
    $region12: #{dgcnn_sem_seg_forward.9} parent=5 // pred_fallthru
      _
    %p169 = scmp.lt.s32.totalorder %s10, 2
    // Predicated region
    $region21: #{dgcnn_sem_seg_forward.9} parent=5 // pred_check
      %p170 = pneg %p169
    $region22: #{dgcnn_sem_seg_forward.9} parent=5 // pred_check_branch
      %172 = sbr.rel (%p170) target = $region24
    $region23: #{dgcnn_sem_seg_forward.9} parent=5 // pred_region
      // Predicated region
      $region25: #{dgcnn_sem_seg_forward.9} parent=23 // pred_check
        %p173 = pneg %p44
      $region26: #{dgcnn_sem_seg_forward.9} parent=23 // pred_check_branch
        %175 = sbr.rel (%p173) target = $region28
      $region27: #{dgcnn_sem_seg_forward.9} parent=23 // pred_region
        %s176 = smul.u32 8, %s18
        %p177 = scmp.lt.s32.totalorder %s17, 1
        %s178 = scalar_select %p177, %s17, 1
        %p179 = scmp.lt.s32.totalorder %s176, 7
        %s180 = scalar_select %p179, %s176, 7
        %s181 = smul.addr %s178, 64
        %s182 = sadd.s32 %s180, %s181
        %s183 = smul.addr %s182, 4
        %s184 = scalar_lea.vmem %s0, %s183
        %s185 = smul.u32 8, %s18
      $region28: #{dgcnn_sem_seg_forward.9} parent=23 // pred_fallthru
        _
      // Predicated region
      $region29: #{dgcnn_sem_seg_forward.9} parent=23 // pred_check
        %p186 = pneg %p72
      $region30: #{dgcnn_sem_seg_forward.9} parent=23 // pred_check_branch
        %188 = sbr.rel (%p186) target = $region32
      $region31: #{dgcnn_sem_seg_forward.9} parent=23 // pred_region
        %s189 = smul.u32 8, %s18
        %p190 = scmp.lt.s32.totalorder %s17, 1
        %s191 = scalar_select %p190, %s17, 1
        %p192 = scmp.lt.s32.totalorder %s189, 7
        %s193 = scalar_select %p192, %s189, 7
        %s194 = smul.addr %s191, 8
        %s195 = sadd.s32 %s193, %s194
        %s196 = smul.addr %s195, 4
        %s197 = scalar_lea.vmem %s1, %s196
        %s198 = smul.u32 8, %s18
      $region32: #{dgcnn_sem_seg_forward.9} parent=23 // pred_fallthru
        _
    $region24: #{dgcnn_sem_seg_forward.9} parent=5 // pred_fallthru
      _
    %p199 = scmp.le.s32.totalorder 1, %s10
    %p200 = scmp.lt.s32.totalorder %s10, 3
    %p201 = pnand %p199, %p200
    %p202 = pneg %p201
    // Predicated region
    $region33: #{dgcnn_sem_seg_forward.9} parent=5 // pred_check
      _
    $region34: #{dgcnn_sem_seg_forward.9} parent=5 // pred_check_branch
      %204 = sbr.rel (%p201) target = $region36
    $region35: #{dgcnn_sem_seg_forward.9} parent=5 // pred_region
      %s205 = ssub.s32 %s10, 1
      %s206 = smul.u32 8, %s20
      %p207 = scmp.lt.s32.totalorder %s19, 1
      %s208 = scalar_select %p207, %s19, 1
      %p209 = scmp.lt.s32.totalorder %s206, 7
      %s210 = scalar_select %p209, %s206, 7
      %s211 = smul.addr %s208, 64
      %s212 = sadd.s32 %s210, %s211
      %s213 = smul.addr %s212, 4
      %s214 = scalar_lea.vmem %s0, %s213
      %p215 = pneg %p50
      %p216 = pneg %p47
      %s217 = smul.u32 8, %s20
      %p218 = scmp.lt.s32.totalorder %s19, 1
      %s219 = scalar_select %p218, %s19, 1
      %p220 = scmp.lt.s32.totalorder %s217, 7
      %s221 = scalar_select %p220, %s217, 7
      %s222 = smul.addr %s219, 8
      %s223 = sadd.s32 %s221, %s222
      %s224 = smul.addr %s223, 4
      %s225 = scalar_lea.vmem %s1, %s224
      %p226 = pneg %p78
      %p227 = pneg %p75
      %p228 = pneg %p99
      %p229 = pneg %p96
      %p230 = pneg %p120
      %p231 = pneg %p117
      %p232 = pneg %p148
      %p233 = pneg %p145
      %s234 = smul.u32 8, %s20
      %p235 = scmp.lt.s32.totalorder %s19, 1
      %s236 = scalar_select %p235, %s19, 1
      %p237 = scmp.lt.s32.totalorder %s234, 7
      %s238 = scalar_select %p237, %s234, 7
      %s239 = smul.addr %s236, 8
      %s240 = sadd.s32 %s238, %s239
      %s241 = smul.addr %s240, 4
      %s242 = scalar_lea.vmem %s4, %s241
      %s243 = smul.u32 8, %s20
      %p244 = scmp.lt.s32.totalorder %s19, 1
      %s245 = scalar_select %p244, %s19, 1
      %p246 = scmp.lt.s32.totalorder %s243, 7
      %s247 = scalar_select %p246, %s243, 7
      %s248 = smul.addr %s245, 64
      %s249 = sadd.s32 %s247, %s248
      %s250 = smul.addr %s249, 4
      %s251 = scalar_lea.vmem %s0, %s250
      %s252 = smul.u32 8, %s20
      %s253 = smul.u32 8, %s20
      %p254 = scmp.lt.s32.totalorder %s19, 1
      %s255 = scalar_select %p254, %s19, 1
      %p256 = scmp.lt.s32.totalorder %s253, 7
      %s257 = scalar_select %p256, %s253, 7
      %s258 = smul.addr %s255, 8
      %s259 = sadd.s32 %s257, %s258
      %s260 = smul.addr %s259, 4
      %s261 = scalar_lea.vmem %s1, %s260
      %s262 = smul.u32 8, %s20
      %s263 = smul.u32 8, %s20
      %p264 = scmp.lt.s32.totalorder %s19, 1
      %s265 = scalar_select %p264, %s19, 1
      %p266 = scmp.lt.s32.totalorder %s263, 7
      %s267 = scalar_select %p266, %s263, 7
      %s268 = smul.addr %s265, 8
      %s269 = sadd.s32 %s267, %s268
      %s270 = smul.addr %s269, 4
      %s271 = scalar_lea.vmem %s4, %s270
      %s272 = smul.u32 8, %s20
      %v276 = vld [vmem:[%s251] sm:$0xf]
      %v277 = vld [vmem:[%s251 + $0x4] sm:$0xf]
      %v278 = vld [vmem:[%s251 + $0x8] sm:$0xf]
      %v279 = vld [vmem:[%s251 + $0xc] sm:$0xf]
      %v280 = vld [vmem:[%s251 + $0x10] sm:$0xf]
      %v281 = vld [vmem:[%s251 + $0x14] sm:$0xf]
      %v282 = vld [vmem:[%s251 + $0x18] sm:$0xf]
      %v283 = vld [vmem:[%s251 + $0x1c] sm:$0xf]
      %v284 = vld [vmem:[%s251 + $0x20] sm:$0xf]
      %v285 = vld [vmem:[%s251 + $0x24] sm:$0xf]
      %v286 = vld [vmem:[%s251 + $0x28] sm:$0xf]
      %v287 = vld [vmem:[%s251 + $0x2c] sm:$0xf]
      %v288 = vld [vmem:[%s251 + $0x30] sm:$0xf]
      %v289 = vld [vmem:[%s251 + $0x34] sm:$0xf]
      %v290 = vld [vmem:[%s251 + $0x38] sm:$0xf]
      %v291 = vld [vmem:[%s251 + $0x3c] sm:$0xf]
      %v292 = vld [vmem:[%s251 + $0x40] sm:$0xf]
      %v293 = vld [vmem:[%s251 + $0x44] sm:$0xf]
      %v294 = vld [vmem:[%s251 + $0x48] sm:$0xf]
      %v295 = vld [vmem:[%s251 + $0x4c] sm:$0xf]
      %v296 = vld [vmem:[%s251 + $0x50] sm:$0xf]
      %v297 = vld [vmem:[%s251 + $0x54] sm:$0xf]
      %v298 = vld [vmem:[%s251 + $0x58] sm:$0xf]
      %v299 = vld [vmem:[%s251 + $0x5c] sm:$0xf]
      %v300 = vld [vmem:[%s251 + $0x60] sm:$0xf]
      %v301 = vld [vmem:[%s251 + $0x64] sm:$0xf]
      %v302 = vld [vmem:[%s251 + $0x68] sm:$0xf]
      %v303 = vld [vmem:[%s251 + $0x6c] sm:$0xf]
      %v304 = vld [vmem:[%s251 + $0x70] sm:$0xf]
      %v305 = vld [vmem:[%s251 + $0x74] sm:$0xf]
      %v306 = vld [vmem:[%s251 + $0x78] sm:$0xf]
      %v307 = vld [vmem:[%s251 + $0x7c] sm:$0xf]
      %v308 = vld [vmem:[%s251 + $0x80] sm:$0xf]
      %v309 = vld [vmem:[%s251 + $0x84] sm:$0xf]
      %v310 = vld [vmem:[%s251 + $0x88] sm:$0xf]
      %v311 = vld [vmem:[%s251 + $0x8c] sm:$0xf]
      %v312 = vld [vmem:[%s251 + $0x90] sm:$0xf]
      %v313 = vld [vmem:[%s251 + $0x94] sm:$0xf]
      %v314 = vld [vmem:[%s251 + $0x98] sm:$0xf]
      %v315 = vld [vmem:[%s251 + $0x9c] sm:$0xf]
      %v316 = vld [vmem:[%s251 + $0xa0] sm:$0xf]
      %v317 = vld [vmem:[%s251 + $0xa4] sm:$0xf]
      %v318 = vld [vmem:[%s251 + $0xa8] sm:$0xf]
      %v319 = vld [vmem:[%s251 + $0xac] sm:$0xf]
      %v320 = vld [vmem:[%s251 + $0xb0] sm:$0xf]
      %v321 = vld [vmem:[%s251 + $0xb4] sm:$0xf]
      %v322 = vld [vmem:[%s251 + $0xb8] sm:$0xf]
      %v323 = vld [vmem:[%s251 + $0xbc] sm:$0xf]
      %v324 = vld [vmem:[%s251 + $0xc0] sm:$0xf]
      %v325 = vld [vmem:[%s251 + $0xc4] sm:$0xf]
      %v326 = vld [vmem:[%s251 + $0xc8] sm:$0xf]
      %v327 = vld [vmem:[%s251 + $0xcc] sm:$0xf]
      %v328 = vld [vmem:[%s251 + $0xd0] sm:$0xf]
      %v329 = vld [vmem:[%s251 + $0xd4] sm:$0xf]
      %v330 = vld [vmem:[%s251 + $0xd8] sm:$0xf]
      %v331 = vld [vmem:[%s251 + $0xdc] sm:$0xf]
      %v332 = vld [vmem:[%s251 + $0xe0] sm:$0xf]
      %v333 = vld [vmem:[%s251 + $0xe4] sm:$0xf]
      %v334 = vld [vmem:[%s251 + $0xe8] sm:$0xf]
      %v335 = vld [vmem:[%s251 + $0xec] sm:$0xf]
      %v336 = vld [vmem:[%s251 + $0xf0] sm:$0xf]
      %v337 = vld [vmem:[%s251 + $0xf4] sm:$0xf]
      %v338 = vld [vmem:[%s251 + $0xf8] sm:$0xf]
      %v339 = vld [vmem:[%s251 + $0xfc] sm:$0xf]
      %v340 = vld [vmem:[%s261] sm:$0xf]
      %v341 = vld [vmem:[%s261 + $0x4] sm:$0xf]
      %v342 = vld [vmem:[%s261 + $0x8] sm:$0xf]
      %v343 = vld [vmem:[%s261 + $0xc] sm:$0xf]
      %v344 = vld [vmem:[%s261 + $0x10] sm:$0xf]
      %v345 = vld [vmem:[%s261 + $0x14] sm:$0xf]
      %v346 = vld [vmem:[%s261 + $0x18] sm:$0xf]
      %v347 = vld [vmem:[%s261 + $0x1c] sm:$0xf]
      %v348 = vadd.bf16 %v276, %v340
      %v349 = vadd.bf16 %v277, %v341
      %v350 = vadd.bf16 %v278, %v342
      %v351 = vadd.bf16 %v279, %v343
      %v352 = vadd.bf16 %v280, %v344
      %v353 = vadd.bf16 %v281, %v345
      %v354 = vadd.bf16 %v282, %v346
      %v355 = vadd.bf16 %v283, %v347
      %v356 = vadd.bf16 %v284, %v340
      %v357 = vadd.bf16 %v285, %v341
      %v358 = vadd.bf16 %v286, %v342
      %v359 = vadd.bf16 %v287, %v343
      %v360 = vadd.bf16 %v288, %v344
      %v361 = vadd.bf16 %v289, %v345
      %v362 = vadd.bf16 %v290, %v346
      %v363 = vadd.bf16 %v291, %v347
      %v364 = vadd.bf16 %v292, %v340
      %v365 = vadd.bf16 %v293, %v341
      %v366 = vadd.bf16 %v294, %v342
      %v367 = vadd.bf16 %v295, %v343
      %v368 = vadd.bf16 %v296, %v344
      %v369 = vadd.bf16 %v297, %v345
      %v370 = vadd.bf16 %v298, %v346
      %v371 = vadd.bf16 %v299, %v347
      %v372 = vadd.bf16 %v300, %v340
      %v373 = vadd.bf16 %v301, %v341
      %v374 = vadd.bf16 %v302, %v342
      %v375 = vadd.bf16 %v303, %v343
      %v376 = vadd.bf16 %v304, %v344
      %v377 = vadd.bf16 %v305, %v345
      %v378 = vadd.bf16 %v306, %v346
      %v379 = vadd.bf16 %v307, %v347
      %v380 = vadd.bf16 %v308, %v340
      %v381 = vadd.bf16 %v309, %v341
      %v382 = vadd.bf16 %v310, %v342
      %v383 = vadd.bf16 %v311, %v343
      %v384 = vadd.bf16 %v312, %v344
      %v385 = vadd.bf16 %v313, %v345
      %v386 = vadd.bf16 %v314, %v346
      %v387 = vadd.bf16 %v315, %v347
      %v388 = vadd.bf16 %v316, %v340
      %v389 = vadd.bf16 %v317, %v341
      %v390 = vadd.bf16 %v318, %v342
      %v391 = vadd.bf16 %v319, %v343
      %v392 = vadd.bf16 %v320, %v344
      %v393 = vadd.bf16 %v321, %v345
      %v394 = vadd.bf16 %v322, %v346
      %v395 = vadd.bf16 %v323, %v347
      %v396 = vadd.bf16 %v324, %v340
      %v397 = vadd.bf16 %v325, %v341
      %v398 = vadd.bf16 %v326, %v342
      %v399 = vadd.bf16 %v327, %v343
      %v400 = vadd.bf16 %v328, %v344
      %v401 = vadd.bf16 %v329, %v345
      %v402 = vadd.bf16 %v330, %v346
      %v403 = vadd.bf16 %v331, %v347
      %v404 = vadd.bf16 %v332, %v340
      %v405 = vadd.bf16 %v333, %v341
      %v406 = vadd.bf16 %v334, %v342
      %v407 = vadd.bf16 %v335, %v343
      %v408 = vadd.bf16 %v336, %v344
      %v409 = vadd.bf16 %v337, %v345
      %v410 = vadd.bf16 %v338, %v346
      %v411 = vadd.bf16 %v339, %v347
      %vm412 = vcmp.ge.bf16.partialorder %v348, 0
      %vm413 = vcmp.ge.bf16.partialorder %v349, 0
      %vm414 = vcmp.ge.bf16.partialorder %v350, 0
      %vm415 = vcmp.ge.bf16.partialorder %v351, 0
      %vm416 = vcmp.ge.bf16.partialorder %v352, 0
      %vm417 = vcmp.ge.bf16.partialorder %v353, 0
      %vm418 = vcmp.ge.bf16.partialorder %v354, 0
      %vm419 = vcmp.ge.bf16.partialorder %v355, 0
      %vm420 = vcmp.ge.bf16.partialorder %v356, 0
      %vm421 = vcmp.ge.bf16.partialorder %v357, 0
      %vm422 = vcmp.ge.bf16.partialorder %v358, 0
      %vm423 = vcmp.ge.bf16.partialorder %v359, 0
      %vm424 = vcmp.ge.bf16.partialorder %v360, 0
      %vm425 = vcmp.ge.bf16.partialorder %v361, 0
      %vm426 = vcmp.ge.bf16.partialorder %v362, 0
      %vm427 = vcmp.ge.bf16.partialorder %v363, 0
      %vm428 = vcmp.ge.bf16.partialorder %v364, 0
      %vm429 = vcmp.ge.bf16.partialorder %v365, 0
      %vm430 = vcmp.ge.bf16.partialorder %v366, 0
      %vm431 = vcmp.ge.bf16.partialorder %v367, 0
      %vm432 = vcmp.ge.bf16.partialorder %v368, 0
      %vm433 = vcmp.ge.bf16.partialorder %v369, 0
      %vm434 = vcmp.ge.bf16.partialorder %v370, 0
      %vm435 = vcmp.ge.bf16.partialorder %v371, 0
      %vm436 = vcmp.ge.bf16.partialorder %v372, 0
      %vm437 = vcmp.ge.bf16.partialorder %v373, 0
      %vm438 = vcmp.ge.bf16.partialorder %v374, 0
      %vm439 = vcmp.ge.bf16.partialorder %v375, 0
      %vm440 = vcmp.ge.bf16.partialorder %v376, 0
      %vm441 = vcmp.ge.bf16.partialorder %v377, 0
      %vm442 = vcmp.ge.bf16.partialorder %v378, 0
      %vm443 = vcmp.ge.bf16.partialorder %v379, 0
      %vm444 = vcmp.ge.bf16.partialorder %v380, 0
      %vm445 = vcmp.ge.bf16.partialorder %v381, 0
      %vm446 = vcmp.ge.bf16.partialorder %v382, 0
      %vm447 = vcmp.ge.bf16.partialorder %v383, 0
      %vm448 = vcmp.ge.bf16.partialorder %v384, 0
      %vm449 = vcmp.ge.bf16.partialorder %v385, 0
      %vm450 = vcmp.ge.bf16.partialorder %v386, 0
      %vm451 = vcmp.ge.bf16.partialorder %v387, 0
      %vm452 = vcmp.ge.bf16.partialorder %v388, 0
      %vm453 = vcmp.ge.bf16.partialorder %v389, 0
      %vm454 = vcmp.ge.bf16.partialorder %v390, 0
      %vm455 = vcmp.ge.bf16.partialorder %v391, 0
      %vm456 = vcmp.ge.bf16.partialorder %v392, 0
      %vm457 = vcmp.ge.bf16.partialorder %v393, 0
      %vm458 = vcmp.ge.bf16.partialorder %v394, 0
      %vm459 = vcmp.ge.bf16.partialorder %v395, 0
      %vm460 = vcmp.ge.bf16.partialorder %v396, 0
      %vm461 = vcmp.ge.bf16.partialorder %v397, 0
      %vm462 = vcmp.ge.bf16.partialorder %v398, 0
      %vm463 = vcmp.ge.bf16.partialorder %v399, 0
      %vm464 = vcmp.ge.bf16.partialorder %v400, 0
      %vm465 = vcmp.ge.bf16.partialorder %v401, 0
      %vm466 = vcmp.ge.bf16.partialorder %v402, 0
      %vm467 = vcmp.ge.bf16.partialorder %v403, 0
      %vm468 = vcmp.ge.bf16.partialorder %v404, 0
      %vm469 = vcmp.ge.bf16.partialorder %v405, 0
      %vm470 = vcmp.ge.bf16.partialorder %v406, 0
      %vm471 = vcmp.ge.bf16.partialorder %v407, 0
      %vm472 = vcmp.ge.bf16.partialorder %v408, 0
      %vm473 = vcmp.ge.bf16.partialorder %v409, 0
      %vm474 = vcmp.ge.bf16.partialorder %v410, 0
      %vm475 = vcmp.ge.bf16.partialorder %v411, 0
      %v476 = vmul.bf16 %v348, 1045249613
      %v477 = vmul.bf16 %v349, 1045249613
      %v478 = vmul.bf16 %v350, 1045249613
      %v479 = vmul.bf16 %v351, 1045249613
      %v480 = vmul.bf16 %v352, 1045249613
      %v481 = vmul.bf16 %v353, 1045249613
      %v482 = vmul.bf16 %v354, 1045249613
      %v483 = vmul.bf16 %v355, 1045249613
      %v484 = vmul.bf16 %v356, 1045249613
      %v485 = vmul.bf16 %v357, 1045249613
      %v486 = vmul.bf16 %v358, 1045249613
      %v487 = vmul.bf16 %v359, 1045249613
      %v488 = vmul.bf16 %v360, 1045249613
      %v489 = vmul.bf16 %v361, 1045249613
      %v490 = vmul.bf16 %v362, 1045249613
      %v491 = vmul.bf16 %v363, 1045249613
      %v492 = vmul.bf16 %v364, 1045249613
      %v493 = vmul.bf16 %v365, 1045249613
      %v494 = vmul.bf16 %v366, 1045249613
      %v495 = vmul.bf16 %v367, 1045249613
      %v496 = vmul.bf16 %v368, 1045249613
      %v497 = vmul.bf16 %v369, 1045249613
      %v498 = vmul.bf16 %v370, 1045249613
      %v499 = vmul.bf16 %v371, 1045249613
      %v500 = vmul.bf16 %v372, 1045249613
      %v501 = vmul.bf16 %v373, 1045249613
      %v502 = vmul.bf16 %v374, 1045249613
      %v503 = vmul.bf16 %v375, 1045249613
      %v504 = vmul.bf16 %v376, 1045249613
      %v505 = vmul.bf16 %v377, 1045249613
      %v506 = vmul.bf16 %v378, 1045249613
      %v507 = vmul.bf16 %v379, 1045249613
      %v508 = vmul.bf16 %v380, 1045249613
      %v509 = vmul.bf16 %v381, 1045249613
      %v510 = vmul.bf16 %v382, 1045249613
      %v511 = vmul.bf16 %v383, 1045249613
      %v512 = vmul.bf16 %v384, 1045249613
      %v513 = vmul.bf16 %v385, 1045249613
      %v514 = vmul.bf16 %v386, 1045249613
      %v515 = vmul.bf16 %v387, 1045249613
      %v516 = vmul.bf16 %v388, 1045249613
      %v517 = vmul.bf16 %v389, 1045249613
      %v518 = vmul.bf16 %v390, 1045249613
      %v519 = vmul.bf16 %v391, 1045249613
      %v520 = vmul.bf16 %v392, 1045249613
      %v521 = vmul.bf16 %v393, 1045249613
      %v522 = vmul.bf16 %v394, 1045249613
      %v523 = vmul.bf16 %v395, 1045249613
      %v524 = vmul.bf16 %v396, 1045249613
      %v525 = vmul.bf16 %v397, 1045249613
      %v526 = vmul.bf16 %v398, 1045249613
      %v527 = vmul.bf16 %v399, 1045249613
      %v528 = vmul.bf16 %v400, 1045249613
      %v529 = vmul.bf16 %v401, 1045249613
      %v530 = vmul.bf16 %v402, 1045249613
      %v531 = vmul.bf16 %v403, 1045249613
      %v532 = vmul.bf16 %v404, 1045249613
      %v533 = vmul.bf16 %v405, 1045249613
      %v534 = vmul.bf16 %v406, 1045249613
      %v535 = vmul.bf16 %v407, 1045249613
      %v536 = vmul.bf16 %v408, 1045249613
      %v537 = vmul.bf16 %v409, 1045249613
      %v538 = vmul.bf16 %v410, 1045249613
      %v539 = vmul.bf16 %v411, 1045249613
      %v540 = vsel %vm412, %v348, %v476
      %v541 = vsel %vm413, %v349, %v477
      %v542 = vsel %vm414, %v350, %v478
      %v543 = vsel %vm415, %v351, %v479
      %v544 = vsel %vm416, %v352, %v480
      %v545 = vsel %vm417, %v353, %v481
      %v546 = vsel %vm418, %v354, %v482
      %v547 = vsel %vm419, %v355, %v483
      %v548 = vsel %vm420, %v356, %v484
      %v549 = vsel %vm421, %v357, %v485
      %v550 = vsel %vm422, %v358, %v486
      %v551 = vsel %vm423, %v359, %v487
      %v552 = vsel %vm424, %v360, %v488
      %v553 = vsel %vm425, %v361, %v489
      %v554 = vsel %vm426, %v362, %v490
      %v555 = vsel %vm427, %v363, %v491
      %v556 = vsel %vm428, %v364, %v492
      %v557 = vsel %vm429, %v365, %v493
      %v558 = vsel %vm430, %v366, %v494
      %v559 = vsel %vm431, %v367, %v495
      %v560 = vsel %vm432, %v368, %v496
      %v561 = vsel %vm433, %v369, %v497
      %v562 = vsel %vm434, %v370, %v498
      %v563 = vsel %vm435, %v371, %v499
      %v564 = vsel %vm436, %v372, %v500
      %v565 = vsel %vm437, %v373, %v501
      %v566 = vsel %vm438, %v374, %v502
      %v567 = vsel %vm439, %v375, %v503
      %v568 = vsel %vm440, %v376, %v504
      %v569 = vsel %vm441, %v377, %v505
      %v570 = vsel %vm442, %v378, %v506
      %v571 = vsel %vm443, %v379, %v507
      %v572 = vsel %vm444, %v380, %v508
      %v573 = vsel %vm445, %v381, %v509
      %v574 = vsel %vm446, %v382, %v510
      %v575 = vsel %vm447, %v383, %v511
      %v576 = vsel %vm448, %v384, %v512
      %v577 = vsel %vm449, %v385, %v513
      %v578 = vsel %vm450, %v386, %v514
      %v579 = vsel %vm451, %v387, %v515
      %v580 = vsel %vm452, %v388, %v516
      %v581 = vsel %vm453, %v389, %v517
      %v582 = vsel %vm454, %v390, %v518
      %v583 = vsel %vm455, %v391, %v519
      %v584 = vsel %vm456, %v392, %v520
      %v585 = vsel %vm457, %v393, %v521
      %v586 = vsel %vm458, %v394, %v522
      %v587 = vsel %vm459, %v395, %v523
      %v588 = vsel %vm460, %v396, %v524
      %v589 = vsel %vm461, %v397, %v525
      %v590 = vsel %vm462, %v398, %v526
      %v591 = vsel %vm463, %v399, %v527
      %v592 = vsel %vm464, %v400, %v528
      %v593 = vsel %vm465, %v401, %v529
      %v594 = vsel %vm466, %v402, %v530
      %v595 = vsel %vm467, %v403, %v531
      %v596 = vsel %vm468, %v404, %v532
      %v597 = vsel %vm469, %v405, %v533
      %v598 = vsel %vm470, %v406, %v534
      %v599 = vsel %vm471, %v407, %v535
      %v600 = vsel %vm472, %v408, %v536
      %v601 = vsel %vm473, %v409, %v537
      %v602 = vsel %vm474, %v410, %v538
      %v603 = vsel %vm475, %v411, %v539
      %v604 = vld [vmem:[%s2] sm:$0xf]
      %v605 = vld [vmem:[%s2 + $0x4] sm:$0xf]
      %v606 = vld [vmem:[%s2 + $0x8] sm:$0xf]
      %v607 = vld [vmem:[%s2 + $0xc] sm:$0xf]
      %v608 = vld [vmem:[%s2 + $0x10] sm:$0xf]
      %v609 = vld [vmem:[%s2 + $0x14] sm:$0xf]
      %v610 = vld [vmem:[%s2 + $0x18] sm:$0xf]
      %v611 = vld [vmem:[%s2 + $0x1c] sm:$0xf]
      %v612 = vld [vmem:[%s3] sm:$0x1]
      %v614 = vlaneseq
      %v615 = vshrl.u32 %v614, 7
      %v616 = vsub.s32 0, %v615
      %v617 = vrot.slane %v612, %v616
      %v683 = vunpack.c.l.b16 %v540
      %v684 = vunpack.c.l.b16 %v541
      %v685 = vunpack.c.l.b16 %v542
      %v686 = vunpack.c.l.b16 %v543
      %v687 = vunpack.c.l.b16 %v544
      %v688 = vunpack.c.l.b16 %v545
      %v689 = vunpack.c.l.b16 %v546
      %v690 = vunpack.c.l.b16 %v547
      %v691 = vunpack.c.l.b16 %v548
      %v692 = vunpack.c.l.b16 %v549
      %v693 = vunpack.c.l.b16 %v550
      %v694 = vunpack.c.l.b16 %v551
      %v695 = vunpack.c.l.b16 %v552
      %v696 = vunpack.c.l.b16 %v553
      %v697 = vunpack.c.l.b16 %v554
      %v698 = vunpack.c.l.b16 %v555
      %v699 = vunpack.c.l.b16 %v556
      %v700 = vunpack.c.l.b16 %v557
      %v701 = vunpack.c.l.b16 %v558
      %v702 = vunpack.c.l.b16 %v559
      %v703 = vunpack.c.l.b16 %v560
      %v704 = vunpack.c.l.b16 %v561
      %v705 = vunpack.c.l.b16 %v562
      %v706 = vunpack.c.l.b16 %v563
      %v707 = vunpack.c.l.b16 %v564
      %v708 = vunpack.c.l.b16 %v565
      %v709 = vunpack.c.l.b16 %v566
      %v710 = vunpack.c.l.b16 %v567
      %v711 = vunpack.c.l.b16 %v568
      %v712 = vunpack.c.l.b16 %v569
      %v713 = vunpack.c.l.b16 %v570
      %v714 = vunpack.c.l.b16 %v571
      %v715 = vunpack.c.l.b16 %v572
      %v716 = vunpack.c.l.b16 %v573
      %v717 = vunpack.c.l.b16 %v574
      %v718 = vunpack.c.l.b16 %v575
      %v719 = vunpack.c.l.b16 %v576
      %v720 = vunpack.c.l.b16 %v577
      %v721 = vunpack.c.l.b16 %v578
      %v722 = vunpack.c.l.b16 %v579
      %v723 = vunpack.c.l.b16 %v580
      %v724 = vunpack.c.l.b16 %v581
      %v725 = vunpack.c.l.b16 %v582
      %v726 = vunpack.c.l.b16 %v583
      %v727 = vunpack.c.l.b16 %v584
      %v728 = vunpack.c.l.b16 %v585
      %v729 = vunpack.c.l.b16 %v586
      %v730 = vunpack.c.l.b16 %v587
      %v731 = vunpack.c.l.b16 %v588
      %v732 = vunpack.c.l.b16 %v589
      %v733 = vunpack.c.l.b16 %v590
      %v734 = vunpack.c.l.b16 %v591
      %v735 = vunpack.c.l.b16 %v592
      %v736 = vunpack.c.l.b16 %v593
      %v737 = vunpack.c.l.b16 %v594
      %v738 = vunpack.c.l.b16 %v595
      %v739 = vunpack.c.l.b16 %v596
      %v740 = vunpack.c.l.b16 %v597
      %v741 = vunpack.c.l.b16 %v598
      %v742 = vunpack.c.l.b16 %v599
      %v743 = vunpack.c.l.b16 %v600
      %v744 = vunpack.c.l.b16 %v601
      %v745 = vunpack.c.l.b16 %v602
      %v746 = vunpack.c.l.b16 %v603
      %v747 = vpack.c.b16 %v684, %v683
      %v748 = vpack.c.b16 %v686, %v685
      %v749 = vpack.c.b16 %v688, %v687
      %v750 = vpack.c.b16 %v690, %v689
      %v751 = vpack.c.b16 %v692, %v691
      %v752 = vpack.c.b16 %v694, %v693
      %v753 = vpack.c.b16 %v696, %v695
      %v754 = vpack.c.b16 %v698, %v697
      %v755 = vpack.c.b16 %v700, %v699
      %v756 = vpack.c.b16 %v702, %v701
      %v757 = vpack.c.b16 %v704, %v703
      %v758 = vpack.c.b16 %v706, %v705
      %v759 = vpack.c.b16 %v708, %v707
      %v760 = vpack.c.b16 %v710, %v709
      %v761 = vpack.c.b16 %v712, %v711
      %v762 = vpack.c.b16 %v714, %v713
      %v763 = vpack.c.b16 %v716, %v715
      %v764 = vpack.c.b16 %v718, %v717
      %v765 = vpack.c.b16 %v720, %v719
      %v766 = vpack.c.b16 %v722, %v721
      %v767 = vpack.c.b16 %v724, %v723
      %v768 = vpack.c.b16 %v726, %v725
      %v769 = vpack.c.b16 %v728, %v727
      %v770 = vpack.c.b16 %v730, %v729
      %v771 = vpack.c.b16 %v732, %v731
      %v772 = vpack.c.b16 %v734, %v733
      %v773 = vpack.c.b16 %v736, %v735
      %v774 = vpack.c.b16 %v738, %v737
      %v775 = vpack.c.b16 %v740, %v739
      %v776 = vpack.c.b16 %v742, %v741
      %v777 = vpack.c.b16 %v744, %v743
      %v778 = vpack.c.b16 %v746, %v745
      %v787 = vunpack.c.l.b16 %v604
      %v788 = vunpack.c.l.b16 %v605
      %v789 = vunpack.c.l.b16 %v606
      %v790 = vunpack.c.l.b16 %v607
      %v791 = vunpack.c.l.b16 %v608
      %v792 = vunpack.c.l.b16 %v609
      %v793 = vunpack.c.l.b16 %v610
      %v794 = vunpack.c.l.b16 %v611
      %v795 = vpack.c.b16 %v788, %v787
      %v796 = vpack.c.b16 %v790, %v789
      %v797 = vpack.c.b16 %v792, %v791
      %v798 = vpack.c.b16 %v794, %v793
      %vm803 = vcmask 523264
      %v805 = vsel %vm803, %v747, 0
      %v808 = vsel %vm803, %v748, 0
      %v811 = vsel %vm803, %v749, 0
      %v814 = vsel %vm803, %v750, 0
      %v817 = vsel %vm803, %v751, 0
      %v820 = vsel %vm803, %v752, 0
      %v823 = vsel %vm803, %v753, 0
      %v826 = vsel %vm803, %v754, 0
      %v829 = vsel %vm803, %v755, 0
      %v832 = vsel %vm803, %v756, 0
      %v835 = vsel %vm803, %v757, 0
      %v838 = vsel %vm803, %v758, 0
      %v841 = vsel %vm803, %v759, 0
      %v844 = vsel %vm803, %v760, 0
      %v847 = vsel %vm803, %v761, 0
      %v850 = vsel %vm803, %v762, 0
      %v853 = vsel %vm803, %v763, 0
      %v856 = vsel %vm803, %v764, 0
      %v859 = vsel %vm803, %v765, 0
      %v862 = vsel %vm803, %v766, 0
      %v865 = vsel %vm803, %v767, 0
      %v868 = vsel %vm803, %v768, 0
      %v871 = vsel %vm803, %v769, 0
      %v874 = vsel %vm803, %v770, 0
      %v877 = vsel %vm803, %v771, 0
      %v880 = vsel %vm803, %v772, 0
      %v883 = vsel %vm803, %v773, 0
      %v886 = vsel %vm803, %v774, 0
      %v889 = vsel %vm803, %v775, 0
      %v892 = vsel %vm803, %v776, 0
      %v895 = vsel %vm803, %v777, 0
      %v898 = vsel %vm803, %v778, 0
      %900 = vmatprep.subr.bf16.mxu0 0
      %901 = vmatpush1.bf16.msra.mxu0 %v795
      %902 = vmatprep.subr.bf16.mxu0 0
      %903 = vmatpush1.bf16.msra.mxu0 %v796
      %904 = vmatprep.subr.bf16.mxu0 0
      %905 = vmatpush1.bf16.msra.mxu0 %v797
      %906 = vmatprep.subr.bf16.mxu0 0
      %907 = vmatpush1.bf16.msra.mxu0 %v798
      %908 = vmatprep.subr.bf16.mxu0 0
      %909 = vmatpush1.bf16.msra.mxu0 0
      %910 = vmatprep.subr.bf16.mxu0 0
      %911 = vmatpush1.bf16.msra.mxu0 0
      %912 = vmatprep.subr.bf16.mxu0 0
      %913 = vmatpush1.bf16.msra.mxu0 0
      %914 = vmatprep.subr.bf16.mxu0 0
      %915 = vmatpush1.bf16.msra.mxu0 0
      %916 = vmatprep.subr.bf16.mxu0 0
      %917 = vmatpush1.bf16.msra.mxu0 0
      %918 = vmatprep.subr.bf16.mxu0 0
      %919 = vmatpush1.bf16.msra.mxu0 0
      %920 = vmatprep.subr.bf16.mxu0 0
      %921 = vmatpush1.bf16.msra.mxu0 0
      %922 = vmatprep.subr.bf16.mxu0 0
      %923 = vmatpush1.bf16.msra.mxu0 0
      %924 = vmatprep.subr.bf16.mxu0 0
      %925 = vmatpush1.bf16.msra.mxu0 0
      %926 = vmatprep.subr.bf16.mxu0 0
      %927 = vmatpush1.bf16.msra.mxu0 0
      %928 = vmatprep.subr.bf16.mxu0 0
      %929 = vmatpush1.bf16.msra.mxu0 0
      %930 = vmatprep.subr.bf16.mxu0 0
      %931 = vmatpush1.bf16.msra.mxu0 0
      %932 = vmatprep.mubr.bf16.mxu0 0
      %933 = vmatmul.mubr.bf16.gmra.mrb[0].mxu0 %v805
      %v934 = vpop.f32.mrb[0].mxu0
      %v935 = vadd.f32 %v617, %v934
      %v936 = vpop.f32.mrb[0].mxu0
      %v937 = vpop.f32.mrb[0].mxu0
      %v938 = vadd.f32 %v617, %v937
      %v939 = vpop.f32.mrb[0].mxu0
      %940 = vmatprep.mubr.bf16.mxu0 0
      %941 = vmatmul.mubr.bf16.gmra.mrb[0].mxu0 %v808
      %v942 = vpop.f32.mrb[0].mxu0
      %v943 = vadd.f32 %v617, %v942
      %v944 = vpop.f32.mrb[0].mxu0
      %v945 = vpop.f32.mrb[0].mxu0
      %v946 = vadd.f32 %v617, %v945
      %v947 = vpop.f32.mrb[0].mxu0
      %948 = vmatprep.mubr.bf16.mxu0 0
      %949 = vmatmul.mubr.bf16.gmra.mrb[0].mxu0 %v811
      %v950 = vpop.f32.mrb[0].mxu0
      %v951 = vadd.f32 %v617, %v950
      %v952 = vpop.f32.mrb[0].mxu0
      %v953 = vpop.f32.mrb[0].mxu0
      %v954 = vadd.f32 %v617, %v953
      %v955 = vpop.f32.mrb[0].mxu0
      %956 = vmatprep.mubr.bf16.mxu0 0
      %957 = vmatmul.mubr.bf16.gmra.mrb[0].mxu0 %v814
      %v958 = vpop.f32.mrb[0].mxu0
      %v959 = vadd.f32 %v617, %v958
      %v960 = vpop.f32.mrb[0].mxu0
      %v961 = vpop.f32.mrb[0].mxu0
      %v962 = vadd.f32 %v617, %v961
      %v963 = vpop.f32.mrb[0].mxu0
      %964 = vmatprep.mubr.bf16.mxu0 0
      %965 = vmatmul.mubr.bf16.gmra.mrb[0].mxu0 %v817
      %v966 = vpop.f32.mrb[0].mxu0
      %v967 = vadd.f32 %v617, %v966
      %v968 = vpop.f32.mrb[0].mxu0
      %v969 = vpop.f32.mrb[0].mxu0
      %v970 = vadd.f32 %v617, %v969
      %v971 = vpop.f32.mrb[0].mxu0
      %972 = vmatprep.mubr.bf16.mxu0 0
      %973 = vmatmul.mubr.bf16.gmra.mrb[0].mxu0 %v820
      %v974 = vpop.f32.mrb[0].mxu0
      %v975 = vadd.f32 %v617, %v974
      %v976 = vpop.f32.mrb[0].mxu0
      %v977 = vpop.f32.mrb[0].mxu0
      %v978 = vadd.f32 %v617, %v977
      %v979 = vpop.f32.mrb[0].mxu0
      %980 = vmatprep.mubr.bf16.mxu0 0
      %981 = vmatmul.mubr.bf16.gmra.mrb[0].mxu0 %v823
      %v982 = vpop.f32.mrb[0].mxu0
      %v983 = vadd.f32 %v617, %v982
      %v984 = vpop.f32.mrb[0].mxu0
      %v985 = vpop.f32.mrb[0].mxu0
      %v986 = vadd.f32 %v617, %v985
      %v987 = vpop.f32.mrb[0].mxu0
      %988 = vmatprep.mubr.bf16.mxu0 0
      %989 = vmatmul.mubr.bf16.gmra.mrb[0].mxu0 %v826
      %v990 = vpop.f32.mrb[0].mxu0
      %v991 = vadd.f32 %v617, %v990
      %v992 = vpop.f32.mrb[0].mxu0
      %v993 = vpop.f32.mrb[0].mxu0
      %v994 = vadd.f32 %v617, %v993
      %v995 = vpop.f32.mrb[0].mxu0
      %996 = vmatprep.mubr.bf16.mxu0 0
      %997 = vmatmul.mubr.bf16.gmra.mrb[0].mxu0 %v829
      %v998 = vpop.f32.mrb[0].mxu0
      %v999 = vadd.f32 %v617, %v998
      %v1000 = vpop.f32.mrb[0].mxu0
      %v1001 = vpop.f32.mrb[0].mxu0
      %v1002 = vadd.f32 %v617, %v1001
      %v1003 = vpop.f32.mrb[0].mxu0
      %1004 = vmatprep.mubr.bf16.mxu0 0
      %1005 = vmatmul.mubr.bf16.gmra.mrb[0].mxu0 %v832
      %v1006 = vpop.f32.mrb[0].mxu0
      %v1007 = vadd.f32 %v617, %v1006
      %v1008 = vpop.f32.mrb[0].mxu0
      %v1009 = vpop.f32.mrb[0].mxu0
      %v1010 = vadd.f32 %v617, %v1009
      %v1011 = vpop.f32.mrb[0].mxu0
      %1012 = vmatprep.mubr.bf16.mxu0 0
      %1013 = vmatmul.mubr.bf16.gmra.mrb[0].mxu0 %v835
      %v1014 = vpop.f32.mrb[0].mxu0
      %v1015 = vadd.f32 %v617, %v1014
      %v1016 = vpop.f32.mrb[0].mxu0
      %v1017 = vpop.f32.mrb[0].mxu0
      %v1018 = vadd.f32 %v617, %v1017
      %v1019 = vpop.f32.mrb[0].mxu0
      %1020 = vmatprep.mubr.bf16.mxu0 0
      %1021 = vmatmul.mubr.bf16.gmra.mrb[0].mxu0 %v838
      %v1022 = vpop.f32.mrb[0].mxu0
      %v1023 = vadd.f32 %v617, %v1022
      %v1024 = vpop.f32.mrb[0].mxu0
      %v1025 = vpop.f32.mrb[0].mxu0
      %v1026 = vadd.f32 %v617, %v1025
      %v1027 = vpop.f32.mrb[0].mxu0
      %1028 = vmatprep.mubr.bf16.mxu0 0
      %1029 = vmatmul.mubr.bf16.gmra.mrb[0].mxu0 %v841
      %v1030 = vpop.f32.mrb[0].mxu0
      %v1031 = vadd.f32 %v617, %v1030
      %v1032 = vpop.f32.mrb[0].mxu0
      %v1033 = vpop.f32.mrb[0].mxu0
      %v1034 = vadd.f32 %v617, %v1033
      %v1035 = vpop.f32.mrb[0].mxu0
      %1036 = vmatprep.mubr.bf16.mxu0 0
      %1037 = vmatmul.mubr.bf16.gmra.mrb[0].mxu0 %v844
      %v1038 = vpop.f32.mrb[0].mxu0
      %v1039 = vadd.f32 %v617, %v1038
      %v1040 = vpop.f32.mrb[0].mxu0
      %v1041 = vpop.f32.mrb[0].mxu0
      %v1042 = vadd.f32 %v617, %v1041
      %v1043 = vpop.f32.mrb[0].mxu0
      %1044 = vmatprep.mubr.bf16.mxu0 0
      %1045 = vmatmul.mubr.bf16.gmra.mrb[0].mxu0 %v847
      %v1046 = vpop.f32.mrb[0].mxu0
      %v1047 = vadd.f32 %v617, %v1046
      %v1048 = vpop.f32.mrb[0].mxu0
      %v1049 = vpop.f32.mrb[0].mxu0
      %v1050 = vadd.f32 %v617, %v1049
      %v1051 = vpop.f32.mrb[0].mxu0
      %1052 = vmatprep.mubr.bf16.mxu0 0
      %1053 = vmatmul.mubr.bf16.gmra.mrb[0].mxu0 %v850
      %v1054 = vpop.f32.mrb[0].mxu0
      %v1055 = vadd.f32 %v617, %v1054
      %v1056 = vpop.f32.mrb[0].mxu0
      %v1057 = vpop.f32.mrb[0].mxu0
      %v1058 = vadd.f32 %v617, %v1057
      %v1059 = vpop.f32.mrb[0].mxu0
      %1060 = vmatprep.mubr.bf16.mxu0 0
      %1061 = vmatmul.mubr.bf16.gmra.mrb[0].mxu0 %v853
      %v1062 = vpop.f32.mrb[0].mxu0
      %v1063 = vadd.f32 %v617, %v1062
      %v1064 = vpop.f32.mrb[0].mxu0
      %v1065 = vpop.f32.mrb[0].mxu0
      %v1066 = vadd.f32 %v617, %v1065
      %v1067 = vpop.f32.mrb[0].mxu0
      %1068 = vmatprep.mubr.bf16.mxu0 0
      %1069 = vmatmul.mubr.bf16.gmra.mrb[0].mxu0 %v856
      %v1070 = vpop.f32.mrb[0].mxu0
      %v1071 = vadd.f32 %v617, %v1070
      %v1072 = vpop.f32.mrb[0].mxu0
      %v1073 = vpop.f32.mrb[0].mxu0
      %v1074 = vadd.f32 %v617, %v1073
      %v1075 = vpop.f32.mrb[0].mxu0
      %1076 = vmatprep.mubr.bf16.mxu0 0
      %1077 = vmatmul.mubr.bf16.gmra.mrb[0].mxu0 %v859
      %v1078 = vpop.f32.mrb[0].mxu0
      %v1079 = vadd.f32 %v617, %v1078
      %v1080 = vpop.f32.mrb[0].mxu0
      %v1081 = vpop.f32.mrb[0].mxu0
      %v1082 = vadd.f32 %v617, %v1081
      %v1083 = vpop.f32.mrb[0].mxu0
      %1084 = vmatprep.mubr.bf16.mxu0 0
      %1085 = vmatmul.mubr.bf16.gmra.mrb[0].mxu0 %v862
      %v1086 = vpop.f32.mrb[0].mxu0
      %v1087 = vadd.f32 %v617, %v1086
      %v1088 = vpop.f32.mrb[0].mxu0
      %v1089 = vpop.f32.mrb[0].mxu0
      %v1090 = vadd.f32 %v617, %v1089
      %v1091 = vpop.f32.mrb[0].mxu0
      %1092 = vmatprep.mubr.bf16.mxu0 0
      %1093 = vmatmul.mubr.bf16.gmra.mrb[0].mxu0 %v865
      %v1094 = vpop.f32.mrb[0].mxu0
      %v1095 = vadd.f32 %v617, %v1094
      %v1096 = vpop.f32.mrb[0].mxu0
      %v1097 = vpop.f32.mrb[0].mxu0
      %v1098 = vadd.f32 %v617, %v1097
      %v1099 = vpop.f32.mrb[0].mxu0
      %1100 = vmatprep.mubr.bf16.mxu0 0
      %1101 = vmatmul.mubr.bf16.gmra.mrb[0].mxu0 %v868
      %v1102 = vpop.f32.mrb[0].mxu0
      %v1103 = vadd.f32 %v617, %v1102
      %v1104 = vpop.f32.mrb[0].mxu0
      %v1105 = vpop.f32.mrb[0].mxu0
      %v1106 = vadd.f32 %v617, %v1105
      %v1107 = vpop.f32.mrb[0].mxu0
      %1108 = vmatprep.mubr.bf16.mxu0 0
      %1109 = vmatmul.mubr.bf16.gmra.mrb[0].mxu0 %v871
      %v1110 = vpop.f32.mrb[0].mxu0
      %v1111 = vadd.f32 %v617, %v1110
      %v1112 = vpop.f32.mrb[0].mxu0
      %v1113 = vpop.f32.mrb[0].mxu0
      %v1114 = vadd.f32 %v617, %v1113
      %v1115 = vpop.f32.mrb[0].mxu0
      %1116 = vmatprep.mubr.bf16.mxu0 0
      %1117 = vmatmul.mubr.bf16.gmra.mrb[0].mxu0 %v874
      %v1118 = vpop.f32.mrb[0].mxu0
      %v1119 = vadd.f32 %v617, %v1118
      %v1120 = vpop.f32.mrb[0].mxu0
      %v1121 = vpop.f32.mrb[0].mxu0
      %v1122 = vadd.f32 %v617, %v1121
      %v1123 = vpop.f32.mrb[0].mxu0
      %1124 = vmatprep.mubr.bf16.mxu0 0
      %1125 = vmatmul.mubr.bf16.gmra.mrb[0].mxu0 %v877
      %v1126 = vpop.f32.mrb[0].mxu0
      %v1127 = vadd.f32 %v617, %v1126
      %v1128 = vpop.f32.mrb[0].mxu0
      %v1129 = vpop.f32.mrb[0].mxu0
      %v1130 = vadd.f32 %v617, %v1129
      %v1131 = vpop.f32.mrb[0].mxu0
      %1132 = vmatprep.mubr.bf16.mxu0 0
      %1133 = vmatmul.mubr.bf16.gmra.mrb[0].mxu0 %v880
      %v1134 = vpop.f32.mrb[0].mxu0
      %v1135 = vadd.f32 %v617, %v1134
      %v1136 = vpop.f32.mrb[0].mxu0
      %v1137 = vpop.f32.mrb[0].mxu0
      %v1138 = vadd.f32 %v617, %v1137
      %v1139 = vpop.f32.mrb[0].mxu0
      %1140 = vmatprep.mubr.bf16.mxu0 0
      %1141 = vmatmul.mubr.bf16.gmra.mrb[0].mxu0 %v883
      %v1142 = vpop.f32.mrb[0].mxu0
      %v1143 = vadd.f32 %v617, %v1142
      %v1144 = vpop.f32.mrb[0].mxu0
      %v1145 = vpop.f32.mrb[0].mxu0
      %v1146 = vadd.f32 %v617, %v1145
      %v1147 = vpop.f32.mrb[0].mxu0
      %1148 = vmatprep.mubr.bf16.mxu0 0
      %1149 = vmatmul.mubr.bf16.gmra.mrb[0].mxu0 %v886
      %v1150 = vpop.f32.mrb[0].mxu0
      %v1151 = vadd.f32 %v617, %v1150
      %v1152 = vpop.f32.mrb[0].mxu0
      %v1153 = vpop.f32.mrb[0].mxu0
      %v1154 = vadd.f32 %v617, %v1153
      %v1155 = vpop.f32.mrb[0].mxu0
      %1156 = vmatprep.mubr.bf16.mxu0 0
      %1157 = vmatmul.mubr.bf16.gmra.mrb[0].mxu0 %v889
      %v1158 = vpop.f32.mrb[0].mxu0
      %v1159 = vadd.f32 %v617, %v1158
      %v1160 = vpop.f32.mrb[0].mxu0
      %v1161 = vpop.f32.mrb[0].mxu0
      %v1162 = vadd.f32 %v617, %v1161
      %v1163 = vpop.f32.mrb[0].mxu0
      %1164 = vmatprep.mubr.bf16.mxu0 0
      %1165 = vmatmul.mubr.bf16.gmra.mrb[0].mxu0 %v892
      %v1166 = vpop.f32.mrb[0].mxu0
      %v1167 = vadd.f32 %v617, %v1166
      %v1168 = vpop.f32.mrb[0].mxu0
      %v1169 = vpop.f32.mrb[0].mxu0
      %v1170 = vadd.f32 %v617, %v1169
      %v1171 = vpop.f32.mrb[0].mxu0
      %1172 = vmatprep.mubr.bf16.mxu0 0
      %1173 = vmatmul.mubr.bf16.gmra.mrb[0].mxu0 %v895
      %v1174 = vpop.f32.mrb[0].mxu0
      %v1175 = vadd.f32 %v617, %v1174
      %v1176 = vpop.f32.mrb[0].mxu0
      %v1177 = vpop.f32.mrb[0].mxu0
      %v1178 = vadd.f32 %v617, %v1177
      %v1179 = vpop.f32.mrb[0].mxu0
      %1180 = vmatprep.mubr.bf16.mxu0 0
      %1181 = vmatmul.mubr.bf16.gmra.mrb[0].mxu0 %v898
      %v1182 = vpop.f32.mrb[0].mxu0
      %v1183 = vadd.f32 %v617, %v1182
      %v1184 = vpop.f32.mrb[0].mxu0
      %v1185 = vpop.f32.mrb[0].mxu0
      %v1186 = vadd.f32 %v617, %v1185
      %v1187 = vpop.f32.mrb[0].mxu0
      %1188 = vdwg.mxu0
      %vm1189 = vcmp.ge.f32.partialorder %v935, 0.0
      %vm1190 = vcmp.ge.f32.partialorder %v938, 0.0
      %vm1191 = vcmp.ge.f32.partialorder %v943, 0.0
      %vm1192 = vcmp.ge.f32.partialorder %v946, 0.0
      %vm1193 = vcmp.ge.f32.partialorder %v951, 0.0
      %vm1194 = vcmp.ge.f32.partialorder %v954, 0.0
      %vm1195 = vcmp.ge.f32.partialorder %v959, 0.0
      %vm1196 = vcmp.ge.f32.partialorder %v962, 0.0
      %vm1197 = vcmp.ge.f32.partialorder %v967, 0.0
      %vm1198 = vcmp.ge.f32.partialorder %v970, 0.0
      %vm1199 = vcmp.ge.f32.partialorder %v975, 0.0
      %vm1200 = vcmp.ge.f32.partialorder %v978, 0.0
      %vm1201 = vcmp.ge.f32.partialorder %v983, 0.0
      %vm1202 = vcmp.ge.f32.partialorder %v986, 0.0
      %vm1203 = vcmp.ge.f32.partialorder %v991, 0.0
      %vm1204 = vcmp.ge.f32.partialorder %v994, 0.0
      %vm1205 = vcmp.ge.f32.partialorder %v999, 0.0
      %vm1206 = vcmp.ge.f32.partialorder %v1002, 0.0
      %vm1207 = vcmp.ge.f32.partialorder %v1007, 0.0
      %vm1208 = vcmp.ge.f32.partialorder %v1010, 0.0
      %vm1209 = vcmp.ge.f32.partialorder %v1015, 0.0
      %vm1210 = vcmp.ge.f32.partialorder %v1018, 0.0
      %vm1211 = vcmp.ge.f32.partialorder %v1023, 0.0
      %vm1212 = vcmp.ge.f32.partialorder %v1026, 0.0
      %vm1213 = vcmp.ge.f32.partialorder %v1031, 0.0
      %vm1214 = vcmp.ge.f32.partialorder %v1034, 0.0
      %vm1215 = vcmp.ge.f32.partialorder %v1039, 0.0
      %vm1216 = vcmp.ge.f32.partialorder %v1042, 0.0
      %vm1217 = vcmp.ge.f32.partialorder %v1047, 0.0
      %vm1218 = vcmp.ge.f32.partialorder %v1050, 0.0
      %vm1219 = vcmp.ge.f32.partialorder %v1055, 0.0
      %vm1220 = vcmp.ge.f32.partialorder %v1058, 0.0
      %vm1221 = vcmp.ge.f32.partialorder %v1063, 0.0
      %vm1222 = vcmp.ge.f32.partialorder %v1066, 0.0
      %vm1223 = vcmp.ge.f32.partialorder %v1071, 0.0
      %vm1224 = vcmp.ge.f32.partialorder %v1074, 0.0
      %vm1225 = vcmp.ge.f32.partialorder %v1079, 0.0
      %vm1226 = vcmp.ge.f32.partialorder %v1082, 0.0
      %vm1227 = vcmp.ge.f32.partialorder %v1087, 0.0
      %vm1228 = vcmp.ge.f32.partialorder %v1090, 0.0
      %vm1229 = vcmp.ge.f32.partialorder %v1095, 0.0
      %vm1230 = vcmp.ge.f32.partialorder %v1098, 0.0
      %vm1231 = vcmp.ge.f32.partialorder %v1103, 0.0
      %vm1232 = vcmp.ge.f32.partialorder %v1106, 0.0
      %vm1233 = vcmp.ge.f32.partialorder %v1111, 0.0
      %vm1234 = vcmp.ge.f32.partialorder %v1114, 0.0
      %vm1235 = vcmp.ge.f32.partialorder %v1119, 0.0
      %vm1236 = vcmp.ge.f32.partialorder %v1122, 0.0
      %vm1237 = vcmp.ge.f32.partialorder %v1127, 0.0
      %vm1238 = vcmp.ge.f32.partialorder %v1130, 0.0
      %vm1239 = vcmp.ge.f32.partialorder %v1135, 0.0
      %vm1240 = vcmp.ge.f32.partialorder %v1138, 0.0
      %vm1241 = vcmp.ge.f32.partialorder %v1143, 0.0
      %vm1242 = vcmp.ge.f32.partialorder %v1146, 0.0
      %vm1243 = vcmp.ge.f32.partialorder %v1151, 0.0
      %vm1244 = vcmp.ge.f32.partialorder %v1154, 0.0
      %vm1245 = vcmp.ge.f32.partialorder %v1159, 0.0
      %vm1246 = vcmp.ge.f32.partialorder %v1162, 0.0
      %vm1247 = vcmp.ge.f32.partialorder %v1167, 0.0
      %vm1248 = vcmp.ge.f32.partialorder %v1170, 0.0
      %vm1249 = vcmp.ge.f32.partialorder %v1175, 0.0
      %vm1250 = vcmp.ge.f32.partialorder %v1178, 0.0
      %vm1251 = vcmp.ge.f32.partialorder %v1183, 0.0
      %vm1252 = vcmp.ge.f32.partialorder %v1186, 0.0
      %v1253 = vmul.f32 %v935, 0.2
      %v1254 = vmul.f32 %v938, 0.2
      %v1255 = vmul.f32 %v943, 0.2
      %v1256 = vmul.f32 %v946, 0.2
      %v1257 = vmul.f32 %v951, 0.2
      %v1258 = vmul.f32 %v954, 0.2
      %v1259 = vmul.f32 %v959, 0.2
      %v1260 = vmul.f32 %v962, 0.2
      %v1261 = vmul.f32 %v967, 0.2
      %v1262 = vmul.f32 %v970, 0.2
      %v1263 = vmul.f32 %v975, 0.2
      %v1264 = vmul.f32 %v978, 0.2
      %v1265 = vmul.f32 %v983, 0.2
      %v1266 = vmul.f32 %v986, 0.2
      %v1267 = vmul.f32 %v991, 0.2
      %v1268 = vmul.f32 %v994, 0.2
      %v1269 = vmul.f32 %v999, 0.2
      %v1270 = vmul.f32 %v1002, 0.2
      %v1271 = vmul.f32 %v1007, 0.2
      %v1272 = vmul.f32 %v1010, 0.2
      %v1273 = vmul.f32 %v1015, 0.2
      %v1274 = vmul.f32 %v1018, 0.2
      %v1275 = vmul.f32 %v1023, 0.2
      %v1276 = vmul.f32 %v1026, 0.2
      %v1277 = vmul.f32 %v1031, 0.2
      %v1278 = vmul.f32 %v1034, 0.2
      %v1279 = vmul.f32 %v1039, 0.2
      %v1280 = vmul.f32 %v1042, 0.2
      %v1281 = vmul.f32 %v1047, 0.2
      %v1282 = vmul.f32 %v1050, 0.2
      %v1283 = vmul.f32 %v1055, 0.2
      %v1284 = vmul.f32 %v1058, 0.2
      %v1285 = vmul.f32 %v1063, 0.2
      %v1286 = vmul.f32 %v1066, 0.2
      %v1287 = vmul.f32 %v1071, 0.2
      %v1288 = vmul.f32 %v1074, 0.2
      %v1289 = vmul.f32 %v1079, 0.2
      %v1290 = vmul.f32 %v1082, 0.2
      %v1291 = vmul.f32 %v1087, 0.2
      %v1292 = vmul.f32 %v1090, 0.2
      %v1293 = vmul.f32 %v1095, 0.2
      %v1294 = vmul.f32 %v1098, 0.2
      %v1295 = vmul.f32 %v1103, 0.2
      %v1296 = vmul.f32 %v1106, 0.2
      %v1297 = vmul.f32 %v1111, 0.2
      %v1298 = vmul.f32 %v1114, 0.2
      %v1299 = vmul.f32 %v1119, 0.2
      %v1300 = vmul.f32 %v1122, 0.2
      %v1301 = vmul.f32 %v1127, 0.2
      %v1302 = vmul.f32 %v1130, 0.2
      %v1303 = vmul.f32 %v1135, 0.2
      %v1304 = vmul.f32 %v1138, 0.2
      %v1305 = vmul.f32 %v1143, 0.2
      %v1306 = vmul.f32 %v1146, 0.2
      %v1307 = vmul.f32 %v1151, 0.2
      %v1308 = vmul.f32 %v1154, 0.2
      %v1309 = vmul.f32 %v1159, 0.2
      %v1310 = vmul.f32 %v1162, 0.2
      %v1311 = vmul.f32 %v1167, 0.2
      %v1312 = vmul.f32 %v1170, 0.2
      %v1313 = vmul.f32 %v1175, 0.2
      %v1314 = vmul.f32 %v1178, 0.2
      %v1315 = vmul.f32 %v1183, 0.2
      %v1316 = vmul.f32 %v1186, 0.2
      %v1317 = vsel %vm1189, %v935, %v1253
      %v1318 = vsel %vm1190, %v938, %v1254
      %v1319 = vsel %vm1191, %v943, %v1255
      %v1320 = vsel %vm1192, %v946, %v1256
      %v1321 = vsel %vm1193, %v951, %v1257
      %v1322 = vsel %vm1194, %v954, %v1258
      %v1323 = vsel %vm1195, %v959, %v1259
      %v1324 = vsel %vm1196, %v962, %v1260
      %v1325 = vsel %vm1197, %v967, %v1261
      %v1326 = vsel %vm1198, %v970, %v1262
      %v1327 = vsel %vm1199, %v975, %v1263
      %v1328 = vsel %vm1200, %v978, %v1264
      %v1329 = vsel %vm1201, %v983, %v1265
      %v1330 = vsel %vm1202, %v986, %v1266
      %v1331 = vsel %vm1203, %v991, %v1267
      %v1332 = vsel %vm1204, %v994, %v1268
      %v1333 = vsel %vm1205, %v999, %v1269
      %v1334 = vsel %vm1206, %v1002, %v1270
      %v1335 = vsel %vm1207, %v1007, %v1271
      %v1336 = vsel %vm1208, %v1010, %v1272
      %v1337 = vsel %vm1209, %v1015, %v1273
      %v1338 = vsel %vm1210, %v1018, %v1274
      %v1339 = vsel %vm1211, %v1023, %v1275
      %v1340 = vsel %vm1212, %v1026, %v1276
      %v1341 = vsel %vm1213, %v1031, %v1277
      %v1342 = vsel %vm1214, %v1034, %v1278
      %v1343 = vsel %vm1215, %v1039, %v1279
      %v1344 = vsel %vm1216, %v1042, %v1280
      %v1345 = vsel %vm1217, %v1047, %v1281
      %v1346 = vsel %vm1218, %v1050, %v1282
      %v1347 = vsel %vm1219, %v1055, %v1283
      %v1348 = vsel %vm1220, %v1058, %v1284
      %v1349 = vsel %vm1221, %v1063, %v1285
      %v1350 = vsel %vm1222, %v1066, %v1286
      %v1351 = vsel %vm1223, %v1071, %v1287
      %v1352 = vsel %vm1224, %v1074, %v1288
      %v1353 = vsel %vm1225, %v1079, %v1289
      %v1354 = vsel %vm1226, %v1082, %v1290
      %v1355 = vsel %vm1227, %v1087, %v1291
      %v1356 = vsel %vm1228, %v1090, %v1292
      %v1357 = vsel %vm1229, %v1095, %v1293
      %v1358 = vsel %vm1230, %v1098, %v1294
      %v1359 = vsel %vm1231, %v1103, %v1295
      %v1360 = vsel %vm1232, %v1106, %v1296
      %v1361 = vsel %vm1233, %v1111, %v1297
      %v1362 = vsel %vm1234, %v1114, %v1298
      %v1363 = vsel %vm1235, %v1119, %v1299
      %v1364 = vsel %vm1236, %v1122, %v1300
      %v1365 = vsel %vm1237, %v1127, %v1301
      %v1366 = vsel %vm1238, %v1130, %v1302
      %v1367 = vsel %vm1239, %v1135, %v1303
      %v1368 = vsel %vm1240, %v1138, %v1304
      %v1369 = vsel %vm1241, %v1143, %v1305
      %v1370 = vsel %vm1242, %v1146, %v1306
      %v1371 = vsel %vm1243, %v1151, %v1307
      %v1372 = vsel %vm1244, %v1154, %v1308
      %v1373 = vsel %vm1245, %v1159, %v1309
      %v1374 = vsel %vm1246, %v1162, %v1310
      %v1375 = vsel %vm1247, %v1167, %v1311
      %v1376 = vsel %vm1248, %v1170, %v1312
      %v1377 = vsel %vm1249, %v1175, %v1313
      %v1378 = vsel %vm1250, %v1178, %v1314
      %v1379 = vsel %vm1251, %v1183, %v1315
      %v1380 = vsel %vm1252, %v1186, %v1316
      %v1381 = vpack.c.bf16 %v1318, %v1317
      %v1382 = vpack.c.bf16 %v1320, %v1319
      %v1383 = vpack.c.bf16 %v1322, %v1321
      %v1384 = vpack.c.bf16 %v1324, %v1323
      %v1385 = vpack.c.bf16 %v1326, %v1325
      %v1386 = vpack.c.bf16 %v1328, %v1327
      %v1387 = vpack.c.bf16 %v1330, %v1329
      %v1388 = vpack.c.bf16 %v1332, %v1331
      %v1389 = vpack.c.bf16 %v1334, %v1333
      %v1390 = vpack.c.bf16 %v1336, %v1335
      %v1391 = vpack.c.bf16 %v1338, %v1337
      %v1392 = vpack.c.bf16 %v1340, %v1339
      %v1393 = vpack.c.bf16 %v1342, %v1341
      %v1394 = vpack.c.bf16 %v1344, %v1343
      %v1395 = vpack.c.bf16 %v1346, %v1345
      %v1396 = vpack.c.bf16 %v1348, %v1347
      %v1397 = vpack.c.bf16 %v1350, %v1349
      %v1398 = vpack.c.bf16 %v1352, %v1351
      %v1399 = vpack.c.bf16 %v1354, %v1353
      %v1400 = vpack.c.bf16 %v1356, %v1355
      %v1401 = vpack.c.bf16 %v1358, %v1357
      %v1402 = vpack.c.bf16 %v1360, %v1359
      %v1403 = vpack.c.bf16 %v1362, %v1361
      %v1404 = vpack.c.bf16 %v1364, %v1363
      %v1405 = vpack.c.bf16 %v1366, %v1365
      %v1406 = vpack.c.bf16 %v1368, %v1367
      %v1407 = vpack.c.bf16 %v1370, %v1369
      %v1408 = vpack.c.bf16 %v1372, %v1371
      %v1409 = vpack.c.bf16 %v1374, %v1373
      %v1410 = vpack.c.bf16 %v1376, %v1375
      %v1411 = vpack.c.bf16 %v1378, %v1377
      %v1412 = vpack.c.bf16 %v1380, %v1379
      %v1415 = vsel %vm803, %v1381, 4286644096
      %v1418 = vsel %vm803, %v1385, 4286644096
      %v1420 = vmax.bf16 %v1415, %v1418
      %v1422 = vsel %vm803, %v1389, 4286644096
      %v1424 = vmax.bf16 %v1420, %v1422
      %v1426 = vsel %vm803, %v1393, 4286644096
      %v1428 = vmax.bf16 %v1424, %v1426
      %v1430 = vsel %vm803, %v1397, 4286644096
      %v1432 = vmax.bf16 %v1428, %v1430
      %v1434 = vsel %vm803, %v1401, 4286644096
      %v1436 = vmax.bf16 %v1432, %v1434
      %v1438 = vsel %vm803, %v1405, 4286644096
      %v1440 = vmax.bf16 %v1436, %v1438
      %v1442 = vsel %vm803, %v1409, 4286644096
      %v1444 = vmax.bf16 %v1440, %v1442
      %v1446 = vsel %vm803, %v1382, 4286644096
      %v1449 = vsel %vm803, %v1386, 4286644096
      %v1451 = vmax.bf16 %v1446, %v1449
      %v1453 = vsel %vm803, %v1390, 4286644096
      %v1455 = vmax.bf16 %v1451, %v1453
      %v1457 = vsel %vm803, %v1394, 4286644096
      %v1459 = vmax.bf16 %v1455, %v1457
      %v1461 = vsel %vm803, %v1398, 4286644096
      %v1463 = vmax.bf16 %v1459, %v1461
      %v1465 = vsel %vm803, %v1402, 4286644096
      %v1467 = vmax.bf16 %v1463, %v1465
      %v1469 = vsel %vm803, %v1406, 4286644096
      %v1471 = vmax.bf16 %v1467, %v1469
      %v1473 = vsel %vm803, %v1410, 4286644096
      %v1475 = vmax.bf16 %v1471, %v1473
      %v1477 = vsel %vm803, %v1383, 4286644096
      %v1480 = vsel %vm803, %v1387, 4286644096
      %v1482 = vmax.bf16 %v1477, %v1480
      %v1484 = vsel %vm803, %v1391, 4286644096
      %v1486 = vmax.bf16 %v1482, %v1484
      %v1488 = vsel %vm803, %v1395, 4286644096
      %v1490 = vmax.bf16 %v1486, %v1488
      %v1492 = vsel %vm803, %v1399, 4286644096
      %v1494 = vmax.bf16 %v1490, %v1492
      %v1496 = vsel %vm803, %v1403, 4286644096
      %v1498 = vmax.bf16 %v1494, %v1496
      %v1500 = vsel %vm803, %v1407, 4286644096
      %v1502 = vmax.bf16 %v1498, %v1500
      %v1504 = vsel %vm803, %v1411, 4286644096
      %v1506 = vmax.bf16 %v1502, %v1504
      %v1508 = vsel %vm803, %v1384, 4286644096
      %v1511 = vsel %vm803, %v1388, 4286644096
      %v1513 = vmax.bf16 %v1508, %v1511
      %v1515 = vsel %vm803, %v1392, 4286644096
      %v1517 = vmax.bf16 %v1513, %v1515
      %v1519 = vsel %vm803, %v1396, 4286644096
      %v1521 = vmax.bf16 %v1517, %v1519
      %v1523 = vsel %vm803, %v1400, 4286644096
      %v1525 = vmax.bf16 %v1521, %v1523
      %v1527 = vsel %vm803, %v1404, 4286644096
      %v1529 = vmax.bf16 %v1525, %v1527
      %v1531 = vsel %vm803, %v1408, 4286644096
      %v1533 = vmax.bf16 %v1529, %v1531
      %v1535 = vsel %vm803, %v1412, 4286644096
      %v1537 = vmax.bf16 %v1533, %v1535
      %v1542 = vunpack.c.l.b16 %v1444
      %v1543 = vunpack.c.h.b16 %v1444
      %v1544 = vunpack.c.l.b16 %v1475
      %v1545 = vunpack.c.h.b16 %v1475
      %v1546 = vunpack.c.l.b16 %v1506
      %v1547 = vunpack.c.h.b16 %v1506
      %v1548 = vunpack.c.l.b16 %v1537
      %v1549 = vunpack.c.h.b16 %v1537
      %v1550 = vpack.c.b16 %v1542, %v1542
      %v1551 = vpack.c.b16 %v1543, %v1543
      %v1552 = vpack.c.b16 %v1544, %v1544
      %v1553 = vpack.c.b16 %v1545, %v1545
      %v1554 = vpack.c.b16 %v1546, %v1546
      %v1555 = vpack.c.b16 %v1547, %v1547
      %v1556 = vpack.c.b16 %v1548, %v1548
      %v1557 = vpack.c.b16 %v1549, %v1549
      %vm1566 = vcmask 519168
      %1567 = vst.msk [vmem:[%s271] sm:$0xf] %vm1566, %v1550
      %1568 = vst.msk [vmem:[%s271 + $0x4] sm:$0xf] %vm1566, %v1551
      %1569 = vst.msk [vmem:[%s271 + $0x8] sm:$0xf] %vm1566, %v1552
      %1570 = vst.msk [vmem:[%s271 + $0xc] sm:$0xf] %vm1566, %v1553
      %1571 = vst.msk [vmem:[%s271 + $0x10] sm:$0xf] %vm1566, %v1554
      %1572 = vst.msk [vmem:[%s271 + $0x14] sm:$0xf] %vm1566, %v1555
      %1573 = vst.msk [vmem:[%s271 + $0x18] sm:$0xf] %vm1566, %v1556
      %1574 = vst.msk [vmem:[%s271 + $0x1c] sm:$0xf] %vm1566, %v1557
      %s1575 = smul.u32 8, %s20
      %p1576 = scmp.lt.s32.totalorder %s19, 1
      %s1577 = scalar_select %p1576, %s19, 1
      %p1578 = scmp.lt.s32.totalorder %s1575, 7
      %s1579 = scalar_select %p1578, %s1575, 7
      %s1580 = smul.addr %s1577, 8
      %s1581 = sadd.s32 %s1579, %s1580
      %s1582 = smul.addr %s1581, 4
      %s1583 = scalar_lea.vmem %s4, %s1582
      // Predicated region
      $region37: #{dgcnn_sem_seg_forward.9} parent=35 // pred_check
        %p1584 = pneg %p145
      $region38: #{dgcnn_sem_seg_forward.9} parent=35 // pred_check_branch
        %1586 = sbr.rel (%p1584) target = $region40
      $region39: #{dgcnn_sem_seg_forward.9} parent=35 // pred_region
        %s1587 = smul.u32 8, %s20
      $region40: #{dgcnn_sem_seg_forward.9} parent=35 // pred_fallthru
        _
    $region36: #{dgcnn_sem_seg_forward.9} parent=5 // pred_fallthru
      _
    %p1588 = scmp.le.s32.totalorder 2, %s10
    // Predicated region
    $region41: #{dgcnn_sem_seg_forward.9} parent=5 // pred_check
      %p1589 = pneg %p1588
    $region42: #{dgcnn_sem_seg_forward.9} parent=5 // pred_check_branch
      %1591 = sbr.rel (%p1589) target = $region44
    $region43: #{dgcnn_sem_seg_forward.9} parent=5 // pred_region
      %s1592 = ssub.s32 %s10, 2
      // Predicated region
      $region45: #{dgcnn_sem_seg_forward.9} parent=43 // pred_check
        %p1593 = pneg %p151
      $region46: #{dgcnn_sem_seg_forward.9} parent=43 // pred_check_branch
        %1595 = sbr.rel (%p1593) target = $region48
      $region47: #{dgcnn_sem_seg_forward.9} parent=43 // pred_region
        %s1596 = smul.u32 8, %s22
        %p1597 = scmp.lt.s32.totalorder %s21, 1
        %s1598 = scalar_select %p1597, %s21, 1
        %p1599 = scmp.lt.s32.totalorder %s1596, 7
        %s1600 = scalar_select %p1599, %s1596, 7
        %s1601 = smul.addr %s1598, 8
        %s1602 = sadd.s32 %s1600, %s1601
        %s1603 = smul.addr %s1602, 4
        %s1604 = scalar_lea.vmem %s4, %s1603
      $region48: #{dgcnn_sem_seg_forward.9} parent=43 // pred_fallthru
        _
    $region44: #{dgcnn_sem_seg_forward.9} parent=5 // pred_fallthru
      _
  $region6: #{dgcnn_sem_seg_forward.9} parent=0 // loop_footer
    %s14 = sadd.s32 1, %s10
  $region7: #{dgcnn_sem_seg_forward.9} parent=0 // loop_footer_branch
    %9 = sbr.rel target = $region3
  $region8: #{dgcnn_sem_seg_forward.9} parent=0 // loop_exit
    _

// kernel: dgcnn_sem_seg_forward.10
$region0: #{dgcnn_sem_seg_forward.10}
  #allocation0 [shape = 'u32[]', space=smem, size = 0x4, offset = 0x4, fixed_abs, tag = 'smem constant byte address 0x4 - core index']
  #allocation1 [shape = 'u32[144,128]{1,0:T(1,128)}', space=vmem, size = 0x12000, scoped, tag = 'internal scratch']
  %s0 = inlined_call_operand.vmem [shape: bf16[2,64,64], index: 0, kind: input, shape index: {}]
  %s1 = inlined_call_operand.vmem [shape: bf16[64,64], index: 1, kind: input, shape index: {}]
  %s2 = inlined_call_operand.vmem [shape: bf16[64,64], index: 2, kind: input, shape index: {}]
  %s3 = inlined_call_operand.vmem [shape: f32[1,64], index: 3, kind: input, shape index: {}]
  %s4 = inlined_call_operand.vmem [shape: bf16[2,64,64], index: 4, kind: output, shape index: {0}]
  %s5 = inlined_call_operand.vmem [shape: bf16[2,64,64], index: 5, kind: output, shape index: {1}]
  %6 = xla_tuple %s4, %s5
  %s7 = sld [smem:[#allocation0]]
  $region57: #{dgcnn_sem_seg_forward.10} parent=0
    _
  %s9 = ssub.s32 1, %s7
  %s10 = scalar_select 0, %s9, %s7
  loop: start=0, step=1, limit=4
  $region2: #{dgcnn_sem_seg_forward.10} parent=0 // loop_pre_header
    _
  $region3: #{dgcnn_sem_seg_forward.10} parent=0 // loop_header
    %s12 = sphi 0, %s16
    %p13 = scmp.ge.s32.totalorder %s12, 4
    %s19 = sphi 0, %s31
    %s20 = sphi 0, %s27
    %s21 = sphi 0, %s19
    %s22 = sphi 0, %s20
    %s23 = sphi 0, %s21
    %s24 = sphi 0, %s22
    %s36 = sphi 0, %s38
    %s39 = sphi 0, %s36
    %s40 = sphi 0, %s39
    %s56 = sphi 0, %s40
    %s60 = sphi 0, %s60
    %s62 = sphi 0, %s60
    %s63 = sphi 0, %s62
    %s77 = sphi 0, %s63
    %s81 = sphi 0, %s81
    %s83 = sphi 0, %s81
    %s84 = sphi 0, %s83
    %s98 = sphi 0, %s84
    %s102 = sphi 0, %s102
    %s104 = sphi 0, %s102
    %s105 = sphi 0, %s104
    %s119 = sphi 0, %s105
    %s127 = sphi 0, %s129
    %s130 = sphi 0, %s127
    %s131 = sphi 0, %s130
    %s147 = sphi 0, %s131
    %s155 = sphi 0, %s157
    %s158 = sphi 0, %s155
    %s159 = sphi 0, %s158
    %s175 = sphi 0, %s159
  $region4: #{dgcnn_sem_seg_forward.10} parent=0 // loop_header_branch
    %15 = sbr.rel (%p13) target = $region8
  $region5: #{dgcnn_sem_seg_forward.10} parent=0 // loop_body
    %s17 = ssub.s32 %s12, 1
    %s18 = ssub.s32 %s12, 2
    %s25 = sadd.s32 1, %s20
    %p26 = scmp.ge.s32.totalorder %s25, 1
    %s27 = scalar_select %p26, 0, %s25
    %s28 = sadd.s32 1, %s19
    %s29 = scalar_select %p26, %s28, %s19
    %p30 = scmp.ge.s32.totalorder %s29, 2
    %s31 = scalar_select %p30, 0, %s29
    %s32 = ssub.s32 %s19, %s31
    %s33 = ssub.s32 %s20, %s27
    %s34 = sor.u32 %s32, %s33
    %p35 = scmp.eq.s32.totalorder %s34, 0
    %s37 = sadd.s32 %s36, 1
    %s38 = scalar_select %p35, %s36, %s37
    %p41 = pneg %p35
    %p42 = scmp.eq.s32.totalorder %s12, 1
    %p43 = por %p41, %p42
    %p44 = scmp.ne.s32.totalorder %s36, %s39
    %p45 = scmp.eq.s32.totalorder %s12, 0
    %p46 = por %p44, %p45
    %p47 = scmp.ne.s32.totalorder %s36, %s39
    %p48 = scmp.eq.s32.totalorder %s17, 1
    %p49 = por %p47, %p48
    %p50 = scmp.ne.s32.totalorder %s39, %s40
    %p51 = scmp.eq.s32.totalorder %s17, 0
    %p52 = por %p50, %p51
    %p53 = scmp.ne.s32.totalorder %s39, %s40
    %p54 = scmp.eq.s32.totalorder %s18, 1
    %p55 = por %p53, %p54
    %p57 = scmp.ne.s32.totalorder %s40, %s56
    %p58 = scmp.eq.s32.totalorder %s18, 0
    %p59 = por %p57, %p58
    %s61 = sadd.s32 %s60, 1
    %p64 = scmp.eq.s32.totalorder %s12, 1
    %p65 = scmp.ne.s32.totalorder %s60, %s62
    %p66 = scmp.eq.s32.totalorder %s12, 0
    %p67 = por %p65, %p66
    %p68 = scmp.ne.s32.totalorder %s60, %s62
    %p69 = scmp.eq.s32.totalorder %s17, 1
    %p70 = por %p68, %p69
    %p71 = scmp.ne.s32.totalorder %s62, %s63
    %p72 = scmp.eq.s32.totalorder %s17, 0
    %p73 = por %p71, %p72
    %p74 = scmp.ne.s32.totalorder %s62, %s63
    %p75 = scmp.eq.s32.totalorder %s18, 1
    %p76 = por %p74, %p75
    %p78 = scmp.ne.s32.totalorder %s63, %s77
    %p79 = scmp.eq.s32.totalorder %s18, 0
    %p80 = por %p78, %p79
    %s82 = sadd.s32 %s81, 1
    %p85 = scmp.eq.s32.totalorder %s12, 1
    %p86 = scmp.ne.s32.totalorder %s81, %s83
    %p87 = scmp.eq.s32.totalorder %s12, 0
    %p88 = por %p86, %p87
    %p89 = scmp.ne.s32.totalorder %s81, %s83
    %p90 = scmp.eq.s32.totalorder %s17, 1
    %p91 = por %p89, %p90
    %p92 = scmp.ne.s32.totalorder %s83, %s84
    %p93 = scmp.eq.s32.totalorder %s17, 0
    %p94 = por %p92, %p93
    %p95 = scmp.ne.s32.totalorder %s83, %s84
    %p96 = scmp.eq.s32.totalorder %s18, 1
    %p97 = por %p95, %p96
    %p99 = scmp.ne.s32.totalorder %s84, %s98
    %p100 = scmp.eq.s32.totalorder %s18, 0
    %p101 = por %p99, %p100
    %s103 = sadd.s32 %s102, 1
    %p106 = scmp.eq.s32.totalorder %s12, 1
    %p107 = scmp.ne.s32.totalorder %s102, %s104
    %p108 = scmp.eq.s32.totalorder %s12, 0
    %p109 = por %p107, %p108
    %p110 = scmp.ne.s32.totalorder %s102, %s104
    %p111 = scmp.eq.s32.totalorder %s17, 1
    %p112 = por %p110, %p111
    %p113 = scmp.ne.s32.totalorder %s104, %s105
    %p114 = scmp.eq.s32.totalorder %s17, 0
    %p115 = por %p113, %p114
    %p116 = scmp.ne.s32.totalorder %s104, %s105
    %p117 = scmp.eq.s32.totalorder %s18, 1
    %p118 = por %p116, %p117
    %p120 = scmp.ne.s32.totalorder %s105, %s119
    %p121 = scmp.eq.s32.totalorder %s18, 0
    %p122 = por %p120, %p121
    %s123 = ssub.s32 %s19, %s31
    %s124 = ssub.s32 %s20, %s27
    %s125 = sor.u32 %s123, %s124
    %p126 = scmp.eq.s32.totalorder %s125, 0
    %s128 = sadd.s32 %s127, 1
    %s129 = scalar_select %p126, %s127, %s128
    %p132 = pneg %p126
    %p133 = scmp.eq.s32.totalorder %s12, 1
    %p134 = por %p132, %p133
    %p135 = scmp.ne.s32.totalorder %s127, %s130
    %p136 = scmp.eq.s32.totalorder %s12, 0
    %p137 = por %p135, %p136
    %p138 = scmp.ne.s32.totalorder %s127, %s130
    %p139 = scmp.eq.s32.totalorder %s17, 1
    %p140 = por %p138, %p139
    %p141 = scmp.ne.s32.totalorder %s130, %s131
    %p142 = scmp.eq.s32.totalorder %s17, 0
    %p143 = por %p141, %p142
    %p144 = scmp.ne.s32.totalorder %s130, %s131
    %p145 = scmp.eq.s32.totalorder %s18, 1
    %p146 = por %p144, %p145
    %p148 = scmp.ne.s32.totalorder %s131, %s147
    %p149 = scmp.eq.s32.totalorder %s18, 0
    %p150 = por %p148, %p149
    %s151 = ssub.s32 %s19, %s31
    %s152 = ssub.s32 %s20, %s27
    %s153 = sor.u32 %s151, %s152
    %p154 = scmp.eq.s32.totalorder %s153, 0
    %s156 = sadd.s32 %s155, 1
    %s157 = scalar_select %p154, %s155, %s156
    %p160 = pneg %p154
    %p161 = scmp.eq.s32.totalorder %s12, 1
    %p162 = por %p160, %p161
    %p163 = scmp.ne.s32.totalorder %s155, %s158
    %p164 = scmp.eq.s32.totalorder %s12, 0
    %p165 = por %p163, %p164
    %p166 = scmp.ne.s32.totalorder %s155, %s158
    %p167 = scmp.eq.s32.totalorder %s17, 1
    %p168 = por %p166, %p167
    %p169 = scmp.ne.s32.totalorder %s158, %s159
    %p170 = scmp.eq.s32.totalorder %s17, 0
    %p171 = por %p169, %p170
    %p172 = scmp.ne.s32.totalorder %s158, %s159
    %p173 = scmp.eq.s32.totalorder %s18, 1
    %p174 = por %p172, %p173
    %p176 = scmp.ne.s32.totalorder %s159, %s175
    %p177 = scmp.eq.s32.totalorder %s18, 0
    %p178 = por %p176, %p177
    %p179 = scmp.le.s32.totalorder 1, %s12
    %p180 = scmp.lt.s32.totalorder %s12, 3
    %p181 = pnand %p179, %p180
    %p182 = pneg %p181
    // Predicated region
    $region9: #{dgcnn_sem_seg_forward.10} parent=5 // pred_check
      _
    $region10: #{dgcnn_sem_seg_forward.10} parent=5 // pred_check_branch
      %184 = sbr.rel (%p181) target = $region12
    $region11: #{dgcnn_sem_seg_forward.10} parent=5 // pred_region
      %s185 = ssub.s32 %s12, 1
      // Predicated region
      $region13: #{dgcnn_sem_seg_forward.10} parent=11 // pred_check
        %p186 = pneg %p73
      $region14: #{dgcnn_sem_seg_forward.10} parent=11 // pred_check_branch
        %188 = sbr.rel (%p186) target = $region16
      $region15: #{dgcnn_sem_seg_forward.10} parent=11 // pred_region
        _
      $region16: #{dgcnn_sem_seg_forward.10} parent=11 // pred_fallthru
        _
      // Predicated region
      $region17: #{dgcnn_sem_seg_forward.10} parent=11 // pred_check
        %p189 = pneg %p94
      $region18: #{dgcnn_sem_seg_forward.10} parent=11 // pred_check_branch
        %191 = sbr.rel (%p189) target = $region20
      $region19: #{dgcnn_sem_seg_forward.10} parent=11 // pred_region
        _
      $region20: #{dgcnn_sem_seg_forward.10} parent=11 // pred_fallthru
        _
      // Predicated region
      $region21: #{dgcnn_sem_seg_forward.10} parent=11 // pred_check
        %p192 = pneg %p115
      $region22: #{dgcnn_sem_seg_forward.10} parent=11 // pred_check_branch
        %194 = sbr.rel (%p192) target = $region24
      $region23: #{dgcnn_sem_seg_forward.10} parent=11 // pred_region
        _
      $region24: #{dgcnn_sem_seg_forward.10} parent=11 // pred_fallthru
        _
    $region12: #{dgcnn_sem_seg_forward.10} parent=5 // pred_fallthru
      _
    %p195 = scmp.lt.s32.totalorder %s12, 2
    // Predicated region
    $region25: #{dgcnn_sem_seg_forward.10} parent=5 // pred_check
      %p196 = pneg %p195
    $region26: #{dgcnn_sem_seg_forward.10} parent=5 // pred_check_branch
      %198 = sbr.rel (%p196) target = $region28
    $region27: #{dgcnn_sem_seg_forward.10} parent=5 // pred_region
      // Predicated region
      $region29: #{dgcnn_sem_seg_forward.10} parent=27 // pred_check
        %p199 = pneg %p46
      $region30: #{dgcnn_sem_seg_forward.10} parent=27 // pred_check_branch
        %201 = sbr.rel (%p199) target = $region32
      $region31: #{dgcnn_sem_seg_forward.10} parent=27 // pred_region
        %s202 = smul.u32 8, %s20
        %p203 = scmp.lt.s32.totalorder %s19, 1
        %s204 = scalar_select %p203, %s19, 1
        %p205 = scmp.lt.s32.totalorder %s202, 7
        %s206 = scalar_select %p205, %s202, 7
        %s207 = smul.addr %s204, 8
        %s208 = sadd.s32 %s206, %s207
        %s209 = smul.addr %s208, 4
        %s210 = scalar_lea.vmem %s0, %s209
        %s211 = smul.u32 8, %s20
      $region32: #{dgcnn_sem_seg_forward.10} parent=27 // pred_fallthru
        _
    $region28: #{dgcnn_sem_seg_forward.10} parent=5 // pred_fallthru
      _
    %p212 = scmp.le.s32.totalorder 1, %s12
    %p213 = scmp.lt.s32.totalorder %s12, 3
    %p214 = pnand %p212, %p213
    %p215 = pneg %p214
    // Predicated region
    $region33: #{dgcnn_sem_seg_forward.10} parent=5 // pred_check
      _
    $region34: #{dgcnn_sem_seg_forward.10} parent=5 // pred_check_branch
      %217 = sbr.rel (%p214) target = $region36
    $region35: #{dgcnn_sem_seg_forward.10} parent=5 // pred_region
      %s218 = ssub.s32 %s12, 1
      %s219 = smul.u32 8, %s22
      %p220 = scmp.lt.s32.totalorder %s21, 1
      %s221 = scalar_select %p220, %s21, 1
      %p222 = scmp.lt.s32.totalorder %s219, 7
      %s223 = scalar_select %p222, %s219, 7
      %s224 = smul.addr %s221, 8
      %s225 = sadd.s32 %s223, %s224
      %s226 = smul.addr %s225, 4
      %s227 = scalar_lea.vmem %s0, %s226
      %p228 = pneg %p52
      %p229 = pneg %p49
      %p230 = pneg %p73
      %p231 = pneg %p70
      %p232 = pneg %p94
      %p233 = pneg %p91
      %p234 = pneg %p115
      %p235 = pneg %p112
      %p236 = pneg %p143
      %p237 = pneg %p140
      %s238 = smul.u32 8, %s22
      %p239 = scmp.lt.s32.totalorder %s21, 1
      %s240 = scalar_select %p239, %s21, 1
      %p241 = scmp.lt.s32.totalorder %s238, 7
      %s242 = scalar_select %p241, %s238, 7
      %s243 = smul.addr %s240, 8
      %s244 = sadd.s32 %s242, %s243
      %s245 = smul.addr %s244, 4
      %s246 = scalar_lea.vmem %s4, %s245
      %p247 = pneg %p171
      %p248 = pneg %p168
      %s249 = smul.u32 8, %s22
      %p250 = scmp.lt.s32.totalorder %s21, 1
      %s251 = scalar_select %p250, %s21, 1
      %p252 = scmp.lt.s32.totalorder %s249, 7
      %s253 = scalar_select %p252, %s249, 7
      %s254 = smul.addr %s251, 8
      %s255 = sadd.s32 %s253, %s254
      %s256 = smul.addr %s255, 4
      %s257 = scalar_lea.vmem %s5, %s256
      %s258 = smul.u32 8, %s22
      %p259 = scmp.lt.s32.totalorder %s21, 1
      %s260 = scalar_select %p259, %s21, 1
      %p261 = scmp.lt.s32.totalorder %s258, 7
      %s262 = scalar_select %p261, %s258, 7
      %s263 = smul.addr %s260, 8
      %s264 = sadd.s32 %s262, %s263
      %s265 = smul.addr %s264, 4
      %s266 = scalar_lea.vmem %s0, %s265
      %s267 = smul.u32 8, %s22
      %s268 = smul.u32 8, %s22
      %p269 = scmp.lt.s32.totalorder %s21, 1
      %s270 = scalar_select %p269, %s21, 1
      %p271 = scmp.lt.s32.totalorder %s268, 7
      %s272 = scalar_select %p271, %s268, 7
      %s273 = smul.addr %s270, 8
      %s274 = sadd.s32 %s272, %s273
      %s275 = smul.addr %s274, 4
      %s276 = scalar_lea.vmem %s4, %s275
      %s277 = smul.u32 8, %s22
      %s278 = smul.u32 8, %s22
      %p279 = scmp.lt.s32.totalorder %s21, 1
      %s280 = scalar_select %p279, %s21, 1
      %p281 = scmp.lt.s32.totalorder %s278, 7
      %s282 = scalar_select %p281, %s278, 7
      %s283 = smul.addr %s280, 8
      %s284 = sadd.s32 %s282, %s283
      %s285 = smul.addr %s284, 4
      %s286 = scalar_lea.vmem %s5, %s285
      %s287 = smul.u32 8, %s22
      %v289 = vld [vmem:[%s266] sm:$0xf]
      %v290 = vld [vmem:[%s266 + $0x4] sm:$0xf]
      %v291 = vld [vmem:[%s266 + $0x8] sm:$0xf]
      %v292 = vld [vmem:[%s266 + $0xc] sm:$0xf]
      %v293 = vld [vmem:[%s266 + $0x10] sm:$0xf]
      %v294 = vld [vmem:[%s266 + $0x14] sm:$0xf]
      %v295 = vld [vmem:[%s266 + $0x18] sm:$0xf]
      %v296 = vld [vmem:[%s266 + $0x1c] sm:$0xf]
      %v297 = vld [vmem:[%s1] sm:$0xf]
      %v298 = vld [vmem:[%s1 + $0x4] sm:$0xf]
      %v299 = vld [vmem:[%s1 + $0x8] sm:$0xf]
      %v300 = vld [vmem:[%s1 + $0xc] sm:$0xf]
      %v301 = vld [vmem:[%s1 + $0x10] sm:$0xf]
      %v302 = vld [vmem:[%s1 + $0x14] sm:$0xf]
      %v303 = vld [vmem:[%s1 + $0x18] sm:$0xf]
      %v304 = vld [vmem:[%s1 + $0x1c] sm:$0xf]
      %v313 = vunpack.c.l.b16 %v289
      %v314 = vunpack.c.l.b16 %v290
      %v315 = vunpack.c.l.b16 %v291
      %v316 = vunpack.c.l.b16 %v292
      %v317 = vunpack.c.l.b16 %v293
      %v318 = vunpack.c.l.b16 %v294
      %v319 = vunpack.c.l.b16 %v295
      %v320 = vunpack.c.l.b16 %v296
      %v321 = vpack.c.b16 %v314, %v313
      %v322 = vpack.c.b16 %v316, %v315
      %v323 = vpack.c.b16 %v318, %v317
      %v324 = vpack.c.b16 %v320, %v319
      %v333 = vunpack.c.l.b16 %v297
      %v334 = vunpack.c.l.b16 %v298
      %v335 = vunpack.c.l.b16 %v299
      %v336 = vunpack.c.l.b16 %v300
      %v337 = vunpack.c.l.b16 %v301
      %v338 = vunpack.c.l.b16 %v302
      %v339 = vunpack.c.l.b16 %v303
      %v340 = vunpack.c.l.b16 %v304
      %v341 = vpack.c.b16 %v334, %v333
      %v342 = vpack.c.b16 %v336, %v335
      %v343 = vpack.c.b16 %v338, %v337
      %v344 = vpack.c.b16 %v340, %v339
      %vm349 = vcmask 523264
      %v351 = vsel %vm349, %v321, 0
      %v354 = vsel %vm349, %v322, 0
      %v357 = vsel %vm349, %v323, 0
      %v360 = vsel %vm349, %v324, 0
      %362 = vmatprep.subr.bf16.mxu0 0
      %363 = vmatpush1.bf16.msra.mxu0 %v341
      %364 = vmatprep.subr.bf16.mxu0 0
      %365 = vmatpush1.bf16.msra.mxu0 %v342
      %366 = vmatprep.subr.bf16.mxu0 0
      %367 = vmatpush1.bf16.msra.mxu0 %v343
      %368 = vmatprep.subr.bf16.mxu0 0
      %369 = vmatpush1.bf16.msra.mxu0 %v344
      %370 = vmatprep.subr.bf16.mxu0 0
      %371 = vmatpush1.bf16.msra.mxu0 0
      %372 = vmatprep.subr.bf16.mxu0 0
      %373 = vmatpush1.bf16.msra.mxu0 0
      %374 = vmatprep.subr.bf16.mxu0 0
      %375 = vmatpush1.bf16.msra.mxu0 0
      %376 = vmatprep.subr.bf16.mxu0 0
      %377 = vmatpush1.bf16.msra.mxu0 0
      %378 = vmatprep.subr.bf16.mxu0 0
      %379 = vmatpush1.bf16.msra.mxu0 0
      %380 = vmatprep.subr.bf16.mxu0 0
      %381 = vmatpush1.bf16.msra.mxu0 0
      %382 = vmatprep.subr.bf16.mxu0 0
      %383 = vmatpush1.bf16.msra.mxu0 0
      %384 = vmatprep.subr.bf16.mxu0 0
      %385 = vmatpush1.bf16.msra.mxu0 0
      %386 = vmatprep.subr.bf16.mxu0 0
      %387 = vmatpush1.bf16.msra.mxu0 0
      %388 = vmatprep.subr.bf16.mxu0 0
      %389 = vmatpush1.bf16.msra.mxu0 0
      %390 = vmatprep.subr.bf16.mxu0 0
      %391 = vmatpush1.bf16.msra.mxu0 0
      %392 = vmatprep.subr.bf16.mxu0 0
      %393 = vmatpush1.bf16.msra.mxu0 0
      %394 = vmatprep.mubr.bf16.mxu0 0
      %395 = vmatmul.mubr.bf16.gmra.mrb[0].mxu0 %v351
      %v396 = vpop.f32.mrb[0].mxu0
      %v397 = vadd.f32 0.0, %v396
      %v398 = vpop.f32.mrb[0].mxu0
      %v399 = vpop.f32.mrb[0].mxu0
      %v400 = vadd.f32 0.0, %v399
      %v401 = vpop.f32.mrb[0].mxu0
      %402 = vmatprep.mubr.bf16.mxu0 0
      %403 = vmatmul.mubr.bf16.gmra.mrb[0].mxu0 %v354
      %v404 = vpop.f32.mrb[0].mxu0
      %v405 = vadd.f32 0.0, %v404
      %v406 = vpop.f32.mrb[0].mxu0
      %v407 = vpop.f32.mrb[0].mxu0
      %v408 = vadd.f32 0.0, %v407
      %v409 = vpop.f32.mrb[0].mxu0
      %410 = vmatprep.mubr.bf16.mxu0 0
      %411 = vmatmul.mubr.bf16.gmra.mrb[0].mxu0 %v357
      %v412 = vpop.f32.mrb[0].mxu0
      %v413 = vadd.f32 0.0, %v412
      %v414 = vpop.f32.mrb[0].mxu0
      %v415 = vpop.f32.mrb[0].mxu0
      %v416 = vadd.f32 0.0, %v415
      %v417 = vpop.f32.mrb[0].mxu0
      %418 = vmatprep.mubr.bf16.mxu0 0
      %419 = vmatmul.mubr.bf16.gmra.mrb[0].mxu0 %v360
      %v420 = vpop.f32.mrb[0].mxu0
      %v421 = vadd.f32 0.0, %v420
      %v422 = vpop.f32.mrb[0].mxu0
      %v423 = vpop.f32.mrb[0].mxu0
      %v424 = vadd.f32 0.0, %v423
      %v425 = vpop.f32.mrb[0].mxu0
      %426 = vdwg.mxu0
      %v427 = vld [vmem:[%s2] sm:$0xf]
      %v428 = vld [vmem:[%s2 + $0x4] sm:$0xf]
      %v429 = vld [vmem:[%s2 + $0x8] sm:$0xf]
      %v430 = vld [vmem:[%s2 + $0xc] sm:$0xf]
      %v431 = vld [vmem:[%s2 + $0x10] sm:$0xf]
      %v432 = vld [vmem:[%s2 + $0x14] sm:$0xf]
      %v433 = vld [vmem:[%s2 + $0x18] sm:$0xf]
      %v434 = vld [vmem:[%s2 + $0x1c] sm:$0xf]
      %v435 = vld [vmem:[%s3] sm:$0x1]
      %v437 = vlaneseq
      %v438 = vshrl.u32 %v437, 7
      %v439 = vsub.s32 0, %v438
      %v440 = vrot.slane %v435, %v439
      %v450 = vunpack.c.l.b16 %v427
      %v451 = vunpack.c.l.b16 %v428
      %v452 = vunpack.c.l.b16 %v429
      %v453 = vunpack.c.l.b16 %v430
      %v454 = vunpack.c.l.b16 %v431
      %v455 = vunpack.c.l.b16 %v432
      %v456 = vunpack.c.l.b16 %v433
      %v457 = vunpack.c.l.b16 %v434
      %v458 = vpack.c.b16 %v451, %v450
      %v459 = vpack.c.b16 %v453, %v452
      %v460 = vpack.c.b16 %v455, %v454
      %v461 = vpack.c.b16 %v457, %v456
      %466 = vmatprep.subr.bf16.mxu0 0
      %467 = vmatpush1.bf16.msra.mxu0 %v458
      %468 = vmatprep.subr.bf16.mxu0 0
      %469 = vmatpush1.bf16.msra.mxu0 %v459
      %470 = vmatprep.subr.bf16.mxu0 0
      %471 = vmatpush1.bf16.msra.mxu0 %v460
      %472 = vmatprep.subr.bf16.mxu0 0
      %473 = vmatpush1.bf16.msra.mxu0 %v461
      %474 = vmatprep.subr.bf16.mxu0 0
      %475 = vmatpush1.bf16.msra.mxu0 0
      %476 = vmatprep.subr.bf16.mxu0 0
      %477 = vmatpush1.bf16.msra.mxu0 0
      %478 = vmatprep.subr.bf16.mxu0 0
      %479 = vmatpush1.bf16.msra.mxu0 0
      %480 = vmatprep.subr.bf16.mxu0 0
      %481 = vmatpush1.bf16.msra.mxu0 0
      %482 = vmatprep.subr.bf16.mxu0 0
      %483 = vmatpush1.bf16.msra.mxu0 0
      %484 = vmatprep.subr.bf16.mxu0 0
      %485 = vmatpush1.bf16.msra.mxu0 0
      %486 = vmatprep.subr.bf16.mxu0 0
      %487 = vmatpush1.bf16.msra.mxu0 0
      %488 = vmatprep.subr.bf16.mxu0 0
      %489 = vmatpush1.bf16.msra.mxu0 0
      %490 = vmatprep.subr.bf16.mxu0 0
      %491 = vmatpush1.bf16.msra.mxu0 0
      %492 = vmatprep.subr.bf16.mxu0 0
      %493 = vmatpush1.bf16.msra.mxu0 0
      %494 = vmatprep.subr.bf16.mxu0 0
      %495 = vmatpush1.bf16.msra.mxu0 0
      %496 = vmatprep.subr.bf16.mxu0 0
      %497 = vmatpush1.bf16.msra.mxu0 0
      %498 = vmatprep.mubr.bf16.mxu0 0
      %499 = vmatmul.mubr.bf16.gmra.mrb[0].mxu0 %v351
      %v500 = vpop.f32.mrb[0].mxu0
      %v501 = vadd.f32 %v440, %v500
      %v502 = vpop.f32.mrb[0].mxu0
      %v503 = vpop.f32.mrb[0].mxu0
      %v504 = vadd.f32 %v440, %v503
      %v505 = vpop.f32.mrb[0].mxu0
      %506 = vmatprep.mubr.bf16.mxu0 0
      %507 = vmatmul.mubr.bf16.gmra.mrb[0].mxu0 %v354
      %v508 = vpop.f32.mrb[0].mxu0
      %v509 = vadd.f32 %v440, %v508
      %v510 = vpop.f32.mrb[0].mxu0
      %v511 = vpop.f32.mrb[0].mxu0
      %v512 = vadd.f32 %v440, %v511
      %v513 = vpop.f32.mrb[0].mxu0
      %514 = vmatprep.mubr.bf16.mxu0 0
      %515 = vmatmul.mubr.bf16.gmra.mrb[0].mxu0 %v357
      %v516 = vpop.f32.mrb[0].mxu0
      %v517 = vadd.f32 %v440, %v516
      %v518 = vpop.f32.mrb[0].mxu0
      %v519 = vpop.f32.mrb[0].mxu0
      %v520 = vadd.f32 %v440, %v519
      %v521 = vpop.f32.mrb[0].mxu0
      %522 = vmatprep.mubr.bf16.mxu0 0
      %523 = vmatmul.mubr.bf16.gmra.mrb[0].mxu0 %v360
      %v524 = vpop.f32.mrb[0].mxu0
      %v525 = vadd.f32 %v440, %v524
      %v526 = vpop.f32.mrb[0].mxu0
      %v527 = vpop.f32.mrb[0].mxu0
      %v528 = vadd.f32 %v440, %v527
      %v529 = vpop.f32.mrb[0].mxu0
      %530 = vdwg.mxu0
      %v531 = vpack.c.bf16 %v400, %v397
      %v532 = vpack.c.bf16 %v408, %v405
      %v533 = vpack.c.bf16 %v416, %v413
      %v534 = vpack.c.bf16 %v424, %v421
      %v539 = vunpack.c.l.b16 %v531
      %v540 = vunpack.c.h.b16 %v531
      %v541 = vunpack.c.l.b16 %v532
      %v542 = vunpack.c.h.b16 %v532
      %v543 = vunpack.c.l.b16 %v533
      %v544 = vunpack.c.h.b16 %v533
      %v545 = vunpack.c.l.b16 %v534
      %v546 = vunpack.c.h.b16 %v534
      %v547 = vpack.c.b16 %v539, %v539
      %v548 = vpack.c.b16 %v540, %v540
      %v549 = vpack.c.b16 %v541, %v541
      %v550 = vpack.c.b16 %v542, %v542
      %v551 = vpack.c.b16 %v543, %v543
      %v552 = vpack.c.b16 %v544, %v544
      %v553 = vpack.c.b16 %v545, %v545
      %v554 = vpack.c.b16 %v546, %v546
      %vm563 = vcmask 519168
      %564 = vst.msk [vmem:[%s276] sm:$0xf] %vm563, %v547
      %565 = vst.msk [vmem:[%s276 + $0x4] sm:$0xf] %vm563, %v548
      %566 = vst.msk [vmem:[%s276 + $0x8] sm:$0xf] %vm563, %v549
      %567 = vst.msk [vmem:[%s276 + $0xc] sm:$0xf] %vm563, %v550
      %568 = vst.msk [vmem:[%s276 + $0x10] sm:$0xf] %vm563, %v551
      %569 = vst.msk [vmem:[%s276 + $0x14] sm:$0xf] %vm563, %v552
      %570 = vst.msk [vmem:[%s276 + $0x18] sm:$0xf] %vm563, %v553
      %571 = vst.msk [vmem:[%s276 + $0x1c] sm:$0xf] %vm563, %v554
      %v572 = vpack.c.bf16 %v504, %v501
      %v573 = vpack.c.bf16 %v512, %v509
      %v574 = vpack.c.bf16 %v520, %v517
      %v575 = vpack.c.bf16 %v528, %v525
      %v580 = vunpack.c.l.b16 %v572
      %v581 = vunpack.c.h.b16 %v572
      %v582 = vunpack.c.l.b16 %v573
      %v583 = vunpack.c.h.b16 %v573
      %v584 = vunpack.c.l.b16 %v574
      %v585 = vunpack.c.h.b16 %v574
      %v586 = vunpack.c.l.b16 %v575
      %v587 = vunpack.c.h.b16 %v575
      %v588 = vpack.c.b16 %v580, %v580
      %v589 = vpack.c.b16 %v581, %v581
      %v590 = vpack.c.b16 %v582, %v582
      %v591 = vpack.c.b16 %v583, %v583
      %v592 = vpack.c.b16 %v584, %v584
      %v593 = vpack.c.b16 %v585, %v585
      %v594 = vpack.c.b16 %v586, %v586
      %v595 = vpack.c.b16 %v587, %v587
      %604 = vst.msk [vmem:[%s286] sm:$0xf] %vm563, %v588
      %605 = vst.msk [vmem:[%s286 + $0x4] sm:$0xf] %vm563, %v589
      %606 = vst.msk [vmem:[%s286 + $0x8] sm:$0xf] %vm563, %v590
      %607 = vst.msk [vmem:[%s286 + $0xc] sm:$0xf] %vm563, %v591
      %608 = vst.msk [vmem:[%s286 + $0x10] sm:$0xf] %vm563, %v592
      %609 = vst.msk [vmem:[%s286 + $0x14] sm:$0xf] %vm563, %v593
      %610 = vst.msk [vmem:[%s286 + $0x18] sm:$0xf] %vm563, %v594
      %611 = vst.msk [vmem:[%s286 + $0x1c] sm:$0xf] %vm563, %v595
      %s612 = smul.u32 8, %s22
      %p613 = scmp.lt.s32.totalorder %s21, 1
      %s614 = scalar_select %p613, %s21, 1
      %p615 = scmp.lt.s32.totalorder %s612, 7
      %s616 = scalar_select %p615, %s612, 7
      %s617 = smul.addr %s614, 8
      %s618 = sadd.s32 %s616, %s617
      %s619 = smul.addr %s618, 4
      %s620 = scalar_lea.vmem %s4, %s619
      %s621 = smul.u32 8, %s22
      %p622 = scmp.lt.s32.totalorder %s21, 1
      %s623 = scalar_select %p622, %s21, 1
      %p624 = scmp.lt.s32.totalorder %s621, 7
      %s625 = scalar_select %p624, %s621, 7
      %s626 = smul.addr %s623, 8
      %s627 = sadd.s32 %s625, %s626
      %s628 = smul.addr %s627, 4
      %s629 = scalar_lea.vmem %s5, %s628
      // Predicated region
      $region37: #{dgcnn_sem_seg_forward.10} parent=35 // pred_check
        %p630 = pneg %p140
      $region38: #{dgcnn_sem_seg_forward.10} parent=35 // pred_check_branch
        %632 = sbr.rel (%p630) target = $region40
      $region39: #{dgcnn_sem_seg_forward.10} parent=35 // pred_region
        %s633 = smul.u32 8, %s22
      $region40: #{dgcnn_sem_seg_forward.10} parent=35 // pred_fallthru
        _
      // Predicated region
      $region41: #{dgcnn_sem_seg_forward.10} parent=35 // pred_check
        %p634 = pneg %p168
      $region42: #{dgcnn_sem_seg_forward.10} parent=35 // pred_check_branch
        %636 = sbr.rel (%p634) target = $region44
      $region43: #{dgcnn_sem_seg_forward.10} parent=35 // pred_region
        %s637 = smul.u32 8, %s22
      $region44: #{dgcnn_sem_seg_forward.10} parent=35 // pred_fallthru
        _
    $region36: #{dgcnn_sem_seg_forward.10} parent=5 // pred_fallthru
      _
    %p638 = scmp.le.s32.totalorder 2, %s12
    // Predicated region
    $region45: #{dgcnn_sem_seg_forward.10} parent=5 // pred_check
      %p639 = pneg %p638
    $region46: #{dgcnn_sem_seg_forward.10} parent=5 // pred_check_branch
      %641 = sbr.rel (%p639) target = $region48
    $region47: #{dgcnn_sem_seg_forward.10} parent=5 // pred_region
      %s642 = ssub.s32 %s12, 2
      // Predicated region
      $region49: #{dgcnn_sem_seg_forward.10} parent=47 // pred_check
        %p643 = pneg %p146
      $region50: #{dgcnn_sem_seg_forward.10} parent=47 // pred_check_branch
        %645 = sbr.rel (%p643) target = $region52
      $region51: #{dgcnn_sem_seg_forward.10} parent=47 // pred_region
        %s646 = smul.u32 8, %s24
        %p647 = scmp.lt.s32.totalorder %s23, 1
        %s648 = scalar_select %p647, %s23, 1
        %p649 = scmp.lt.s32.totalorder %s646, 7
        %s650 = scalar_select %p649, %s646, 7
        %s651 = smul.addr %s648, 8
        %s652 = sadd.s32 %s650, %s651
        %s653 = smul.addr %s652, 4
        %s654 = scalar_lea.vmem %s4, %s653
      $region52: #{dgcnn_sem_seg_forward.10} parent=47 // pred_fallthru
        _
      // Predicated region
      $region53: #{dgcnn_sem_seg_forward.10} parent=47 // pred_check
        %p655 = pneg %p174
      $region54: #{dgcnn_sem_seg_forward.10} parent=47 // pred_check_branch
        %657 = sbr.rel (%p655) target = $region56
      $region55: #{dgcnn_sem_seg_forward.10} parent=47 // pred_region
        %s658 = smul.u32 8, %s24
        %p659 = scmp.lt.s32.totalorder %s23, 1
        %s660 = scalar_select %p659, %s23, 1
        %p661 = scmp.lt.s32.totalorder %s658, 7
        %s662 = scalar_select %p661, %s658, 7
        %s663 = smul.addr %s660, 8
        %s664 = sadd.s32 %s662, %s663
        %s665 = smul.addr %s664, 4
        %s666 = scalar_lea.vmem %s5, %s665
      $region56: #{dgcnn_sem_seg_forward.10} parent=47 // pred_fallthru
        _
    $region48: #{dgcnn_sem_seg_forward.10} parent=5 // pred_fallthru
      _
  $region6: #{dgcnn_sem_seg_forward.10} parent=0 // loop_footer
    %s16 = sadd.s32 1, %s12
  $region7: #{dgcnn_sem_seg_forward.10} parent=0 // loop_footer_branch
    %11 = sbr.rel target = $region3
  $region8: #{dgcnn_sem_seg_forward.10} parent=0 // loop_exit
    _

// kernel: dgcnn_sem_seg_forward.13
$region0: #{dgcnn_sem_seg_forward.13}
  #allocation0 [shape = 'u32[]', space=smem, size = 0x4, offset = 0x4, fixed_abs, tag = 'smem constant byte address 0x4 - core index']
  #allocation1 [shape = 'u32[144,128]{1,0:T(1,128)}', space=vmem, size = 0x12000, scoped, tag = 'internal scratch']
  %s0 = inlined_call_operand.vmem [shape: bf16[2,8,64,64], index: 0, kind: input, shape index: {}]
  %s1 = inlined_call_operand.vmem [shape: bf16[2,64,64], index: 1, kind: input, shape index: {}]
  %s2 = inlined_call_operand.vmem [shape: bf16[2,64,64], index: 2, kind: output, shape index: {}]
  %s3 = sld [smem:[#allocation0]]
  $region41: #{dgcnn_sem_seg_forward.13} parent=0
    _
  %s5 = ssub.s32 1, %s3
  %s6 = scalar_select 0, %s5, %s3
  loop: start=0, step=1, limit=4
  $region2: #{dgcnn_sem_seg_forward.13} parent=0 // loop_pre_header
    _
  $region3: #{dgcnn_sem_seg_forward.13} parent=0 // loop_header
    %s8 = sphi 0, %s12
    %p9 = scmp.ge.s32.totalorder %s8, 4
    %s15 = sphi 0, %s27
    %s16 = sphi 0, %s23
    %s17 = sphi 0, %s15
    %s18 = sphi 0, %s16
    %s19 = sphi 0, %s17
    %s20 = sphi 0, %s18
    %s32 = sphi 0, %s34
    %s35 = sphi 0, %s32
    %s36 = sphi 0, %s35
    %s52 = sphi 0, %s36
    %s60 = sphi 0, %s62
    %s63 = sphi 0, %s60
    %s64 = sphi 0, %s63
    %s80 = sphi 0, %s64
    %s88 = sphi 0, %s90
    %s91 = sphi 0, %s88
    %s92 = sphi 0, %s91
    %s108 = sphi 0, %s92
  $region4: #{dgcnn_sem_seg_forward.13} parent=0 // loop_header_branch
    %11 = sbr.rel (%p9) target = $region8
  $region5: #{dgcnn_sem_seg_forward.13} parent=0 // loop_body
    %s13 = ssub.s32 %s8, 1
    %s14 = ssub.s32 %s8, 2
    %s21 = sadd.s32 1, %s16
    %p22 = scmp.ge.s32.totalorder %s21, 1
    %s23 = scalar_select %p22, 0, %s21
    %s24 = sadd.s32 1, %s15
    %s25 = scalar_select %p22, %s24, %s15
    %p26 = scmp.ge.s32.totalorder %s25, 2
    %s27 = scalar_select %p26, 0, %s25
    %s28 = ssub.s32 %s15, %s27
    %s29 = ssub.s32 %s16, %s23
    %s30 = sor.u32 %s28, %s29
    %p31 = scmp.eq.s32.totalorder %s30, 0
    %s33 = sadd.s32 %s32, 1
    %s34 = scalar_select %p31, %s32, %s33
    %p37 = pneg %p31
    %p38 = scmp.eq.s32.totalorder %s8, 1
    %p39 = por %p37, %p38
    %p40 = scmp.ne.s32.totalorder %s32, %s35
    %p41 = scmp.eq.s32.totalorder %s8, 0
    %p42 = por %p40, %p41
    %p43 = scmp.ne.s32.totalorder %s32, %s35
    %p44 = scmp.eq.s32.totalorder %s13, 1
    %p45 = por %p43, %p44
    %p46 = scmp.ne.s32.totalorder %s35, %s36
    %p47 = scmp.eq.s32.totalorder %s13, 0
    %p48 = por %p46, %p47
    %p49 = scmp.ne.s32.totalorder %s35, %s36
    %p50 = scmp.eq.s32.totalorder %s14, 1
    %p51 = por %p49, %p50
    %p53 = scmp.ne.s32.totalorder %s36, %s52
    %p54 = scmp.eq.s32.totalorder %s14, 0
    %p55 = por %p53, %p54
    %s56 = ssub.s32 %s15, %s27
    %s57 = ssub.s32 %s16, %s23
    %s58 = sor.u32 %s56, %s57
    %p59 = scmp.eq.s32.totalorder %s58, 0
    %s61 = sadd.s32 %s60, 1
    %s62 = scalar_select %p59, %s60, %s61
    %p65 = pneg %p59
    %p66 = scmp.eq.s32.totalorder %s8, 1
    %p67 = por %p65, %p66
    %p68 = scmp.ne.s32.totalorder %s60, %s63
    %p69 = scmp.eq.s32.totalorder %s8, 0
    %p70 = por %p68, %p69
    %p71 = scmp.ne.s32.totalorder %s60, %s63
    %p72 = scmp.eq.s32.totalorder %s13, 1
    %p73 = por %p71, %p72
    %p74 = scmp.ne.s32.totalorder %s63, %s64
    %p75 = scmp.eq.s32.totalorder %s13, 0
    %p76 = por %p74, %p75
    %p77 = scmp.ne.s32.totalorder %s63, %s64
    %p78 = scmp.eq.s32.totalorder %s14, 1
    %p79 = por %p77, %p78
    %p81 = scmp.ne.s32.totalorder %s64, %s80
    %p82 = scmp.eq.s32.totalorder %s14, 0
    %p83 = por %p81, %p82
    %s84 = ssub.s32 %s15, %s27
    %s85 = ssub.s32 %s16, %s23
    %s86 = sor.u32 %s84, %s85
    %p87 = scmp.eq.s32.totalorder %s86, 0
    %s89 = sadd.s32 %s88, 1
    %s90 = scalar_select %p87, %s88, %s89
    %p93 = pneg %p87
    %p94 = scmp.eq.s32.totalorder %s8, 1
    %p95 = por %p93, %p94
    %p96 = scmp.ne.s32.totalorder %s88, %s91
    %p97 = scmp.eq.s32.totalorder %s8, 0
    %p98 = por %p96, %p97
    %p99 = scmp.ne.s32.totalorder %s88, %s91
    %p100 = scmp.eq.s32.totalorder %s13, 1
    %p101 = por %p99, %p100
    %p102 = scmp.ne.s32.totalorder %s91, %s92
    %p103 = scmp.eq.s32.totalorder %s13, 0
    %p104 = por %p102, %p103
    %p105 = scmp.ne.s32.totalorder %s91, %s92
    %p106 = scmp.eq.s32.totalorder %s14, 1
    %p107 = por %p105, %p106
    %p109 = scmp.ne.s32.totalorder %s92, %s108
    %p110 = scmp.eq.s32.totalorder %s14, 0
    %p111 = por %p109, %p110
    %p112 = scmp.le.s32.totalorder 1, %s8
    %p113 = scmp.lt.s32.totalorder %s8, 3
    %p114 = pnand %p112, %p113
    %p115 = pneg %p114
    // Predicated region
    $region9: #{dgcnn_sem_seg_forward.13} parent=5 // pred_check
      _
    $region10: #{dgcnn_sem_seg_forward.13} parent=5 // pred_check_branch
      %117 = sbr.rel (%p114) target = $region12
    $region11: #{dgcnn_sem_seg_forward.13} parent=5 // pred_region
      %s118 = ssub.s32 %s8, 1
    $region12: #{dgcnn_sem_seg_forward.13} parent=5 // pred_fallthru
      _
    %p119 = scmp.lt.s32.totalorder %s8, 2
    // Predicated region
    $region13: #{dgcnn_sem_seg_forward.13} parent=5 // pred_check
      %p120 = pneg %p119
    $region14: #{dgcnn_sem_seg_forward.13} parent=5 // pred_check_branch
      %122 = sbr.rel (%p120) target = $region16
    $region15: #{dgcnn_sem_seg_forward.13} parent=5 // pred_region
      // Predicated region
      $region17: #{dgcnn_sem_seg_forward.13} parent=15 // pred_check
        %p123 = pneg %p42
      $region18: #{dgcnn_sem_seg_forward.13} parent=15 // pred_check_branch
        %125 = sbr.rel (%p123) target = $region20
      $region19: #{dgcnn_sem_seg_forward.13} parent=15 // pred_region
        %s126 = smul.u32 8, %s16
        %p127 = scmp.lt.s32.totalorder %s15, 1
        %s128 = scalar_select %p127, %s15, 1
        %p129 = scmp.lt.s32.totalorder %s126, 7
        %s130 = scalar_select %p129, %s126, 7
        %s131 = smul.addr %s128, 64
        %s132 = sadd.s32 %s130, %s131
        %s133 = smul.addr %s132, 4
        %s134 = scalar_lea.vmem %s0, %s133
        %s135 = smul.u32 8, %s16
      $region20: #{dgcnn_sem_seg_forward.13} parent=15 // pred_fallthru
        _
      // Predicated region
      $region21: #{dgcnn_sem_seg_forward.13} parent=15 // pred_check
        %p136 = pneg %p70
      $region22: #{dgcnn_sem_seg_forward.13} parent=15 // pred_check_branch
        %138 = sbr.rel (%p136) target = $region24
      $region23: #{dgcnn_sem_seg_forward.13} parent=15 // pred_region
        %s139 = smul.u32 8, %s16
        %p140 = scmp.lt.s32.totalorder %s15, 1
        %s141 = scalar_select %p140, %s15, 1
        %p142 = scmp.lt.s32.totalorder %s139, 7
        %s143 = scalar_select %p142, %s139, 7
        %s144 = smul.addr %s141, 8
        %s145 = sadd.s32 %s143, %s144
        %s146 = smul.addr %s145, 4
        %s147 = scalar_lea.vmem %s1, %s146
        %s148 = smul.u32 8, %s16
      $region24: #{dgcnn_sem_seg_forward.13} parent=15 // pred_fallthru
        _
    $region16: #{dgcnn_sem_seg_forward.13} parent=5 // pred_fallthru
      _
    %p149 = scmp.le.s32.totalorder 1, %s8
    %p150 = scmp.lt.s32.totalorder %s8, 3
    %p151 = pnand %p149, %p150
    %p152 = pneg %p151
    // Predicated region
    $region25: #{dgcnn_sem_seg_forward.13} parent=5 // pred_check
      _
    $region26: #{dgcnn_sem_seg_forward.13} parent=5 // pred_check_branch
      %154 = sbr.rel (%p151) target = $region28
    $region27: #{dgcnn_sem_seg_forward.13} parent=5 // pred_region
      %s155 = ssub.s32 %s8, 1
      %s156 = smul.u32 8, %s18
      %p157 = scmp.lt.s32.totalorder %s17, 1
      %s158 = scalar_select %p157, %s17, 1
      %p159 = scmp.lt.s32.totalorder %s156, 7
      %s160 = scalar_select %p159, %s156, 7
      %s161 = smul.addr %s158, 64
      %s162 = sadd.s32 %s160, %s161
      %s163 = smul.addr %s162, 4
      %s164 = scalar_lea.vmem %s0, %s163
      %p165 = pneg %p48
      %p166 = pneg %p45
      %s167 = smul.u32 8, %s18
      %p168 = scmp.lt.s32.totalorder %s17, 1
      %s169 = scalar_select %p168, %s17, 1
      %p170 = scmp.lt.s32.totalorder %s167, 7
      %s171 = scalar_select %p170, %s167, 7
      %s172 = smul.addr %s169, 8
      %s173 = sadd.s32 %s171, %s172
      %s174 = smul.addr %s173, 4
      %s175 = scalar_lea.vmem %s1, %s174
      %p176 = pneg %p76
      %p177 = pneg %p73
      %p178 = pneg %p104
      %p179 = pneg %p101
      %s180 = smul.u32 8, %s18
      %p181 = scmp.lt.s32.totalorder %s17, 1
      %s182 = scalar_select %p181, %s17, 1
      %p183 = scmp.lt.s32.totalorder %s180, 7
      %s184 = scalar_select %p183, %s180, 7
      %s185 = smul.addr %s182, 8
      %s186 = sadd.s32 %s184, %s185
      %s187 = smul.addr %s186, 4
      %s188 = scalar_lea.vmem %s2, %s187
      %s189 = smul.u32 8, %s18
      %p190 = scmp.lt.s32.totalorder %s17, 1
      %s191 = scalar_select %p190, %s17, 1
      %p192 = scmp.lt.s32.totalorder %s189, 7
      %s193 = scalar_select %p192, %s189, 7
      %s194 = smul.addr %s191, 64
      %s195 = sadd.s32 %s193, %s194
      %s196 = smul.addr %s195, 4
      %s197 = scalar_lea.vmem %s0, %s196
      %s198 = smul.u32 8, %s18
      %s199 = smul.u32 8, %s18
      %p200 = scmp.lt.s32.totalorder %s17, 1
      %s201 = scalar_select %p200, %s17, 1
      %p202 = scmp.lt.s32.totalorder %s199, 7
      %s203 = scalar_select %p202, %s199, 7
      %s204 = smul.addr %s201, 8
      %s205 = sadd.s32 %s203, %s204
      %s206 = smul.addr %s205, 4
      %s207 = scalar_lea.vmem %s1, %s206
      %s208 = smul.u32 8, %s18
      %s209 = smul.u32 8, %s18
      %p210 = scmp.lt.s32.totalorder %s17, 1
      %s211 = scalar_select %p210, %s17, 1
      %p212 = scmp.lt.s32.totalorder %s209, 7
      %s213 = scalar_select %p212, %s209, 7
      %s214 = smul.addr %s211, 8
      %s215 = sadd.s32 %s213, %s214
      %s216 = smul.addr %s215, 4
      %s217 = scalar_lea.vmem %s2, %s216
      %s218 = smul.u32 8, %s18
      %v222 = vld [vmem:[%s197] sm:$0xf]
      %v223 = vld [vmem:[%s197 + $0x4] sm:$0xf]
      %v224 = vld [vmem:[%s197 + $0x8] sm:$0xf]
      %v225 = vld [vmem:[%s197 + $0xc] sm:$0xf]
      %v226 = vld [vmem:[%s197 + $0x10] sm:$0xf]
      %v227 = vld [vmem:[%s197 + $0x14] sm:$0xf]
      %v228 = vld [vmem:[%s197 + $0x18] sm:$0xf]
      %v229 = vld [vmem:[%s197 + $0x1c] sm:$0xf]
      %v230 = vld [vmem:[%s197 + $0x20] sm:$0xf]
      %v231 = vld [vmem:[%s197 + $0x24] sm:$0xf]
      %v232 = vld [vmem:[%s197 + $0x28] sm:$0xf]
      %v233 = vld [vmem:[%s197 + $0x2c] sm:$0xf]
      %v234 = vld [vmem:[%s197 + $0x30] sm:$0xf]
      %v235 = vld [vmem:[%s197 + $0x34] sm:$0xf]
      %v236 = vld [vmem:[%s197 + $0x38] sm:$0xf]
      %v237 = vld [vmem:[%s197 + $0x3c] sm:$0xf]
      %v238 = vld [vmem:[%s197 + $0x40] sm:$0xf]
      %v239 = vld [vmem:[%s197 + $0x44] sm:$0xf]
      %v240 = vld [vmem:[%s197 + $0x48] sm:$0xf]
      %v241 = vld [vmem:[%s197 + $0x4c] sm:$0xf]
      %v242 = vld [vmem:[%s197 + $0x50] sm:$0xf]
      %v243 = vld [vmem:[%s197 + $0x54] sm:$0xf]
      %v244 = vld [vmem:[%s197 + $0x58] sm:$0xf]
      %v245 = vld [vmem:[%s197 + $0x5c] sm:$0xf]
      %v246 = vld [vmem:[%s197 + $0x60] sm:$0xf]
      %v247 = vld [vmem:[%s197 + $0x64] sm:$0xf]
      %v248 = vld [vmem:[%s197 + $0x68] sm:$0xf]
      %v249 = vld [vmem:[%s197 + $0x6c] sm:$0xf]
      %v250 = vld [vmem:[%s197 + $0x70] sm:$0xf]
      %v251 = vld [vmem:[%s197 + $0x74] sm:$0xf]
      %v252 = vld [vmem:[%s197 + $0x78] sm:$0xf]
      %v253 = vld [vmem:[%s197 + $0x7c] sm:$0xf]
      %v254 = vld [vmem:[%s197 + $0x80] sm:$0xf]
      %v255 = vld [vmem:[%s197 + $0x84] sm:$0xf]
      %v256 = vld [vmem:[%s197 + $0x88] sm:$0xf]
      %v257 = vld [vmem:[%s197 + $0x8c] sm:$0xf]
      %v258 = vld [vmem:[%s197 + $0x90] sm:$0xf]
      %v259 = vld [vmem:[%s197 + $0x94] sm:$0xf]
      %v260 = vld [vmem:[%s197 + $0x98] sm:$0xf]
      %v261 = vld [vmem:[%s197 + $0x9c] sm:$0xf]
      %v262 = vld [vmem:[%s197 + $0xa0] sm:$0xf]
      %v263 = vld [vmem:[%s197 + $0xa4] sm:$0xf]
      %v264 = vld [vmem:[%s197 + $0xa8] sm:$0xf]
      %v265 = vld [vmem:[%s197 + $0xac] sm:$0xf]
      %v266 = vld [vmem:[%s197 + $0xb0] sm:$0xf]
      %v267 = vld [vmem:[%s197 + $0xb4] sm:$0xf]
      %v268 = vld [vmem:[%s197 + $0xb8] sm:$0xf]
      %v269 = vld [vmem:[%s197 + $0xbc] sm:$0xf]
      %v270 = vld [vmem:[%s197 + $0xc0] sm:$0xf]
      %v271 = vld [vmem:[%s197 + $0xc4] sm:$0xf]
      %v272 = vld [vmem:[%s197 + $0xc8] sm:$0xf]
      %v273 = vld [vmem:[%s197 + $0xcc] sm:$0xf]
      %v274 = vld [vmem:[%s197 + $0xd0] sm:$0xf]
      %v275 = vld [vmem:[%s197 + $0xd4] sm:$0xf]
      %v276 = vld [vmem:[%s197 + $0xd8] sm:$0xf]
      %v277 = vld [vmem:[%s197 + $0xdc] sm:$0xf]
      %v278 = vld [vmem:[%s197 + $0xe0] sm:$0xf]
      %v279 = vld [vmem:[%s197 + $0xe4] sm:$0xf]
      %v280 = vld [vmem:[%s197 + $0xe8] sm:$0xf]
      %v281 = vld [vmem:[%s197 + $0xec] sm:$0xf]
      %v282 = vld [vmem:[%s197 + $0xf0] sm:$0xf]
      %v283 = vld [vmem:[%s197 + $0xf4] sm:$0xf]
      %v284 = vld [vmem:[%s197 + $0xf8] sm:$0xf]
      %v285 = vld [vmem:[%s197 + $0xfc] sm:$0xf]
      %v286 = vld [vmem:[%s207] sm:$0xf]
      %v287 = vld [vmem:[%s207 + $0x4] sm:$0xf]
      %v288 = vld [vmem:[%s207 + $0x8] sm:$0xf]
      %v289 = vld [vmem:[%s207 + $0xc] sm:$0xf]
      %v290 = vld [vmem:[%s207 + $0x10] sm:$0xf]
      %v291 = vld [vmem:[%s207 + $0x14] sm:$0xf]
      %v292 = vld [vmem:[%s207 + $0x18] sm:$0xf]
      %v293 = vld [vmem:[%s207 + $0x1c] sm:$0xf]
      %v294 = vadd.bf16 %v222, %v286
      %v295 = vadd.bf16 %v223, %v287
      %v296 = vadd.bf16 %v224, %v288
      %v297 = vadd.bf16 %v225, %v289
      %v298 = vadd.bf16 %v226, %v290
      %v299 = vadd.bf16 %v227, %v291
      %v300 = vadd.bf16 %v228, %v292
      %v301 = vadd.bf16 %v229, %v293
      %v302 = vadd.bf16 %v230, %v286
      %v303 = vadd.bf16 %v231, %v287
      %v304 = vadd.bf16 %v232, %v288
      %v305 = vadd.bf16 %v233, %v289
      %v306 = vadd.bf16 %v234, %v290
      %v307 = vadd.bf16 %v235, %v291
      %v308 = vadd.bf16 %v236, %v292
      %v309 = vadd.bf16 %v237, %v293
      %v310 = vadd.bf16 %v238, %v286
      %v311 = vadd.bf16 %v239, %v287
      %v312 = vadd.bf16 %v240, %v288
      %v313 = vadd.bf16 %v241, %v289
      %v314 = vadd.bf16 %v242, %v290
      %v315 = vadd.bf16 %v243, %v291
      %v316 = vadd.bf16 %v244, %v292
      %v317 = vadd.bf16 %v245, %v293
      %v318 = vadd.bf16 %v246, %v286
      %v319 = vadd.bf16 %v247, %v287
      %v320 = vadd.bf16 %v248, %v288
      %v321 = vadd.bf16 %v249, %v289
      %v322 = vadd.bf16 %v250, %v290
      %v323 = vadd.bf16 %v251, %v291
      %v324 = vadd.bf16 %v252, %v292
      %v325 = vadd.bf16 %v253, %v293
      %v326 = vadd.bf16 %v254, %v286
      %v327 = vadd.bf16 %v255, %v287
      %v328 = vadd.bf16 %v256, %v288
      %v329 = vadd.bf16 %v257, %v289
      %v330 = vadd.bf16 %v258, %v290
      %v331 = vadd.bf16 %v259, %v291
      %v332 = vadd.bf16 %v260, %v292
      %v333 = vadd.bf16 %v261, %v293
      %v334 = vadd.bf16 %v262, %v286
      %v335 = vadd.bf16 %v263, %v287
      %v336 = vadd.bf16 %v264, %v288
      %v337 = vadd.bf16 %v265, %v289
      %v338 = vadd.bf16 %v266, %v290
      %v339 = vadd.bf16 %v267, %v291
      %v340 = vadd.bf16 %v268, %v292
      %v341 = vadd.bf16 %v269, %v293
      %v342 = vadd.bf16 %v270, %v286
      %v343 = vadd.bf16 %v271, %v287
      %v344 = vadd.bf16 %v272, %v288
      %v345 = vadd.bf16 %v273, %v289
      %v346 = vadd.bf16 %v274, %v290
      %v347 = vadd.bf16 %v275, %v291
      %v348 = vadd.bf16 %v276, %v292
      %v349 = vadd.bf16 %v277, %v293
      %v350 = vadd.bf16 %v278, %v286
      %v351 = vadd.bf16 %v279, %v287
      %v352 = vadd.bf16 %v280, %v288
      %v353 = vadd.bf16 %v281, %v289
      %v354 = vadd.bf16 %v282, %v290
      %v355 = vadd.bf16 %v283, %v291
      %v356 = vadd.bf16 %v284, %v292
      %v357 = vadd.bf16 %v285, %v293
      %vm358 = vcmp.ge.bf16.partialorder %v294, 0
      %vm359 = vcmp.ge.bf16.partialorder %v295, 0
      %vm360 = vcmp.ge.bf16.partialorder %v296, 0
      %vm361 = vcmp.ge.bf16.partialorder %v297, 0
      %vm362 = vcmp.ge.bf16.partialorder %v298, 0
      %vm363 = vcmp.ge.bf16.partialorder %v299, 0
      %vm364 = vcmp.ge.bf16.partialorder %v300, 0
      %vm365 = vcmp.ge.bf16.partialorder %v301, 0
      %vm366 = vcmp.ge.bf16.partialorder %v302, 0
      %vm367 = vcmp.ge.bf16.partialorder %v303, 0
      %vm368 = vcmp.ge.bf16.partialorder %v304, 0
      %vm369 = vcmp.ge.bf16.partialorder %v305, 0
      %vm370 = vcmp.ge.bf16.partialorder %v306, 0
      %vm371 = vcmp.ge.bf16.partialorder %v307, 0
      %vm372 = vcmp.ge.bf16.partialorder %v308, 0
      %vm373 = vcmp.ge.bf16.partialorder %v309, 0
      %vm374 = vcmp.ge.bf16.partialorder %v310, 0
      %vm375 = vcmp.ge.bf16.partialorder %v311, 0
      %vm376 = vcmp.ge.bf16.partialorder %v312, 0
      %vm377 = vcmp.ge.bf16.partialorder %v313, 0
      %vm378 = vcmp.ge.bf16.partialorder %v314, 0
      %vm379 = vcmp.ge.bf16.partialorder %v315, 0
      %vm380 = vcmp.ge.bf16.partialorder %v316, 0
      %vm381 = vcmp.ge.bf16.partialorder %v317, 0
      %vm382 = vcmp.ge.bf16.partialorder %v318, 0
      %vm383 = vcmp.ge.bf16.partialorder %v319, 0
      %vm384 = vcmp.ge.bf16.partialorder %v320, 0
      %vm385 = vcmp.ge.bf16.partialorder %v321, 0
      %vm386 = vcmp.ge.bf16.partialorder %v322, 0
      %vm387 = vcmp.ge.bf16.partialorder %v323, 0
      %vm388 = vcmp.ge.bf16.partialorder %v324, 0
      %vm389 = vcmp.ge.bf16.partialorder %v325, 0
      %vm390 = vcmp.ge.bf16.partialorder %v326, 0
      %vm391 = vcmp.ge.bf16.partialorder %v327, 0
      %vm392 = vcmp.ge.bf16.partialorder %v328, 0
      %vm393 = vcmp.ge.bf16.partialorder %v329, 0
      %vm394 = vcmp.ge.bf16.partialorder %v330, 0
      %vm395 = vcmp.ge.bf16.partialorder %v331, 0
      %vm396 = vcmp.ge.bf16.partialorder %v332, 0
      %vm397 = vcmp.ge.bf16.partialorder %v333, 0
      %vm398 = vcmp.ge.bf16.partialorder %v334, 0
      %vm399 = vcmp.ge.bf16.partialorder %v335, 0
      %vm400 = vcmp.ge.bf16.partialorder %v336, 0
      %vm401 = vcmp.ge.bf16.partialorder %v337, 0
      %vm402 = vcmp.ge.bf16.partialorder %v338, 0
      %vm403 = vcmp.ge.bf16.partialorder %v339, 0
      %vm404 = vcmp.ge.bf16.partialorder %v340, 0
      %vm405 = vcmp.ge.bf16.partialorder %v341, 0
      %vm406 = vcmp.ge.bf16.partialorder %v342, 0
      %vm407 = vcmp.ge.bf16.partialorder %v343, 0
      %vm408 = vcmp.ge.bf16.partialorder %v344, 0
      %vm409 = vcmp.ge.bf16.partialorder %v345, 0
      %vm410 = vcmp.ge.bf16.partialorder %v346, 0
      %vm411 = vcmp.ge.bf16.partialorder %v347, 0
      %vm412 = vcmp.ge.bf16.partialorder %v348, 0
      %vm413 = vcmp.ge.bf16.partialorder %v349, 0
      %vm414 = vcmp.ge.bf16.partialorder %v350, 0
      %vm415 = vcmp.ge.bf16.partialorder %v351, 0
      %vm416 = vcmp.ge.bf16.partialorder %v352, 0
      %vm417 = vcmp.ge.bf16.partialorder %v353, 0
      %vm418 = vcmp.ge.bf16.partialorder %v354, 0
      %vm419 = vcmp.ge.bf16.partialorder %v355, 0
      %vm420 = vcmp.ge.bf16.partialorder %v356, 0
      %vm421 = vcmp.ge.bf16.partialorder %v357, 0
      %v422 = vmul.bf16 %v294, 1045249613
      %v423 = vmul.bf16 %v295, 1045249613
      %v424 = vmul.bf16 %v296, 1045249613
      %v425 = vmul.bf16 %v297, 1045249613
      %v426 = vmul.bf16 %v298, 1045249613
      %v427 = vmul.bf16 %v299, 1045249613
      %v428 = vmul.bf16 %v300, 1045249613
      %v429 = vmul.bf16 %v301, 1045249613
      %v430 = vmul.bf16 %v302, 1045249613
      %v431 = vmul.bf16 %v303, 1045249613
      %v432 = vmul.bf16 %v304, 1045249613
      %v433 = vmul.bf16 %v305, 1045249613
      %v434 = vmul.bf16 %v306, 1045249613
      %v435 = vmul.bf16 %v307, 1045249613
      %v436 = vmul.bf16 %v308, 1045249613
      %v437 = vmul.bf16 %v309, 1045249613
      %v438 = vmul.bf16 %v310, 1045249613
      %v439 = vmul.bf16 %v311, 1045249613
      %v440 = vmul.bf16 %v312, 1045249613
      %v441 = vmul.bf16 %v313, 1045249613
      %v442 = vmul.bf16 %v314, 1045249613
      %v443 = vmul.bf16 %v315, 1045249613
      %v444 = vmul.bf16 %v316, 1045249613
      %v445 = vmul.bf16 %v317, 1045249613
      %v446 = vmul.bf16 %v318, 1045249613
      %v447 = vmul.bf16 %v319, 1045249613
      %v448 = vmul.bf16 %v320, 1045249613
      %v449 = vmul.bf16 %v321, 1045249613
      %v450 = vmul.bf16 %v322, 1045249613
      %v451 = vmul.bf16 %v323, 1045249613
      %v452 = vmul.bf16 %v324, 1045249613
      %v453 = vmul.bf16 %v325, 1045249613
      %v454 = vmul.bf16 %v326, 1045249613
      %v455 = vmul.bf16 %v327, 1045249613
      %v456 = vmul.bf16 %v328, 1045249613
      %v457 = vmul.bf16 %v329, 1045249613
      %v458 = vmul.bf16 %v330, 1045249613
      %v459 = vmul.bf16 %v331, 1045249613
      %v460 = vmul.bf16 %v332, 1045249613
      %v461 = vmul.bf16 %v333, 1045249613
      %v462 = vmul.bf16 %v334, 1045249613
      %v463 = vmul.bf16 %v335, 1045249613
      %v464 = vmul.bf16 %v336, 1045249613
      %v465 = vmul.bf16 %v337, 1045249613
      %v466 = vmul.bf16 %v338, 1045249613
      %v467 = vmul.bf16 %v339, 1045249613
      %v468 = vmul.bf16 %v340, 1045249613
      %v469 = vmul.bf16 %v341, 1045249613
      %v470 = vmul.bf16 %v342, 1045249613
      %v471 = vmul.bf16 %v343, 1045249613
      %v472 = vmul.bf16 %v344, 1045249613
      %v473 = vmul.bf16 %v345, 1045249613
      %v474 = vmul.bf16 %v346, 1045249613
      %v475 = vmul.bf16 %v347, 1045249613
      %v476 = vmul.bf16 %v348, 1045249613
      %v477 = vmul.bf16 %v349, 1045249613
      %v478 = vmul.bf16 %v350, 1045249613
      %v479 = vmul.bf16 %v351, 1045249613
      %v480 = vmul.bf16 %v352, 1045249613
      %v481 = vmul.bf16 %v353, 1045249613
      %v482 = vmul.bf16 %v354, 1045249613
      %v483 = vmul.bf16 %v355, 1045249613
      %v484 = vmul.bf16 %v356, 1045249613
      %v485 = vmul.bf16 %v357, 1045249613
      %v486 = vsel %vm358, %v294, %v422
      %v487 = vsel %vm359, %v295, %v423
      %v488 = vsel %vm360, %v296, %v424
      %v489 = vsel %vm361, %v297, %v425
      %v490 = vsel %vm362, %v298, %v426
      %v491 = vsel %vm363, %v299, %v427
      %v492 = vsel %vm364, %v300, %v428
      %v493 = vsel %vm365, %v301, %v429
      %v494 = vsel %vm366, %v302, %v430
      %v495 = vsel %vm367, %v303, %v431
      %v496 = vsel %vm368, %v304, %v432
      %v497 = vsel %vm369, %v305, %v433
      %v498 = vsel %vm370, %v306, %v434
      %v499 = vsel %vm371, %v307, %v435
      %v500 = vsel %vm372, %v308, %v436
      %v501 = vsel %vm373, %v309, %v437
      %v502 = vsel %vm374, %v310, %v438
      %v503 = vsel %vm375, %v311, %v439
      %v504 = vsel %vm376, %v312, %v440
      %v505 = vsel %vm377, %v313, %v441
      %v506 = vsel %vm378, %v314, %v442
      %v507 = vsel %vm379, %v315, %v443
      %v508 = vsel %vm380, %v316, %v444
      %v509 = vsel %vm381, %v317, %v445
      %v510 = vsel %vm382, %v318, %v446
      %v511 = vsel %vm383, %v319, %v447
      %v512 = vsel %vm384, %v320, %v448
      %v513 = vsel %vm385, %v321, %v449
      %v514 = vsel %vm386, %v322, %v450
      %v515 = vsel %vm387, %v323, %v451
      %v516 = vsel %vm388, %v324, %v452
      %v517 = vsel %vm389, %v325, %v453
      %v518 = vsel %vm390, %v326, %v454
      %v519 = vsel %vm391, %v327, %v455
      %v520 = vsel %vm392, %v328, %v456
      %v521 = vsel %vm393, %v329, %v457
      %v522 = vsel %vm394, %v330, %v458
      %v523 = vsel %vm395, %v331, %v459
      %v524 = vsel %vm396, %v332, %v460
      %v525 = vsel %vm397, %v333, %v461
      %v526 = vsel %vm398, %v334, %v462
      %v527 = vsel %vm399, %v335, %v463
      %v528 = vsel %vm400, %v336, %v464
      %v529 = vsel %vm401, %v337, %v465
      %v530 = vsel %vm402, %v338, %v466
      %v531 = vsel %vm403, %v339, %v467
      %v532 = vsel %vm404, %v340, %v468
      %v533 = vsel %vm405, %v341, %v469
      %v534 = vsel %vm406, %v342, %v470
      %v535 = vsel %vm407, %v343, %v471
      %v536 = vsel %vm408, %v344, %v472
      %v537 = vsel %vm409, %v345, %v473
      %v538 = vsel %vm410, %v346, %v474
      %v539 = vsel %vm411, %v347, %v475
      %v540 = vsel %vm412, %v348, %v476
      %v541 = vsel %vm413, %v349, %v477
      %v542 = vsel %vm414, %v350, %v478
      %v543 = vsel %vm415, %v351, %v479
      %v544 = vsel %vm416, %v352, %v480
      %v545 = vsel %vm417, %v353, %v481
      %v546 = vsel %vm418, %v354, %v482
      %v547 = vsel %vm419, %v355, %v483
      %v548 = vsel %vm420, %v356, %v484
      %v549 = vsel %vm421, %v357, %v485
      %vm550 = vcmask 519168
      %v553 = vsel %vm550, %v486, 4286644096
      %v556 = vsel %vm550, %v494, 4286644096
      %v558 = vmax.bf16 %v553, %v556
      %v560 = vsel %vm550, %v502, 4286644096
      %v562 = vmax.bf16 %v558, %v560
      %v564 = vsel %vm550, %v510, 4286644096
      %v566 = vmax.bf16 %v562, %v564
      %v568 = vsel %vm550, %v518, 4286644096
      %v570 = vmax.bf16 %v566, %v568
      %v572 = vsel %vm550, %v526, 4286644096
      %v574 = vmax.bf16 %v570, %v572
      %v576 = vsel %vm550, %v534, 4286644096
      %v578 = vmax.bf16 %v574, %v576
      %v580 = vsel %vm550, %v542, 4286644096
      %v582 = vmax.bf16 %v578, %v580
      %v584 = vsel %vm550, %v487, 4286644096
      %v587 = vsel %vm550, %v495, 4286644096
      %v589 = vmax.bf16 %v584, %v587
      %v591 = vsel %vm550, %v503, 4286644096
      %v593 = vmax.bf16 %v589, %v591
      %v595 = vsel %vm550, %v511, 4286644096
      %v597 = vmax.bf16 %v593, %v595
      %v599 = vsel %vm550, %v519, 4286644096
      %v601 = vmax.bf16 %v597, %v599
      %v603 = vsel %vm550, %v527, 4286644096
      %v605 = vmax.bf16 %v601, %v603
      %v607 = vsel %vm550, %v535, 4286644096
      %v609 = vmax.bf16 %v605, %v607
      %v611 = vsel %vm550, %v543, 4286644096
      %v613 = vmax.bf16 %v609, %v611
      %v615 = vsel %vm550, %v488, 4286644096
      %v618 = vsel %vm550, %v496, 4286644096
      %v620 = vmax.bf16 %v615, %v618
      %v622 = vsel %vm550, %v504, 4286644096
      %v624 = vmax.bf16 %v620, %v622
      %v626 = vsel %vm550, %v512, 4286644096
      %v628 = vmax.bf16 %v624, %v626
      %v630 = vsel %vm550, %v520, 4286644096
      %v632 = vmax.bf16 %v628, %v630
      %v634 = vsel %vm550, %v528, 4286644096
      %v636 = vmax.bf16 %v632, %v634
      %v638 = vsel %vm550, %v536, 4286644096
      %v640 = vmax.bf16 %v636, %v638
      %v642 = vsel %vm550, %v544, 4286644096
      %v644 = vmax.bf16 %v640, %v642
      %v646 = vsel %vm550, %v489, 4286644096
      %v649 = vsel %vm550, %v497, 4286644096
      %v651 = vmax.bf16 %v646, %v649
      %v653 = vsel %vm550, %v505, 4286644096
      %v655 = vmax.bf16 %v651, %v653
      %v657 = vsel %vm550, %v513, 4286644096
      %v659 = vmax.bf16 %v655, %v657
      %v661 = vsel %vm550, %v521, 4286644096
      %v663 = vmax.bf16 %v659, %v661
      %v665 = vsel %vm550, %v529, 4286644096
      %v667 = vmax.bf16 %v663, %v665
      %v669 = vsel %vm550, %v537, 4286644096
      %v671 = vmax.bf16 %v667, %v669
      %v673 = vsel %vm550, %v545, 4286644096
      %v675 = vmax.bf16 %v671, %v673
      %v677 = vsel %vm550, %v490, 4286644096
      %v680 = vsel %vm550, %v498, 4286644096
      %v682 = vmax.bf16 %v677, %v680
      %v684 = vsel %vm550, %v506, 4286644096
      %v686 = vmax.bf16 %v682, %v684
      %v688 = vsel %vm550, %v514, 4286644096
      %v690 = vmax.bf16 %v686, %v688
      %v692 = vsel %vm550, %v522, 4286644096
      %v694 = vmax.bf16 %v690, %v692
      %v696 = vsel %vm550, %v530, 4286644096
      %v698 = vmax.bf16 %v694, %v696
      %v700 = vsel %vm550, %v538, 4286644096
      %v702 = vmax.bf16 %v698, %v700
      %v704 = vsel %vm550, %v546, 4286644096
      %v706 = vmax.bf16 %v702, %v704
      %v708 = vsel %vm550, %v491, 4286644096
      %v711 = vsel %vm550, %v499, 4286644096
      %v713 = vmax.bf16 %v708, %v711
      %v715 = vsel %vm550, %v507, 4286644096
      %v717 = vmax.bf16 %v713, %v715
      %v719 = vsel %vm550, %v515, 4286644096
      %v721 = vmax.bf16 %v717, %v719
      %v723 = vsel %vm550, %v523, 4286644096
      %v725 = vmax.bf16 %v721, %v723
      %v727 = vsel %vm550, %v531, 4286644096
      %v729 = vmax.bf16 %v725, %v727
      %v731 = vsel %vm550, %v539, 4286644096
      %v733 = vmax.bf16 %v729, %v731
      %v735 = vsel %vm550, %v547, 4286644096
      %v737 = vmax.bf16 %v733, %v735
      %v739 = vsel %vm550, %v492, 4286644096
      %v742 = vsel %vm550, %v500, 4286644096
      %v744 = vmax.bf16 %v739, %v742
      %v746 = vsel %vm550, %v508, 4286644096
      %v748 = vmax.bf16 %v744, %v746
      %v750 = vsel %vm550, %v516, 4286644096
      %v752 = vmax.bf16 %v748, %v750
      %v754 = vsel %vm550, %v524, 4286644096
      %v756 = vmax.bf16 %v752, %v754
      %v758 = vsel %vm550, %v532, 4286644096
      %v760 = vmax.bf16 %v756, %v758
      %v762 = vsel %vm550, %v540, 4286644096
      %v764 = vmax.bf16 %v760, %v762
      %v766 = vsel %vm550, %v548, 4286644096
      %v768 = vmax.bf16 %v764, %v766
      %v770 = vsel %vm550, %v493, 4286644096
      %v773 = vsel %vm550, %v501, 4286644096
      %v775 = vmax.bf16 %v770, %v773
      %v777 = vsel %vm550, %v509, 4286644096
      %v779 = vmax.bf16 %v775, %v777
      %v781 = vsel %vm550, %v517, 4286644096
      %v783 = vmax.bf16 %v779, %v781
      %v785 = vsel %vm550, %v525, 4286644096
      %v787 = vmax.bf16 %v783, %v785
      %v789 = vsel %vm550, %v533, 4286644096
      %v791 = vmax.bf16 %v787, %v789
      %v793 = vsel %vm550, %v541, 4286644096
      %v795 = vmax.bf16 %v791, %v793
      %v797 = vsel %vm550, %v549, 4286644096
      %v799 = vmax.bf16 %v795, %v797
      %800 = vst.msk [vmem:[%s217] sm:$0xf] %vm550, %v582
      %801 = vst.msk [vmem:[%s217 + $0x4] sm:$0xf] %vm550, %v613
      %802 = vst.msk [vmem:[%s217 + $0x8] sm:$0xf] %vm550, %v644
      %803 = vst.msk [vmem:[%s217 + $0xc] sm:$0xf] %vm550, %v675
      %804 = vst.msk [vmem:[%s217 + $0x10] sm:$0xf] %vm550, %v706
      %805 = vst.msk [vmem:[%s217 + $0x14] sm:$0xf] %vm550, %v737
      %806 = vst.msk [vmem:[%s217 + $0x18] sm:$0xf] %vm550, %v768
      %807 = vst.msk [vmem:[%s217 + $0x1c] sm:$0xf] %vm550, %v799
      %s808 = smul.u32 8, %s18
      %p809 = scmp.lt.s32.totalorder %s17, 1
      %s810 = scalar_select %p809, %s17, 1
      %p811 = scmp.lt.s32.totalorder %s808, 7
      %s812 = scalar_select %p811, %s808, 7
      %s813 = smul.addr %s810, 8
      %s814 = sadd.s32 %s812, %s813
      %s815 = smul.addr %s814, 4
      %s816 = scalar_lea.vmem %s2, %s815
      // Predicated region
      $region29: #{dgcnn_sem_seg_forward.13} parent=27 // pred_check
        %p817 = pneg %p101
      $region30: #{dgcnn_sem_seg_forward.13} parent=27 // pred_check_branch
        %819 = sbr.rel (%p817) target = $region32
      $region31: #{dgcnn_sem_seg_forward.13} parent=27 // pred_region
        %s820 = smul.u32 8, %s18
      $region32: #{dgcnn_sem_seg_forward.13} parent=27 // pred_fallthru
        _
    $region28: #{dgcnn_sem_seg_forward.13} parent=5 // pred_fallthru
      _
    %p821 = scmp.le.s32.totalorder 2, %s8
    // Predicated region
    $region33: #{dgcnn_sem_seg_forward.13} parent=5 // pred_check
      %p822 = pneg %p821
    $region34: #{dgcnn_sem_seg_forward.13} parent=5 // pred_check_branch
      %824 = sbr.rel (%p822) target = $region36
    $region35: #{dgcnn_sem_seg_forward.13} parent=5 // pred_region
      %s825 = ssub.s32 %s8, 2
      // Predicated region
      $region37: #{dgcnn_sem_seg_forward.13} parent=35 // pred_check
        %p826 = pneg %p107
      $region38: #{dgcnn_sem_seg_forward.13} parent=35 // pred_check_branch
        %828 = sbr.rel (%p826) target = $region40
      $region39: #{dgcnn_sem_seg_forward.13} parent=35 // pred_region
        %s829 = smul.u32 8, %s20
        %p830 = scmp.lt.s32.totalorder %s19, 1
        %s831 = scalar_select %p830, %s19, 1
        %p832 = scmp.lt.s32.totalorder %s829, 7
        %s833 = scalar_select %p832, %s829, 7
        %s834 = smul.addr %s831, 8
        %s835 = sadd.s32 %s833, %s834
        %s836 = smul.addr %s835, 4
        %s837 = scalar_lea.vmem %s2, %s836
      $region40: #{dgcnn_sem_seg_forward.13} parent=35 // pred_fallthru
        _
    $region36: #{dgcnn_sem_seg_forward.13} parent=5 // pred_fallthru
      _
  $region6: #{dgcnn_sem_seg_forward.13} parent=0 // loop_footer
    %s12 = sadd.s32 1, %s8
  $region7: #{dgcnn_sem_seg_forward.13} parent=0 // loop_footer_branch
    %7 = sbr.rel target = $region3
  $region8: #{dgcnn_sem_seg_forward.13} parent=0 // loop_exit
    _

// kernel: dgcnn_sem_seg_forward.14
$region0: #{dgcnn_sem_seg_forward.14}
  #allocation0 [shape = 'u32[]', space=smem, size = 0x4, offset = 0x4, fixed_abs, tag = 'smem constant byte address 0x4 - core index']
  #allocation1 [shape = 'u32[144,128]{1,0:T(1,128)}', space=vmem, size = 0x12000, scoped, tag = 'internal scratch']
  %s0 = inlined_call_operand.vmem [shape: bf16[2,64,192], index: 0, kind: input, shape index: {}]
  %s1 = inlined_call_operand.vmem [shape: bf16[192,64], index: 1, kind: input, shape index: {}]
  %s2 = inlined_call_operand.vmem [shape: f32[1,64], index: 2, kind: input, shape index: {}]
  %s3 = inlined_call_operand.vmem [shape: f32[2,1,64], index: 3, kind: output, shape index: {}]
  %s4 = sld [smem:[#allocation0]]
  $region53: #{dgcnn_sem_seg_forward.14} parent=0
    _
  %s6 = ssub.s32 1, %s4
  %s7 = scalar_select 0, %s6, %s4
  loop: start=0, step=1, limit=4
  $region2: #{dgcnn_sem_seg_forward.14} parent=0 // loop_pre_header
    _
  $region3: #{dgcnn_sem_seg_forward.14} parent=0 // loop_header
    %s9 = sphi 0, %s13
    %p10 = scmp.ge.s32.totalorder %s9, 4
    %s16 = sphi 0, %s28
    %s17 = sphi 0, %s24
    %s18 = sphi 0, %s16
    %s19 = sphi 0, %s17
    %s20 = sphi 0, %s18
    %s21 = sphi 0, %s19
    %s33 = sphi 0, %s35
    %s36 = sphi 0, %s33
    %s37 = sphi 0, %s36
    %s53 = sphi 0, %s37
    %s57 = sphi 0, %s57
    %s59 = sphi 0, %s57
    %s60 = sphi 0, %s59
    %s74 = sphi 0, %s60
    %s78 = sphi 0, %s78
    %s80 = sphi 0, %s78
    %s81 = sphi 0, %s80
    %s95 = sphi 0, %s81
    %s101 = sphi 0, %s103
    %s104 = sphi 0, %s101
    %s105 = sphi 0, %s104
    %s121 = sphi 0, %s105
  $region4: #{dgcnn_sem_seg_forward.14} parent=0 // loop_header_branch
    %12 = sbr.rel (%p10) target = $region8
  $region5: #{dgcnn_sem_seg_forward.14} parent=0 // loop_body
    %s14 = ssub.s32 %s9, 1
    %s15 = ssub.s32 %s9, 2
    %s22 = sadd.s32 1, %s17
    %p23 = scmp.ge.s32.totalorder %s22, 1
    %s24 = scalar_select %p23, 0, %s22
    %s25 = sadd.s32 1, %s16
    %s26 = scalar_select %p23, %s25, %s16
    %p27 = scmp.ge.s32.totalorder %s26, 2
    %s28 = scalar_select %p27, 0, %s26
    %s29 = ssub.s32 %s16, %s28
    %s30 = ssub.s32 %s17, %s24
    %s31 = sor.u32 %s29, %s30
    %p32 = scmp.eq.s32.totalorder %s31, 0
    %s34 = sadd.s32 %s33, 1
    %s35 = scalar_select %p32, %s33, %s34
    %p38 = pneg %p32
    %p39 = scmp.eq.s32.totalorder %s9, 1
    %p40 = por %p38, %p39
    %p41 = scmp.ne.s32.totalorder %s33, %s36
    %p42 = scmp.eq.s32.totalorder %s9, 0
    %p43 = por %p41, %p42
    %p44 = scmp.ne.s32.totalorder %s33, %s36
    %p45 = scmp.eq.s32.totalorder %s14, 1
    %p46 = por %p44, %p45
    %p47 = scmp.ne.s32.totalorder %s36, %s37
    %p48 = scmp.eq.s32.totalorder %s14, 0
    %p49 = por %p47, %p48
    %p50 = scmp.ne.s32.totalorder %s36, %s37
    %p51 = scmp.eq.s32.totalorder %s15, 1
    %p52 = por %p50, %p51
    %p54 = scmp.ne.s32.totalorder %s37, %s53
    %p55 = scmp.eq.s32.totalorder %s15, 0
    %p56 = por %p54, %p55
    %s58 = sadd.s32 %s57, 1
    %p61 = scmp.eq.s32.totalorder %s9, 1
    %p62 = scmp.ne.s32.totalorder %s57, %s59
    %p63 = scmp.eq.s32.totalorder %s9, 0
    %p64 = por %p62, %p63
    %p65 = scmp.ne.s32.totalorder %s57, %s59
    %p66 = scmp.eq.s32.totalorder %s14, 1
    %p67 = por %p65, %p66
    %p68 = scmp.ne.s32.totalorder %s59, %s60
    %p69 = scmp.eq.s32.totalorder %s14, 0
    %p70 = por %p68, %p69
    %p71 = scmp.ne.s32.totalorder %s59, %s60
    %p72 = scmp.eq.s32.totalorder %s15, 1
    %p73 = por %p71, %p72
    %p75 = scmp.ne.s32.totalorder %s60, %s74
    %p76 = scmp.eq.s32.totalorder %s15, 0
    %p77 = por %p75, %p76
    %s79 = sadd.s32 %s78, 1
    %p82 = scmp.eq.s32.totalorder %s9, 1
    %p83 = scmp.ne.s32.totalorder %s78, %s80
    %p84 = scmp.eq.s32.totalorder %s9, 0
    %p85 = por %p83, %p84
    %p86 = scmp.ne.s32.totalorder %s78, %s80
    %p87 = scmp.eq.s32.totalorder %s14, 1
    %p88 = por %p86, %p87
    %p89 = scmp.ne.s32.totalorder %s80, %s81
    %p90 = scmp.eq.s32.totalorder %s14, 0
    %p91 = por %p89, %p90
    %p92 = scmp.ne.s32.totalorder %s80, %s81
    %p93 = scmp.eq.s32.totalorder %s15, 1
    %p94 = por %p92, %p93
    %p96 = scmp.ne.s32.totalorder %s81, %s95
    %p97 = scmp.eq.s32.totalorder %s15, 0
    %p98 = por %p96, %p97
    %s99 = ssub.s32 %s16, %s28
    %p100 = scmp.eq.s32.totalorder %s99, 0
    %s102 = sadd.s32 %s101, 1
    %s103 = scalar_select %p100, %s101, %s102
    %p106 = pneg %p100
    %p107 = scmp.eq.s32.totalorder %s9, 1
    %p108 = por %p106, %p107
    %p109 = scmp.ne.s32.totalorder %s101, %s104
    %p110 = scmp.eq.s32.totalorder %s9, 0
    %p111 = por %p109, %p110
    %p112 = scmp.ne.s32.totalorder %s101, %s104
    %p113 = scmp.eq.s32.totalorder %s14, 1
    %p114 = por %p112, %p113
    %p115 = scmp.ne.s32.totalorder %s104, %s105
    %p116 = scmp.eq.s32.totalorder %s14, 0
    %p117 = por %p115, %p116
    %p118 = scmp.ne.s32.totalorder %s104, %s105
    %p119 = scmp.eq.s32.totalorder %s15, 1
    %p120 = por %p118, %p119
    %p122 = scmp.ne.s32.totalorder %s105, %s121
    %p123 = scmp.eq.s32.totalorder %s15, 0
    %p124 = por %p122, %p123
    %p125 = scmp.le.s32.totalorder 1, %s9
    %p126 = scmp.lt.s32.totalorder %s9, 3
    %p127 = pnand %p125, %p126
    %p128 = pneg %p127
    // Predicated region
    $region9: #{dgcnn_sem_seg_forward.14} parent=5 // pred_check
      _
    $region10: #{dgcnn_sem_seg_forward.14} parent=5 // pred_check_branch
      %130 = sbr.rel (%p127) target = $region12
    $region11: #{dgcnn_sem_seg_forward.14} parent=5 // pred_region
      %s131 = ssub.s32 %s9, 1
      // Predicated region
      $region13: #{dgcnn_sem_seg_forward.14} parent=11 // pred_check
        %p132 = pneg %p70
      $region14: #{dgcnn_sem_seg_forward.14} parent=11 // pred_check_branch
        %134 = sbr.rel (%p132) target = $region16
      $region15: #{dgcnn_sem_seg_forward.14} parent=11 // pred_region
        _
      $region16: #{dgcnn_sem_seg_forward.14} parent=11 // pred_fallthru
        _
      // Predicated region
      $region17: #{dgcnn_sem_seg_forward.14} parent=11 // pred_check
        %p135 = pneg %p91
      $region18: #{dgcnn_sem_seg_forward.14} parent=11 // pred_check_branch
        %137 = sbr.rel (%p135) target = $region20
      $region19: #{dgcnn_sem_seg_forward.14} parent=11 // pred_region
        _
      $region20: #{dgcnn_sem_seg_forward.14} parent=11 // pred_fallthru
        _
    $region12: #{dgcnn_sem_seg_forward.14} parent=5 // pred_fallthru
      _
    %p138 = scmp.lt.s32.totalorder %s9, 2
    // Predicated region
    $region21: #{dgcnn_sem_seg_forward.14} parent=5 // pred_check
      %p139 = pneg %p138
    $region22: #{dgcnn_sem_seg_forward.14} parent=5 // pred_check_branch
      %141 = sbr.rel (%p139) target = $region24
    $region23: #{dgcnn_sem_seg_forward.14} parent=5 // pred_region
      // Predicated region
      $region25: #{dgcnn_sem_seg_forward.14} parent=23 // pred_check
        %p142 = pneg %p43
      $region26: #{dgcnn_sem_seg_forward.14} parent=23 // pred_check_branch
        %144 = sbr.rel (%p142) target = $region28
      $region27: #{dgcnn_sem_seg_forward.14} parent=23 // pred_region
        %s145 = smul.u32 8, %s17
        %p146 = scmp.lt.s32.totalorder %s16, 1
        %s147 = scalar_select %p146, %s16, 1
        %p148 = scmp.lt.s32.totalorder %s145, 7
        %s149 = scalar_select %p148, %s145, 7
        %s150 = smul.addr %s149, 2
        %s151 = smul.addr %s147, 16
        %s152 = sadd.s32 %s150, %s151
        %s153 = smul.addr %s152, 4
        %s154 = scalar_lea.vmem %s0, %s153
        %s155 = smul.u32 8, %s17
      $region28: #{dgcnn_sem_seg_forward.14} parent=23 // pred_fallthru
        _
    $region24: #{dgcnn_sem_seg_forward.14} parent=5 // pred_fallthru
      _
    %p156 = scmp.le.s32.totalorder 1, %s9
    %p157 = scmp.lt.s32.totalorder %s9, 3
    %p158 = pnand %p156, %p157
    %p159 = pneg %p158
    // Predicated region
    $region29: #{dgcnn_sem_seg_forward.14} parent=5 // pred_check
      _
    $region30: #{dgcnn_sem_seg_forward.14} parent=5 // pred_check_branch
      %161 = sbr.rel (%p158) target = $region32
    $region31: #{dgcnn_sem_seg_forward.14} parent=5 // pred_region
      %s162 = ssub.s32 %s9, 1
      %s163 = smul.u32 8, %s19
      %p164 = scmp.lt.s32.totalorder %s18, 1
      %s165 = scalar_select %p164, %s18, 1
      %p166 = scmp.lt.s32.totalorder %s163, 7
      %s167 = scalar_select %p166, %s163, 7
      %s168 = smul.addr %s167, 2
      %s169 = smul.addr %s165, 16
      %s170 = sadd.s32 %s168, %s169
      %s171 = smul.addr %s170, 4
      %s172 = scalar_lea.vmem %s0, %s171
      %p173 = pneg %p49
      %p174 = pneg %p46
      %p175 = pneg %p70
      %p176 = pneg %p67
      %p177 = pneg %p91
      %p178 = pneg %p88
      %p179 = pneg %p117
      %p180 = pneg %p114
      %p181 = scmp.lt.s32.totalorder %s18, 1
      %s182 = scalar_select %p181, %s18, 1
      %s183 = scalar_lea.vmem %s3, %s182
      %s184 = smul.u32 8, %s19
      %p185 = scmp.lt.s32.totalorder %s18, 1
      %s186 = scalar_select %p185, %s18, 1
      %p187 = scmp.lt.s32.totalorder %s184, 7
      %s188 = scalar_select %p187, %s184, 7
      %s189 = smul.addr %s188, 2
      %s190 = smul.addr %s186, 16
      %s191 = sadd.s32 %s189, %s190
      %s192 = smul.addr %s191, 4
      %s193 = scalar_lea.vmem %s0, %s192
      %s194 = smul.u32 8, %s19
      %p195 = scmp.lt.s32.totalorder %s18, 1
      %s196 = scalar_select %p195, %s18, 1
      %s197 = scalar_lea.vmem %s3, %s196
      %v199 = vld [vmem:[%s193] sm:$0xff]
      %v200 = vld [vmem:[%s193 + $0x8] sm:$0xff]
      %v201 = vld [vmem:[%s193 + $0x10] sm:$0xff]
      %v202 = vld [vmem:[%s193 + $0x18] sm:$0xff]
      %v203 = vld [vmem:[%s193 + $0x20] sm:$0xff]
      %v204 = vld [vmem:[%s193 + $0x28] sm:$0xff]
      %v205 = vld [vmem:[%s193 + $0x30] sm:$0xff]
      %v206 = vld [vmem:[%s193 + $0x38] sm:$0xff]
      %v207 = vld [vmem:[%s1] sm:$0xf]
      %v208 = vld [vmem:[%s1 + $0x4] sm:$0xf]
      %v209 = vld [vmem:[%s1 + $0x8] sm:$0xf]
      %v210 = vld [vmem:[%s1 + $0xc] sm:$0xf]
      %v211 = vld [vmem:[%s1 + $0x10] sm:$0xf]
      %v212 = vld [vmem:[%s1 + $0x14] sm:$0xf]
      %v213 = vld [vmem:[%s1 + $0x18] sm:$0xf]
      %v214 = vld [vmem:[%s1 + $0x1c] sm:$0xf]
      %v215 = vld [vmem:[%s1 + $0x20] sm:$0xf]
      %v216 = vld [vmem:[%s1 + $0x24] sm:$0xf]
      %v217 = vld [vmem:[%s1 + $0x28] sm:$0xf]
      %v218 = vld [vmem:[%s1 + $0x2c] sm:$0xf]
      %v219 = vld [vmem:[%s1 + $0x30] sm:$0xf]
      %v220 = vld [vmem:[%s1 + $0x34] sm:$0xf]
      %v221 = vld [vmem:[%s1 + $0x38] sm:$0xf]
      %v222 = vld [vmem:[%s1 + $0x3c] sm:$0xf]
      %v223 = vld [vmem:[%s1 + $0x40] sm:$0xf]
      %v224 = vld [vmem:[%s1 + $0x44] sm:$0xf]
      %v225 = vld [vmem:[%s1 + $0x48] sm:$0xf]
      %v226 = vld [vmem:[%s1 + $0x4c] sm:$0xf]
      %v227 = vld [vmem:[%s1 + $0x50] sm:$0xf]
      %v228 = vld [vmem:[%s1 + $0x54] sm:$0xf]
      %v229 = vld [vmem:[%s1 + $0x58] sm:$0xf]
      %v230 = vld [vmem:[%s1 + $0x5c] sm:$0xf]
      %v231 = vld [vmem:[%s2] sm:$0x1]
      %v233 = vlaneseq
      %v234 = vshrl.u32 %v233, 7
      %v235 = vsub.s32 0, %v234
      %v236 = vrot.slane %v231, %v235
      %v246 = vunpack.c.l.b16 %v199
      %v247 = vunpack.c.h.b16 %v199
      %v248 = vunpack.c.l.b16 %v200
      %v249 = vunpack.c.h.b16 %v200
      %v250 = vunpack.c.l.b16 %v201
      %v251 = vunpack.c.h.b16 %v201
      %v252 = vunpack.c.l.b16 %v202
      %v253 = vunpack.c.h.b16 %v202
      %v254 = vunpack.c.l.b16 %v203
      %v255 = vunpack.c.h.b16 %v203
      %v256 = vunpack.c.l.b16 %v204
      %v257 = vunpack.c.h.b16 %v204
      %v258 = vunpack.c.l.b16 %v205
      %v259 = vunpack.c.h.b16 %v205
      %v260 = vunpack.c.l.b16 %v206
      %v261 = vunpack.c.h.b16 %v206
      %v262 = vpack.c.b16 %v248, %v246
      %v263 = vpack.c.b16 %v249, %v247
      %v264 = vpack.c.b16 %v252, %v250
      %v265 = vpack.c.b16 %v253, %v251
      %v266 = vpack.c.b16 %v256, %v254
      %v267 = vpack.c.b16 %v257, %v255
      %v268 = vpack.c.b16 %v260, %v258
      %v269 = vpack.c.b16 %v261, %v259
      %v298 = vunpack.c.l.b16 %v207
      %v299 = vunpack.c.l.b16 %v208
      %v300 = vunpack.c.l.b16 %v209
      %v301 = vunpack.c.l.b16 %v210
      %v302 = vunpack.c.l.b16 %v211
      %v303 = vunpack.c.l.b16 %v212
      %v304 = vunpack.c.l.b16 %v213
      %v305 = vunpack.c.l.b16 %v214
      %v306 = vunpack.c.l.b16 %v215
      %v307 = vunpack.c.l.b16 %v216
      %v308 = vunpack.c.l.b16 %v217
      %v309 = vunpack.c.l.b16 %v218
      %v310 = vunpack.c.l.b16 %v219
      %v311 = vunpack.c.l.b16 %v220
      %v312 = vunpack.c.l.b16 %v221
      %v313 = vunpack.c.l.b16 %v222
      %v314 = vunpack.c.l.b16 %v223
      %v315 = vunpack.c.l.b16 %v224
      %v316 = vunpack.c.l.b16 %v225
      %v317 = vunpack.c.l.b16 %v226
      %v318 = vunpack.c.l.b16 %v227
      %v319 = vunpack.c.l.b16 %v228
      %v320 = vunpack.c.l.b16 %v229
      %v321 = vunpack.c.l.b16 %v230
      %v322 = vpack.c.b16 %v299, %v298
      %v323 = vpack.c.b16 %v301, %v300
      %v324 = vpack.c.b16 %v303, %v302
      %v325 = vpack.c.b16 %v305, %v304
      %v326 = vpack.c.b16 %v307, %v306
      %v327 = vpack.c.b16 %v309, %v308
      %v328 = vpack.c.b16 %v311, %v310
      %v329 = vpack.c.b16 %v313, %v312
      %v330 = vpack.c.b16 %v315, %v314
      %v331 = vpack.c.b16 %v317, %v316
      %v332 = vpack.c.b16 %v319, %v318
      %v333 = vpack.c.b16 %v321, %v320
      %vm346 = vcmask 523264
      %v348 = vsel %vm346, %v263, 0
      %v351 = vsel %vm346, %v265, 0
      %v354 = vsel %vm346, %v267, 0
      %v357 = vsel %vm346, %v269, 0
      %359 = vmatprep.subr.bf16.mxu0 0
      %360 = vmatpush1.bf16.msra.mxu0 %v322
      %361 = vmatprep.subr.bf16.mxu0 0
      %362 = vmatpush1.bf16.msra.mxu0 %v323
      %363 = vmatprep.subr.bf16.mxu0 0
      %364 = vmatpush1.bf16.msra.mxu0 %v324
      %365 = vmatprep.subr.bf16.mxu0 0
      %366 = vmatpush1.bf16.msra.mxu0 %v325
      %367 = vmatprep.subr.bf16.mxu0 0
      %368 = vmatpush1.bf16.msra.mxu0 %v326
      %369 = vmatprep.subr.bf16.mxu0 0
      %370 = vmatpush1.bf16.msra.mxu0 %v327
      %371 = vmatprep.subr.bf16.mxu0 0
      %372 = vmatpush1.bf16.msra.mxu0 %v328
      %373 = vmatprep.subr.bf16.mxu0 0
      %374 = vmatpush1.bf16.msra.mxu0 %v329
      %375 = vmatprep.subr.bf16.mxu0 0
      %376 = vmatpush1.bf16.msra.mxu0 %v330
      %377 = vmatprep.subr.bf16.mxu0 0
      %378 = vmatpush1.bf16.msra.mxu0 %v331
      %379 = vmatprep.subr.bf16.mxu0 0
      %380 = vmatpush1.bf16.msra.mxu0 %v332
      %381 = vmatprep.subr.bf16.mxu0 0
      %382 = vmatpush1.bf16.msra.mxu0 %v333
      %383 = vmatprep.subr.bf16.mxu0 0
      %384 = vmatpush1.bf16.msra.mxu0 0
      %385 = vmatprep.subr.bf16.mxu0 0
      %386 = vmatpush1.bf16.msra.mxu0 0
      %387 = vmatprep.subr.bf16.mxu0 0
      %388 = vmatpush1.bf16.msra.mxu0 0
      %389 = vmatprep.subr.bf16.mxu0 0
      %390 = vmatpush1.bf16.msra.mxu0 0
      %391 = vmatprep.mubr.bf16.mxu0 %v348
      %392 = vmatmul.mubr.bf16.gmra.mrb[0].mxu0 %v262
      %v393 = vpop.f32.mrb[0].mxu0
      %v394 = vadd.f32 %v236, %v393
      %v395 = vpop.f32.mrb[0].mxu0
      %v396 = vpop.f32.mrb[0].mxu0
      %v397 = vadd.f32 %v236, %v396
      %v398 = vpop.f32.mrb[0].mxu0
      %399 = vmatprep.mubr.bf16.mxu0 %v351
      %400 = vmatmul.mubr.bf16.gmra.mrb[0].mxu0 %v264
      %v401 = vpop.f32.mrb[0].mxu0
      %v402 = vadd.f32 %v236, %v401
      %v403 = vpop.f32.mrb[0].mxu0
      %v404 = vpop.f32.mrb[0].mxu0
      %v405 = vadd.f32 %v236, %v404
      %v406 = vpop.f32.mrb[0].mxu0
      %407 = vmatprep.mubr.bf16.mxu0 %v354
      %408 = vmatmul.mubr.bf16.gmra.mrb[0].mxu0 %v266
      %v409 = vpop.f32.mrb[0].mxu0
      %v410 = vadd.f32 %v236, %v409
      %v411 = vpop.f32.mrb[0].mxu0
      %v412 = vpop.f32.mrb[0].mxu0
      %v413 = vadd.f32 %v236, %v412
      %v414 = vpop.f32.mrb[0].mxu0
      %415 = vmatprep.mubr.bf16.mxu0 %v357
      %416 = vmatmul.mubr.bf16.gmra.mrb[0].mxu0 %v268
      %v417 = vpop.f32.mrb[0].mxu0
      %v418 = vadd.f32 %v236, %v417
      %v419 = vpop.f32.mrb[0].mxu0
      %v420 = vpop.f32.mrb[0].mxu0
      %v421 = vadd.f32 %v236, %v420
      %v422 = vpop.f32.mrb[0].mxu0
      %423 = vdwg.mxu0
      %vm424 = vcmp.ge.f32.partialorder %v394, 0.0
      %vm425 = vcmp.ge.f32.partialorder %v397, 0.0
      %vm426 = vcmp.ge.f32.partialorder %v402, 0.0
      %vm427 = vcmp.ge.f32.partialorder %v405, 0.0
      %vm428 = vcmp.ge.f32.partialorder %v410, 0.0
      %vm429 = vcmp.ge.f32.partialorder %v413, 0.0
      %vm430 = vcmp.ge.f32.partialorder %v418, 0.0
      %vm431 = vcmp.ge.f32.partialorder %v421, 0.0
      %v432 = vmul.f32 %v394, 0.2
      %v433 = vmul.f32 %v397, 0.2
      %v434 = vmul.f32 %v402, 0.2
      %v435 = vmul.f32 %v405, 0.2
      %v436 = vmul.f32 %v410, 0.2
      %v437 = vmul.f32 %v413, 0.2
      %v438 = vmul.f32 %v418, 0.2
      %v439 = vmul.f32 %v421, 0.2
      %v440 = vsel %vm424, %v394, %v432
      %v441 = vsel %vm425, %v397, %v433
      %v442 = vsel %vm426, %v402, %v434
      %v443 = vsel %vm427, %v405, %v435
      %v444 = vsel %vm428, %v410, %v436
      %v445 = vsel %vm429, %v413, %v437
      %v446 = vsel %vm430, %v418, %v438
      %v447 = vsel %vm431, %v421, %v439
      %v448 = vsel %vm346, %v440, -inf
      %v449 = vsel %vm346, %v441, -inf
      %v450 = vsel %vm346, %v442, -inf
      %v451 = vsel %vm346, %v443, -inf
      %v452 = vsel %vm346, %v444, -inf
      %v453 = vmax.f32 %v448, %v452
      %v454 = vsel %vm346, %v445, -inf
      %v455 = vmax.f32 %v449, %v454
      %v456 = vsel %vm346, %v446, -inf
      %v457 = vmax.f32 %v450, %v456
      %v458 = vsel %vm346, %v447, -inf
      %v459 = vmax.f32 %v451, %v458
      %v460 = vmax.f32 %v453, %v455
      %v461 = vmax.f32 %v457, %v459
      %v462 = vmax.f32 %v460, %v461
      %v463 = vrot.slane %v462, 4
      %v464 = vmax.f32 %v462, %v463
      %v465 = vrot.slane %v464, 2
      %v466 = vmax.f32 %v464, %v465
      %v467 = vrot.slane %v466, 1
      %v468 = vmax.f32 %v466, %v467
      %p469 = scmp.eq.s32.totalorder %s19, 0
      // Predicated region
      $region33: #{dgcnn_sem_seg_forward.14} parent=31 // pred_check
        %p470 = pneg %p469
      $region34: #{dgcnn_sem_seg_forward.14} parent=31 // pred_check_branch
        %472 = sbr.rel (%p470) target = $region36
      $region35: #{dgcnn_sem_seg_forward.14} parent=31 // pred_region
        %vm473 = vcmask 516096
        %474 = vst.msk [vmem:[%s197] sm:$0x1] %vm473, %v468
      $region36: #{dgcnn_sem_seg_forward.14} parent=31 // pred_fallthru
        _
      %p475 = scmp.gt.s32.totalorder %s19, 0
      // Predicated region
      $region37: #{dgcnn_sem_seg_forward.14} parent=31 // pred_check
        %p476 = pneg %p475
      $region38: #{dgcnn_sem_seg_forward.14} parent=31 // pred_check_branch
        %478 = sbr.rel (%p476) target = $region40
      $region39: #{dgcnn_sem_seg_forward.14} parent=31 // pred_region
        %v479 = vld [vmem:[%s197] sm:$0x1]
        %v480 = vmax.f32 %v479, %v468
        %vm481 = vcmask 516096
        %482 = vst.msk [vmem:[%s197] sm:$0x1] %vm481, %v480
      $region40: #{dgcnn_sem_seg_forward.14} parent=31 // pred_fallthru
        _
      %p483 = scmp.lt.s32.totalorder %s18, 1
      %s484 = scalar_select %p483, %s18, 1
      %s485 = scalar_lea.vmem %s3, %s484
      // Predicated region
      $region41: #{dgcnn_sem_seg_forward.14} parent=31 // pred_check
        %p486 = pneg %p114
      $region42: #{dgcnn_sem_seg_forward.14} parent=31 // pred_check_branch
        %488 = sbr.rel (%p486) target = $region44
      $region43: #{dgcnn_sem_seg_forward.14} parent=31 // pred_region
        _
      $region44: #{dgcnn_sem_seg_forward.14} parent=31 // pred_fallthru
        _
    $region32: #{dgcnn_sem_seg_forward.14} parent=5 // pred_fallthru
      _
    %p489 = scmp.le.s32.totalorder 2, %s9
    // Predicated region
    $region45: #{dgcnn_sem_seg_forward.14} parent=5 // pred_check
      %p490 = pneg %p489
    $region46: #{dgcnn_sem_seg_forward.14} parent=5 // pred_check_branch
      %492 = sbr.rel (%p490) target = $region48
    $region47: #{dgcnn_sem_seg_forward.14} parent=5 // pred_region
      %s493 = ssub.s32 %s9, 2
      // Predicated region
      $region49: #{dgcnn_sem_seg_forward.14} parent=47 // pred_check
        %p494 = pneg %p120
      $region50: #{dgcnn_sem_seg_forward.14} parent=47 // pred_check_branch
        %496 = sbr.rel (%p494) target = $region52
      $region51: #{dgcnn_sem_seg_forward.14} parent=47 // pred_region
        %p497 = scmp.lt.s32.totalorder %s20, 1
        %s498 = scalar_select %p497, %s20, 1
        %s499 = scalar_lea.vmem %s3, %s498
      $region52: #{dgcnn_sem_seg_forward.14} parent=47 // pred_fallthru
        _
    $region48: #{dgcnn_sem_seg_forward.14} parent=5 // pred_fallthru
      _
  $region6: #{dgcnn_sem_seg_forward.14} parent=0 // loop_footer
    %s13 = sadd.s32 1, %s9
  $region7: #{dgcnn_sem_seg_forward.14} parent=0 // loop_footer_branch
    %8 = sbr.rel target = $region3
  $region8: #{dgcnn_sem_seg_forward.14} parent=0 // loop_exit
    _

// kernel: dgcnn_sem_seg_forward.15
$region0: #{dgcnn_sem_seg_forward.15}
  #allocation0 [shape = 'u32[]', space=smem, size = 0x4, offset = 0x4, fixed_abs, tag = 'smem constant byte address 0x4 - core index']
  #allocation1 [shape = 'u32[144,128]{1,0:T(1,128)}', space=vmem, size = 0x12000, scoped, tag = 'internal scratch']
  %s0 = inlined_call_operand.vmem [shape: bf16[2,64,192], index: 0, kind: input, shape index: {}]
  %s1 = inlined_call_operand.vmem [shape: f32[2,1,512], index: 1, kind: input, shape index: {}]
  %s2 = inlined_call_operand.vmem [shape: bf16[192,512], index: 2, kind: input, shape index: {}]
  %s3 = inlined_call_operand.vmem [shape: bf16[512,256], index: 3, kind: input, shape index: {}]
  %s4 = inlined_call_operand.vmem [shape: f32[1,256], index: 4, kind: input, shape index: {}]
  %s5 = inlined_call_operand.vmem [shape: bf16[256,13], index: 5, kind: input, shape index: {}]
  %s6 = inlined_call_operand.vmem [shape: f32[2,64,13], index: 6, kind: output, shape index: {}]
  %s7 = sld [smem:[#allocation0]]
  $region57: #{dgcnn_sem_seg_forward.15} parent=0
    _
  %s9 = ssub.s32 1, %s7
  %s10 = scalar_select 0, %s9, %s7
  loop: start=0, step=1, limit=4
  $region2: #{dgcnn_sem_seg_forward.15} parent=0 // loop_pre_header
    _
  $region3: #{dgcnn_sem_seg_forward.15} parent=0 // loop_header
    %s12 = sphi 0, %s16
    %p13 = scmp.ge.s32.totalorder %s12, 4
    %s19 = sphi 0, %s31
    %s20 = sphi 0, %s27
    %s21 = sphi 0, %s19
    %s22 = sphi 0, %s20
    %s23 = sphi 0, %s21
    %s24 = sphi 0, %s22
    %s36 = sphi 0, %s38
    %s39 = sphi 0, %s36
    %s40 = sphi 0, %s39
    %s56 = sphi 0, %s40
    %s62 = sphi 0, %s64
    %s65 = sphi 0, %s62
    %s66 = sphi 0, %s65
    %s82 = sphi 0, %s66
    %s86 = sphi 0, %s86
    %s88 = sphi 0, %s86
    %s89 = sphi 0, %s88
    %s103 = sphi 0, %s89
    %s107 = sphi 0, %s107
    %s109 = sphi 0, %s107
    %s110 = sphi 0, %s109
    %s124 = sphi 0, %s110
    %s128 = sphi 0, %s128
    %s130 = sphi 0, %s128
    %s131 = sphi 0, %s130
    %s145 = sphi 0, %s131
    %s149 = sphi 0, %s149
    %s151 = sphi 0, %s149
    %s152 = sphi 0, %s151
    %s166 = sphi 0, %s152
    %s174 = sphi 0, %s176
    %s177 = sphi 0, %s174
    %s178 = sphi 0, %s177
    %s194 = sphi 0, %s178
  $region4: #{dgcnn_sem_seg_forward.15} parent=0 // loop_header_branch
    %15 = sbr.rel (%p13) target = $region8
  $region5: #{dgcnn_sem_seg_forward.15} parent=0 // loop_body
    %s17 = ssub.s32 %s12, 1
    %s18 = ssub.s32 %s12, 2
    %s25 = sadd.s32 1, %s20
    %p26 = scmp.ge.s32.totalorder %s25, 1
    %s27 = scalar_select %p26, 0, %s25
    %s28 = sadd.s32 1, %s19
    %s29 = scalar_select %p26, %s28, %s19
    %p30 = scmp.ge.s32.totalorder %s29, 2
    %s31 = scalar_select %p30, 0, %s29
    %s32 = ssub.s32 %s19, %s31
    %s33 = ssub.s32 %s20, %s27
    %s34 = sor.u32 %s32, %s33
    %p35 = scmp.eq.s32.totalorder %s34, 0
    %s37 = sadd.s32 %s36, 1
    %s38 = scalar_select %p35, %s36, %s37
    %p41 = pneg %p35
    %p42 = scmp.eq.s32.totalorder %s12, 1
    %p43 = por %p41, %p42
    %p44 = scmp.ne.s32.totalorder %s36, %s39
    %p45 = scmp.eq.s32.totalorder %s12, 0
    %p46 = por %p44, %p45
    %p47 = scmp.ne.s32.totalorder %s36, %s39
    %p48 = scmp.eq.s32.totalorder %s17, 1
    %p49 = por %p47, %p48
    %p50 = scmp.ne.s32.totalorder %s39, %s40
    %p51 = scmp.eq.s32.totalorder %s17, 0
    %p52 = por %p50, %p51
    %p53 = scmp.ne.s32.totalorder %s39, %s40
    %p54 = scmp.eq.s32.totalorder %s18, 1
    %p55 = por %p53, %p54
    %p57 = scmp.ne.s32.totalorder %s40, %s56
    %p58 = scmp.eq.s32.totalorder %s18, 0
    %p59 = por %p57, %p58
    %s60 = ssub.s32 %s19, %s31
    %p61 = scmp.eq.s32.totalorder %s60, 0
    %s63 = sadd.s32 %s62, 1
    %s64 = scalar_select %p61, %s62, %s63
    %p67 = pneg %p61
    %p68 = scmp.eq.s32.totalorder %s12, 1
    %p69 = por %p67, %p68
    %p70 = scmp.ne.s32.totalorder %s62, %s65
    %p71 = scmp.eq.s32.totalorder %s12, 0
    %p72 = por %p70, %p71
    %p73 = scmp.ne.s32.totalorder %s62, %s65
    %p74 = scmp.eq.s32.totalorder %s17, 1
    %p75 = por %p73, %p74
    %p76 = scmp.ne.s32.totalorder %s65, %s66
    %p77 = scmp.eq.s32.totalorder %s17, 0
    %p78 = por %p76, %p77
    %p79 = scmp.ne.s32.totalorder %s65, %s66
    %p80 = scmp.eq.s32.totalorder %s18, 1
    %p81 = por %p79, %p80
    %p83 = scmp.ne.s32.totalorder %s66, %s82
    %p84 = scmp.eq.s32.totalorder %s18, 0
    %p85 = por %p83, %p84
    %s87 = sadd.s32 %s86, 1
    %p90 = scmp.eq.s32.totalorder %s12, 1
    %p91 = scmp.ne.s32.totalorder %s86, %s88
    %p92 = scmp.eq.s32.totalorder %s12, 0
    %p93 = por %p91, %p92
    %p94 = scmp.ne.s32.totalorder %s86, %s88
    %p95 = scmp.eq.s32.totalorder %s17, 1
    %p96 = por %p94, %p95
    %p97 = scmp.ne.s32.totalorder %s88, %s89
    %p98 = scmp.eq.s32.totalorder %s17, 0
    %p99 = por %p97, %p98
    %p100 = scmp.ne.s32.totalorder %s88, %s89
    %p101 = scmp.eq.s32.totalorder %s18, 1
    %p102 = por %p100, %p101
    %p104 = scmp.ne.s32.totalorder %s89, %s103
    %p105 = scmp.eq.s32.totalorder %s18, 0
    %p106 = por %p104, %p105
    %s108 = sadd.s32 %s107, 1
    %p111 = scmp.eq.s32.totalorder %s12, 1
    %p112 = scmp.ne.s32.totalorder %s107, %s109
    %p113 = scmp.eq.s32.totalorder %s12, 0
    %p114 = por %p112, %p113
    %p115 = scmp.ne.s32.totalorder %s107, %s109
    %p116 = scmp.eq.s32.totalorder %s17, 1
    %p117 = por %p115, %p116
    %p118 = scmp.ne.s32.totalorder %s109, %s110
    %p119 = scmp.eq.s32.totalorder %s17, 0
    %p120 = por %p118, %p119
    %p121 = scmp.ne.s32.totalorder %s109, %s110
    %p122 = scmp.eq.s32.totalorder %s18, 1
    %p123 = por %p121, %p122
    %p125 = scmp.ne.s32.totalorder %s110, %s124
    %p126 = scmp.eq.s32.totalorder %s18, 0
    %p127 = por %p125, %p126
    %s129 = sadd.s32 %s128, 1
    %p132 = scmp.eq.s32.totalorder %s12, 1
    %p133 = scmp.ne.s32.totalorder %s128, %s130
    %p134 = scmp.eq.s32.totalorder %s12, 0
    %p135 = por %p133, %p134
    %p136 = scmp.ne.s32.totalorder %s128, %s130
    %p137 = scmp.eq.s32.totalorder %s17, 1
    %p138 = por %p136, %p137
    %p139 = scmp.ne.s32.totalorder %s130, %s131
    %p140 = scmp.eq.s32.totalorder %s17, 0
    %p141 = por %p139, %p140
    %p142 = scmp.ne.s32.totalorder %s130, %s131
    %p143 = scmp.eq.s32.totalorder %s18, 1
    %p144 = por %p142, %p143
    %p146 = scmp.ne.s32.totalorder %s131, %s145
    %p147 = scmp.eq.s32.totalorder %s18, 0
    %p148 = por %p146, %p147
    %s150 = sadd.s32 %s149, 1
    %p153 = scmp.eq.s32.totalorder %s12, 1
    %p154 = scmp.ne.s32.totalorder %s149, %s151
    %p155 = scmp.eq.s32.totalorder %s12, 0
    %p156 = por %p154, %p155
    %p157 = scmp.ne.s32.totalorder %s149, %s151
    %p158 = scmp.eq.s32.totalorder %s17, 1
    %p159 = por %p157, %p158
    %p160 = scmp.ne.s32.totalorder %s151, %s152
    %p161 = scmp.eq.s32.totalorder %s17, 0
    %p162 = por %p160, %p161
    %p163 = scmp.ne.s32.totalorder %s151, %s152
    %p164 = scmp.eq.s32.totalorder %s18, 1
    %p165 = por %p163, %p164
    %p167 = scmp.ne.s32.totalorder %s152, %s166
    %p168 = scmp.eq.s32.totalorder %s18, 0
    %p169 = por %p167, %p168
    %s170 = ssub.s32 %s19, %s31
    %s171 = ssub.s32 %s20, %s27
    %s172 = sor.u32 %s170, %s171
    %p173 = scmp.eq.s32.totalorder %s172, 0
    %s175 = sadd.s32 %s174, 1
    %s176 = scalar_select %p173, %s174, %s175
    %p179 = pneg %p173
    %p180 = scmp.eq.s32.totalorder %s12, 1
    %p181 = por %p179, %p180
    %p182 = scmp.ne.s32.totalorder %s174, %s177
    %p183 = scmp.eq.s32.totalorder %s12, 0
    %p184 = por %p182, %p183
    %p185 = scmp.ne.s32.totalorder %s174, %s177
    %p186 = scmp.eq.s32.totalorder %s17, 1
    %p187 = por %p185, %p186
    %p188 = scmp.ne.s32.totalorder %s177, %s178
    %p189 = scmp.eq.s32.totalorder %s17, 0
    %p190 = por %p188, %p189
    %p191 = scmp.ne.s32.totalorder %s177, %s178
    %p192 = scmp.eq.s32.totalorder %s18, 1
    %p193 = por %p191, %p192
    %p195 = scmp.ne.s32.totalorder %s178, %s194
    %p196 = scmp.eq.s32.totalorder %s18, 0
    %p197 = por %p195, %p196
    %p198 = scmp.le.s32.totalorder 1, %s12
    %p199 = scmp.lt.s32.totalorder %s12, 3
    %p200 = pnand %p198, %p199
    %p201 = pneg %p200
    // Predicated region
    $region9: #{dgcnn_sem_seg_forward.15} parent=5 // pred_check
      _
    $region10: #{dgcnn_sem_seg_forward.15} parent=5 // pred_check_branch
      %203 = sbr.rel (%p200) target = $region12
    $region11: #{dgcnn_sem_seg_forward.15} parent=5 // pred_region
      %s204 = ssub.s32 %s12, 1
      // Predicated region
      $region13: #{dgcnn_sem_seg_forward.15} parent=11 // pred_check
        %p205 = pneg %p99
      $region14: #{dgcnn_sem_seg_forward.15} parent=11 // pred_check_branch
        %207 = sbr.rel (%p205) target = $region16
      $region15: #{dgcnn_sem_seg_forward.15} parent=11 // pred_region
        _
      $region16: #{dgcnn_sem_seg_forward.15} parent=11 // pred_fallthru
        _
      // Predicated region
      $region17: #{dgcnn_sem_seg_forward.15} parent=11 // pred_check
        %p208 = pneg %p120
      $region18: #{dgcnn_sem_seg_forward.15} parent=11 // pred_check_branch
        %210 = sbr.rel (%p208) target = $region20
      $region19: #{dgcnn_sem_seg_forward.15} parent=11 // pred_region
        _
      $region20: #{dgcnn_sem_seg_forward.15} parent=11 // pred_fallthru
        _
      // Predicated region
      $region21: #{dgcnn_sem_seg_forward.15} parent=11 // pred_check
        %p211 = pneg %p141
      $region22: #{dgcnn_sem_seg_forward.15} parent=11 // pred_check_branch
        %213 = sbr.rel (%p211) target = $region24
      $region23: #{dgcnn_sem_seg_forward.15} parent=11 // pred_region
        _
      $region24: #{dgcnn_sem_seg_forward.15} parent=11 // pred_fallthru
        _
      // Predicated region
      $region25: #{dgcnn_sem_seg_forward.15} parent=11 // pred_check
        %p214 = pneg %p162
      $region26: #{dgcnn_sem_seg_forward.15} parent=11 // pred_check_branch
        %216 = sbr.rel (%p214) target = $region28
      $region27: #{dgcnn_sem_seg_forward.15} parent=11 // pred_region
        _
      $region28: #{dgcnn_sem_seg_forward.15} parent=11 // pred_fallthru
        _
    $region12: #{dgcnn_sem_seg_forward.15} parent=5 // pred_fallthru
      _
    %p217 = scmp.lt.s32.totalorder %s12, 2
    // Predicated region
    $region29: #{dgcnn_sem_seg_forward.15} parent=5 // pred_check
      %p218 = pneg %p217
    $region30: #{dgcnn_sem_seg_forward.15} parent=5 // pred_check_branch
      %220 = sbr.rel (%p218) target = $region32
    $region31: #{dgcnn_sem_seg_forward.15} parent=5 // pred_region
      // Predicated region
      $region33: #{dgcnn_sem_seg_forward.15} parent=31 // pred_check
        %p221 = pneg %p46
      $region34: #{dgcnn_sem_seg_forward.15} parent=31 // pred_check_branch
        %223 = sbr.rel (%p221) target = $region36
      $region35: #{dgcnn_sem_seg_forward.15} parent=31 // pred_region
        %s224 = smul.u32 8, %s20
        %p225 = scmp.lt.s32.totalorder %s19, 1
        %s226 = scalar_select %p225, %s19, 1
        %p227 = scmp.lt.s32.totalorder %s224, 7
        %s228 = scalar_select %p227, %s224, 7
        %s229 = smul.addr %s228, 2
        %s230 = smul.addr %s226, 16
        %s231 = sadd.s32 %s229, %s230
        %s232 = smul.addr %s231, 4
        %s233 = scalar_lea.vmem %s0, %s232
        %s234 = smul.u32 8, %s20
      $region36: #{dgcnn_sem_seg_forward.15} parent=31 // pred_fallthru
        _
      // Predicated region
      $region37: #{dgcnn_sem_seg_forward.15} parent=31 // pred_check
        %p235 = pneg %p72
      $region38: #{dgcnn_sem_seg_forward.15} parent=31 // pred_check_branch
        %237 = sbr.rel (%p235) target = $region40
      $region39: #{dgcnn_sem_seg_forward.15} parent=31 // pred_region
        %p238 = scmp.lt.s32.totalorder %s19, 1
        %s239 = scalar_select %p238, %s19, 1
        %s240 = smul.addr %s239, 4
        %s241 = scalar_lea.vmem %s1, %s240
      $region40: #{dgcnn_sem_seg_forward.15} parent=31 // pred_fallthru
        _
    $region32: #{dgcnn_sem_seg_forward.15} parent=5 // pred_fallthru
      _
    %p242 = scmp.le.s32.totalorder 1, %s12
    %p243 = scmp.lt.s32.totalorder %s12, 3
    %p244 = pnand %p242, %p243
    %p245 = pneg %p244
    // Predicated region
    $region41: #{dgcnn_sem_seg_forward.15} parent=5 // pred_check
      _
    $region42: #{dgcnn_sem_seg_forward.15} parent=5 // pred_check_branch
      %247 = sbr.rel (%p244) target = $region44
    $region43: #{dgcnn_sem_seg_forward.15} parent=5 // pred_region
      %s248 = ssub.s32 %s12, 1
      %s249 = smul.u32 8, %s22
      %p250 = scmp.lt.s32.totalorder %s21, 1
      %s251 = scalar_select %p250, %s21, 1
      %p252 = scmp.lt.s32.totalorder %s249, 7
      %s253 = scalar_select %p252, %s249, 7
      %s254 = smul.addr %s253, 2
      %s255 = smul.addr %s251, 16
      %s256 = sadd.s32 %s254, %s255
      %s257 = smul.addr %s256, 4
      %s258 = scalar_lea.vmem %s0, %s257
      %p259 = pneg %p52
      %p260 = pneg %p49
      %p261 = scmp.lt.s32.totalorder %s21, 1
      %s262 = scalar_select %p261, %s21, 1
      %s263 = smul.addr %s262, 4
      %s264 = scalar_lea.vmem %s1, %s263
      %p265 = pneg %p78
      %p266 = pneg %p75
      %p267 = pneg %p99
      %p268 = pneg %p96
      %p269 = pneg %p120
      %p270 = pneg %p117
      %p271 = pneg %p141
      %p272 = pneg %p138
      %p273 = pneg %p162
      %p274 = pneg %p159
      %p275 = pneg %p190
      %p276 = pneg %p187
      %s277 = smul.u32 8, %s22
      %p278 = scmp.lt.s32.totalorder %s21, 1
      %s279 = scalar_select %p278, %s21, 1
      %p280 = scmp.lt.s32.totalorder %s277, 7
      %s281 = scalar_select %p280, %s277, 7
      %s282 = smul.addr %s279, 8
      %s283 = sadd.s32 %s281, %s282
      %s284 = smul.addr %s283, 8
      %s285 = scalar_lea.vmem %s6, %s284
      %s286 = smul.u32 8, %s22
      %p287 = scmp.lt.s32.totalorder %s21, 1
      %s288 = scalar_select %p287, %s21, 1
      %p289 = scmp.lt.s32.totalorder %s286, 7
      %s290 = scalar_select %p289, %s286, 7
      %s291 = smul.addr %s290, 2
      %s292 = smul.addr %s288, 16
      %s293 = sadd.s32 %s291, %s292
      %s294 = smul.addr %s293, 4
      %s295 = scalar_lea.vmem %s0, %s294
      %s296 = smul.u32 8, %s22
      %p297 = scmp.lt.s32.totalorder %s21, 1
      %s298 = scalar_select %p297, %s21, 1
      %s299 = smul.addr %s298, 4
      %s300 = scalar_lea.vmem %s1, %s299
      %s301 = smul.u32 8, %s22
      %p302 = scmp.lt.s32.totalorder %s21, 1
      %s303 = scalar_select %p302, %s21, 1
      %p304 = scmp.lt.s32.totalorder %s301, 7
      %s305 = scalar_select %p304, %s301, 7
      %s306 = smul.addr %s303, 8
      %s307 = sadd.s32 %s305, %s306
      %s308 = smul.addr %s307, 8
      %s309 = scalar_lea.vmem %s6, %s308
      %s310 = smul.u32 8, %s22
      %v312 = vld [vmem:[%s295] sm:$0xff]
      %v313 = vld [vmem:[%s295 + $0x8] sm:$0xff]
      %v314 = vld [vmem:[%s295 + $0x10] sm:$0xff]
      %v315 = vld [vmem:[%s295 + $0x18] sm:$0xff]
      %v316 = vld [vmem:[%s295 + $0x20] sm:$0xff]
      %v317 = vld [vmem:[%s295 + $0x28] sm:$0xff]
      %v318 = vld [vmem:[%s295 + $0x30] sm:$0xff]
      %v319 = vld [vmem:[%s295 + $0x38] sm:$0xff]
      %v320 = vld [vmem:[%s2] sm:$0xff]
      %v321 = vld [vmem:[%s2 + $0x8] sm:$0xff]
      %v322 = vld [vmem:[%s2 + $0x10] sm:$0xff]
      %v323 = vld [vmem:[%s2 + $0x18] sm:$0xff]
      %v324 = vld [vmem:[%s2 + $0x20] sm:$0xff]
      %v325 = vld [vmem:[%s2 + $0x28] sm:$0xff]
      %v326 = vld [vmem:[%s2 + $0x30] sm:$0xff]
      %v327 = vld [vmem:[%s2 + $0x38] sm:$0xff]
      %v328 = vld [vmem:[%s2 + $0x40] sm:$0xff]
      %v329 = vld [vmem:[%s2 + $0x48] sm:$0xff]
      %v330 = vld [vmem:[%s2 + $0x50] sm:$0xff]
      %v331 = vld [vmem:[%s2 + $0x58] sm:$0xff]
      %v332 = vld [vmem:[%s2 + $0x60] sm:$0xff]
      %v333 = vld [vmem:[%s2 + $0x68] sm:$0xff]
      %v334 = vld [vmem:[%s2 + $0x70] sm:$0xff]
      %v335 = vld [vmem:[%s2 + $0x78] sm:$0xff]
      %v336 = vld [vmem:[%s2 + $0x80] sm:$0xff]
      %v337 = vld [vmem:[%s2 + $0x88] sm:$0xff]
      %v338 = vld [vmem:[%s2 + $0x90] sm:$0xff]
      %v339 = vld [vmem:[%s2 + $0x98] sm:$0xff]
      %v340 = vld [vmem:[%s2 + $0xa0] sm:$0xff]
      %v341 = vld [vmem:[%s2 + $0xa8] sm:$0xff]
      %v342 = vld [vmem:[%s2 + $0xb0] sm:$0xff]
      %v343 = vld [vmem:[%s2 + $0xb8] sm:$0xff]
      %v344 = vld [vmem:[%s2 + $0xc0] sm:$0xff]
      %v345 = vld [vmem:[%s2 + $0xc8] sm:$0xff]
      %v346 = vld [vmem:[%s2 + $0xd0] sm:$0xff]
      %v347 = vld [vmem:[%s2 + $0xd8] sm:$0xff]
      %v348 = vld [vmem:[%s2 + $0xe0] sm:$0xff]
      %v349 = vld [vmem:[%s2 + $0xe8] sm:$0xff]
      %v350 = vld [vmem:[%s2 + $0xf0] sm:$0xff]
      %v351 = vld [vmem:[%s2 + $0xf8] sm:$0xff]
      %v352 = vld [vmem:[%s2 + $0x100] sm:$0xff]
      %v353 = vld [vmem:[%s2 + $0x108] sm:$0xff]
      %v354 = vld [vmem:[%s2 + $0x110] sm:$0xff]
      %v355 = vld [vmem:[%s2 + $0x118] sm:$0xff]
      %v356 = vld [vmem:[%s2 + $0x120] sm:$0xff]
      %v357 = vld [vmem:[%s2 + $0x128] sm:$0xff]
      %v358 = vld [vmem:[%s2 + $0x130] sm:$0xff]
      %v359 = vld [vmem:[%s2 + $0x138] sm:$0xff]
      %v360 = vld [vmem:[%s2 + $0x140] sm:$0xff]
      %v361 = vld [vmem:[%s2 + $0x148] sm:$0xff]
      %v362 = vld [vmem:[%s2 + $0x150] sm:$0xff]
      %v363 = vld [vmem:[%s2 + $0x158] sm:$0xff]
      %v364 = vld [vmem:[%s2 + $0x160] sm:$0xff]
      %v365 = vld [vmem:[%s2 + $0x168] sm:$0xff]
      %v366 = vld [vmem:[%s2 + $0x170] sm:$0xff]
      %v367 = vld [vmem:[%s2 + $0x178] sm:$0xff]
      %v368 = vld [vmem:[%s300] sm:$0xf]
      %v370 = vlaneseq
      %v371 = vshrl.u32 %v370, 7
      %v372 = vsub.s32 0, %v371
      %v373 = vrot.slane %v368, %v372
      %v374 = vlaneseq
      %v375 = vshrl.u32 %v374, 7
      %v376 = vsub.s32 1, %v375
      %v377 = vrot.slane %v368, %v376
      %v378 = vlaneseq
      %v379 = vshrl.u32 %v378, 7
      %v380 = vsub.s32 2, %v379
      %v381 = vrot.slane %v368, %v380
      %v382 = vlaneseq
      %v383 = vshrl.u32 %v382, 7
      %v384 = vsub.s32 3, %v383
      %v385 = vrot.slane %v368, %v384
      %v398 = vunpack.c.l.b16 %v312
      %v399 = vunpack.c.h.b16 %v312
      %v400 = vunpack.c.l.b16 %v313
      %v401 = vunpack.c.h.b16 %v313
      %v402 = vunpack.c.l.b16 %v314
      %v403 = vunpack.c.h.b16 %v314
      %v404 = vunpack.c.l.b16 %v315
      %v405 = vunpack.c.h.b16 %v315
      %v406 = vunpack.c.l.b16 %v316
      %v407 = vunpack.c.h.b16 %v316
      %v408 = vunpack.c.l.b16 %v317
      %v409 = vunpack.c.h.b16 %v317
      %v410 = vunpack.c.l.b16 %v318
      %v411 = vunpack.c.h.b16 %v318
      %v412 = vunpack.c.l.b16 %v319
      %v413 = vunpack.c.h.b16 %v319
      %v414 = vpack.c.b16 %v400, %v398
      %v415 = vpack.c.b16 %v401, %v399
      %v416 = vpack.c.b16 %v404, %v402
      %v417 = vpack.c.b16 %v405, %v403
      %v418 = vpack.c.b16 %v408, %v406
      %v419 = vpack.c.b16 %v409, %v407
      %v420 = vpack.c.b16 %v412, %v410
      %v421 = vpack.c.b16 %v413, %v411
      %v474 = vunpack.c.l.b16 %v320
      %v475 = vunpack.c.h.b16 %v320
      %v476 = vunpack.c.l.b16 %v321
      %v477 = vunpack.c.h.b16 %v321
      %v478 = vunpack.c.l.b16 %v322
      %v479 = vunpack.c.h.b16 %v322
      %v480 = vunpack.c.l.b16 %v323
      %v481 = vunpack.c.h.b16 %v323
      %v482 = vunpack.c.l.b16 %v324
      %v483 = vunpack.c.h.b16 %v324
      %v484 = vunpack.c.l.b16 %v325
      %v485 = vunpack.c.h.b16 %v325
      %v486 = vunpack.c.l.b16 %v326
      %v487 = vunpack.c.h.b16 %v326
      %v488 = vunpack.c.l.b16 %v327
      %v489 = vunpack.c.h.b16 %v327
      %v490 = vunpack.c.l.b16 %v328
      %v491 = vunpack.c.h.b16 %v328
      %v492 = vunpack.c.l.b16 %v329
      %v493 = vunpack.c.h.b16 %v329
      %v494 = vunpack.c.l.b16 %v330
      %v495 = vunpack.c.h.b16 %v330
      %v496 = vunpack.c.l.b16 %v331
      %v497 = vunpack.c.h.b16 %v331
      %v498 = vunpack.c.l.b16 %v332
      %v499 = vunpack.c.h.b16 %v332
      %v500 = vunpack.c.l.b16 %v333
      %v501 = vunpack.c.h.b16 %v333
      %v502 = vunpack.c.l.b16 %v334
      %v503 = vunpack.c.h.b16 %v334
      %v504 = vunpack.c.l.b16 %v335
      %v505 = vunpack.c.h.b16 %v335
      %v506 = vunpack.c.l.b16 %v336
      %v507 = vunpack.c.h.b16 %v336
      %v508 = vunpack.c.l.b16 %v337
      %v509 = vunpack.c.h.b16 %v337
      %v510 = vunpack.c.l.b16 %v338
      %v511 = vunpack.c.h.b16 %v338
      %v512 = vunpack.c.l.b16 %v339
      %v513 = vunpack.c.h.b16 %v339
      %v514 = vunpack.c.l.b16 %v340
      %v515 = vunpack.c.h.b16 %v340
      %v516 = vunpack.c.l.b16 %v341
      %v517 = vunpack.c.h.b16 %v341
      %v518 = vunpack.c.l.b16 %v342
      %v519 = vunpack.c.h.b16 %v342
      %v520 = vunpack.c.l.b16 %v343
      %v521 = vunpack.c.h.b16 %v343
      %v522 = vunpack.c.l.b16 %v344
      %v523 = vunpack.c.h.b16 %v344
      %v524 = vunpack.c.l.b16 %v345
      %v525 = vunpack.c.h.b16 %v345
      %v526 = vunpack.c.l.b16 %v346
      %v527 = vunpack.c.h.b16 %v346
      %v528 = vunpack.c.l.b16 %v347
      %v529 = vunpack.c.h.b16 %v347
      %v530 = vunpack.c.l.b16 %v348
      %v531 = vunpack.c.h.b16 %v348
      %v532 = vunpack.c.l.b16 %v349
      %v533 = vunpack.c.h.b16 %v349
      %v534 = vunpack.c.l.b16 %v350
      %v535 = vunpack.c.h.b16 %v350
      %v536 = vunpack.c.l.b16 %v351
      %v537 = vunpack.c.h.b16 %v351
      %v538 = vunpack.c.l.b16 %v352
      %v539 = vunpack.c.h.b16 %v352
      %v540 = vunpack.c.l.b16 %v353
      %v541 = vunpack.c.h.b16 %v353
      %v542 = vunpack.c.l.b16 %v354
      %v543 = vunpack.c.h.b16 %v354
      %v544 = vunpack.c.l.b16 %v355
      %v545 = vunpack.c.h.b16 %v355
      %v546 = vunpack.c.l.b16 %v356
      %v547 = vunpack.c.h.b16 %v356
      %v548 = vunpack.c.l.b16 %v357
      %v549 = vunpack.c.h.b16 %v357
      %v550 = vunpack.c.l.b16 %v358
      %v551 = vunpack.c.h.b16 %v358
      %v552 = vunpack.c.l.b16 %v359
      %v553 = vunpack.c.h.b16 %v359
      %v554 = vunpack.c.l.b16 %v360
      %v555 = vunpack.c.h.b16 %v360
      %v556 = vunpack.c.l.b16 %v361
      %v557 = vunpack.c.h.b16 %v361
      %v558 = vunpack.c.l.b16 %v362
      %v559 = vunpack.c.h.b16 %v362
      %v560 = vunpack.c.l.b16 %v363
      %v561 = vunpack.c.h.b16 %v363
      %v562 = vunpack.c.l.b16 %v364
      %v563 = vunpack.c.h.b16 %v364
      %v564 = vunpack.c.l.b16 %v365
      %v565 = vunpack.c.h.b16 %v365
      %v566 = vunpack.c.l.b16 %v366
      %v567 = vunpack.c.h.b16 %v366
      %v568 = vunpack.c.l.b16 %v367
      %v569 = vunpack.c.h.b16 %v367
      %v570 = vpack.c.b16 %v478, %v474
      %v571 = vpack.c.b16 %v479, %v475
      %v572 = vpack.c.b16 %v480, %v476
      %v573 = vpack.c.b16 %v481, %v477
      %v574 = vpack.c.b16 %v486, %v482
      %v575 = vpack.c.b16 %v487, %v483
      %v576 = vpack.c.b16 %v488, %v484
      %v577 = vpack.c.b16 %v489, %v485
      %v578 = vpack.c.b16 %v494, %v490
      %v579 = vpack.c.b16 %v495, %v491
      %v580 = vpack.c.b16 %v496, %v492
      %v581 = vpack.c.b16 %v497, %v493
      %v582 = vpack.c.b16 %v502, %v498
      %v583 = vpack.c.b16 %v503, %v499
      %v584 = vpack.c.b16 %v504, %v500
      %v585 = vpack.c.b16 %v505, %v501
      %v586 = vpack.c.b16 %v510, %v506
      %v587 = vpack.c.b16 %v511, %v507
      %v588 = vpack.c.b16 %v512, %v508
      %v589 = vpack.c.b16 %v513, %v509
      %v590 = vpack.c.b16 %v518, %v514
      %v591 = vpack.c.b16 %v519, %v515
      %v592 = vpack.c.b16 %v520, %v516
      %v593 = vpack.c.b16 %v521, %v517
      %v594 = vpack.c.b16 %v526, %v522
      %v595 = vpack.c.b16 %v527, %v523
      %v596 = vpack.c.b16 %v528, %v524
      %v597 = vpack.c.b16 %v529, %v525
      %v598 = vpack.c.b16 %v534, %v530
      %v599 = vpack.c.b16 %v535, %v531
      %v600 = vpack.c.b16 %v536, %v532
      %v601 = vpack.c.b16 %v537, %v533
      %v602 = vpack.c.b16 %v542, %v538
      %v603 = vpack.c.b16 %v543, %v539
      %v604 = vpack.c.b16 %v544, %v540
      %v605 = vpack.c.b16 %v545, %v541
      %v606 = vpack.c.b16 %v550, %v546
      %v607 = vpack.c.b16 %v551, %v547
      %v608 = vpack.c.b16 %v552, %v548
      %v609 = vpack.c.b16 %v553, %v549
      %v610 = vpack.c.b16 %v558, %v554
      %v611 = vpack.c.b16 %v559, %v555
      %v612 = vpack.c.b16 %v560, %v556
      %v613 = vpack.c.b16 %v561, %v557
      %v614 = vpack.c.b16 %v566, %v562
      %v615 = vpack.c.b16 %v567, %v563
      %v616 = vpack.c.b16 %v568, %v564
      %v617 = vpack.c.b16 %v569, %v565
      %vm666 = vcmask 523264
      %v668 = vsel %vm666, %v415, 0
      %v671 = vsel %vm666, %v417, 0
      %v674 = vsel %vm666, %v419, 0
      %v677 = vsel %vm666, %v421, 0
      %679 = vmatprep.subr.bf16.mxu0 %v571
      %680 = vmatpush1.bf16.msra.mxu0 %v570
      %681 = vmatprep.subr.bf16.mxu0 %v575
      %682 = vmatpush1.bf16.msra.mxu0 %v574
      %683 = vmatprep.subr.bf16.mxu0 %v579
      %684 = vmatpush1.bf16.msra.mxu0 %v578
      %685 = vmatprep.subr.bf16.mxu0 %v583
      %686 = vmatpush1.bf16.msra.mxu0 %v582
      %687 = vmatprep.subr.bf16.mxu0 %v587
      %688 = vmatpush1.bf16.msra.mxu0 %v586
      %689 = vmatprep.subr.bf16.mxu0 %v591
      %690 = vmatpush1.bf16.msra.mxu0 %v590
      %691 = vmatprep.subr.bf16.mxu0 %v595
      %692 = vmatpush1.bf16.msra.mxu0 %v594
      %693 = vmatprep.subr.bf16.mxu0 %v599
      %694 = vmatpush1.bf16.msra.mxu0 %v598
      %695 = vmatprep.subr.bf16.mxu0 %v603
      %696 = vmatpush1.bf16.msra.mxu0 %v602
      %697 = vmatprep.subr.bf16.mxu0 %v607
      %698 = vmatpush1.bf16.msra.mxu0 %v606
      %699 = vmatprep.subr.bf16.mxu0 %v611
      %700 = vmatpush1.bf16.msra.mxu0 %v610
      %701 = vmatprep.subr.bf16.mxu0 %v615
      %702 = vmatpush1.bf16.msra.mxu0 %v614
      %703 = vmatprep.subr.bf16.mxu0 0
      %704 = vmatpush1.bf16.msra.mxu0 0
      %705 = vmatprep.subr.bf16.mxu0 0
      %706 = vmatpush1.bf16.msra.mxu0 0
      %707 = vmatprep.subr.bf16.mxu0 0
      %708 = vmatpush1.bf16.msra.mxu0 0
      %709 = vmatprep.subr.bf16.mxu0 0
      %710 = vmatpush1.bf16.msra.mxu0 0
      %711 = vmatprep.mubr.bf16.mxu0 %v668
      %712 = vmatmul.mubr.bf16.gmra.mrb[0].mxu0 %v414
      %v713 = vpop.f32.mrb[0].mxu0
      %v714 = vadd.f32 %v373, %v713
      %v715 = vpop.f32.mrb[0].mxu0
      %v716 = vadd.f32 %v377, %v715
      %v717 = vpop.f32.mrb[0].mxu0
      %v718 = vadd.f32 %v373, %v717
      %v719 = vpop.f32.mrb[0].mxu0
      %v720 = vadd.f32 %v377, %v719
      %721 = vmatprep.mubr.bf16.mxu0 %v671
      %722 = vmatmul.mubr.bf16.gmra.mrb[0].mxu0 %v416
      %v723 = vpop.f32.mrb[0].mxu0
      %v724 = vadd.f32 %v373, %v723
      %v725 = vpop.f32.mrb[0].mxu0
      %v726 = vadd.f32 %v377, %v725
      %v727 = vpop.f32.mrb[0].mxu0
      %v728 = vadd.f32 %v373, %v727
      %v729 = vpop.f32.mrb[0].mxu0
      %v730 = vadd.f32 %v377, %v729
      %731 = vmatprep.mubr.bf16.mxu0 %v674
      %732 = vmatmul.mubr.bf16.gmra.mrb[0].mxu0 %v418
      %v733 = vpop.f32.mrb[0].mxu0
      %v734 = vadd.f32 %v373, %v733
      %v735 = vpop.f32.mrb[0].mxu0
      %v736 = vadd.f32 %v377, %v735
      %v737 = vpop.f32.mrb[0].mxu0
      %v738 = vadd.f32 %v373, %v737
      %v739 = vpop.f32.mrb[0].mxu0
      %v740 = vadd.f32 %v377, %v739
      %741 = vmatprep.mubr.bf16.mxu0 %v677
      %742 = vmatmul.mubr.bf16.gmra.mrb[0].mxu0 %v420
      %v743 = vpop.f32.mrb[0].mxu0
      %v744 = vadd.f32 %v373, %v743
      %v745 = vpop.f32.mrb[0].mxu0
      %v746 = vadd.f32 %v377, %v745
      %v747 = vpop.f32.mrb[0].mxu0
      %v748 = vadd.f32 %v373, %v747
      %v749 = vpop.f32.mrb[0].mxu0
      %v750 = vadd.f32 %v377, %v749
      %751 = vdwg.mxu0
      %752 = vmatprep.subr.bf16.mxu0 %v573
      %753 = vmatpush1.bf16.msra.mxu0 %v572
      %754 = vmatprep.subr.bf16.mxu0 %v577
      %755 = vmatpush1.bf16.msra.mxu0 %v576
      %756 = vmatprep.subr.bf16.mxu0 %v581
      %757 = vmatpush1.bf16.msra.mxu0 %v580
      %758 = vmatprep.subr.bf16.mxu0 %v585
      %759 = vmatpush1.bf16.msra.mxu0 %v584
      %760 = vmatprep.subr.bf16.mxu0 %v589
      %761 = vmatpush1.bf16.msra.mxu0 %v588
      %762 = vmatprep.subr.bf16.mxu0 %v593
      %763 = vmatpush1.bf16.msra.mxu0 %v592
      %764 = vmatprep.subr.bf16.mxu0 %v597
      %765 = vmatpush1.bf16.msra.mxu0 %v596
      %766 = vmatprep.subr.bf16.mxu0 %v601
      %767 = vmatpush1.bf16.msra.mxu0 %v600
      %768 = vmatprep.subr.bf16.mxu0 %v605
      %769 = vmatpush1.bf16.msra.mxu0 %v604
      %770 = vmatprep.subr.bf16.mxu0 %v609
      %771 = vmatpush1.bf16.msra.mxu0 %v608
      %772 = vmatprep.subr.bf16.mxu0 %v613
      %773 = vmatpush1.bf16.msra.mxu0 %v612
      %774 = vmatprep.subr.bf16.mxu0 %v617
      %775 = vmatpush1.bf16.msra.mxu0 %v616
      %776 = vmatprep.subr.bf16.mxu0 0
      %777 = vmatpush1.bf16.msra.mxu0 0
      %778 = vmatprep.subr.bf16.mxu0 0
      %779 = vmatpush1.bf16.msra.mxu0 0
      %780 = vmatprep.subr.bf16.mxu0 0
      %781 = vmatpush1.bf16.msra.mxu0 0
      %782 = vmatprep.subr.bf16.mxu0 0
      %783 = vmatpush1.bf16.msra.mxu0 0
      %784 = vmatprep.mubr.bf16.mxu0 %v668
      %785 = vmatmul.mubr.bf16.gmra.mrb[0].mxu0 %v414
      %v786 = vpop.f32.mrb[0].mxu0
      %v787 = vadd.f32 %v381, %v786
      %v788 = vpop.f32.mrb[0].mxu0
      %v789 = vadd.f32 %v385, %v788
      %v790 = vpop.f32.mrb[0].mxu0
      %v791 = vadd.f32 %v381, %v790
      %v792 = vpop.f32.mrb[0].mxu0
      %v793 = vadd.f32 %v385, %v792
      %794 = vmatprep.mubr.bf16.mxu0 %v671
      %795 = vmatmul.mubr.bf16.gmra.mrb[0].mxu0 %v416
      %v796 = vpop.f32.mrb[0].mxu0
      %v797 = vadd.f32 %v381, %v796
      %v798 = vpop.f32.mrb[0].mxu0
      %v799 = vadd.f32 %v385, %v798
      %v800 = vpop.f32.mrb[0].mxu0
      %v801 = vadd.f32 %v381, %v800
      %v802 = vpop.f32.mrb[0].mxu0
      %v803 = vadd.f32 %v385, %v802
      %804 = vmatprep.mubr.bf16.mxu0 %v674
      %805 = vmatmul.mubr.bf16.gmra.mrb[0].mxu0 %v418
      %v806 = vpop.f32.mrb[0].mxu0
      %v807 = vadd.f32 %v381, %v806
      %v808 = vpop.f32.mrb[0].mxu0
      %v809 = vadd.f32 %v385, %v808
      %v810 = vpop.f32.mrb[0].mxu0
      %v811 = vadd.f32 %v381, %v810
      %v812 = vpop.f32.mrb[0].mxu0
      %v813 = vadd.f32 %v385, %v812
      %814 = vmatprep.mubr.bf16.mxu0 %v677
      %815 = vmatmul.mubr.bf16.gmra.mrb[0].mxu0 %v420
      %v816 = vpop.f32.mrb[0].mxu0
      %v817 = vadd.f32 %v381, %v816
      %v818 = vpop.f32.mrb[0].mxu0
      %v819 = vadd.f32 %v385, %v818
      %v820 = vpop.f32.mrb[0].mxu0
      %v821 = vadd.f32 %v381, %v820
      %v822 = vpop.f32.mrb[0].mxu0
      %v823 = vadd.f32 %v385, %v822
      %824 = vdwg.mxu0
      %vm825 = vcmp.ge.f32.partialorder %v714, 0.0
      %vm826 = vcmp.ge.f32.partialorder %v716, 0.0
      %vm827 = vcmp.ge.f32.partialorder %v787, 0.0
      %vm828 = vcmp.ge.f32.partialorder %v789, 0.0
      %vm829 = vcmp.ge.f32.partialorder %v718, 0.0
      %vm830 = vcmp.ge.f32.partialorder %v720, 0.0
      %vm831 = vcmp.ge.f32.partialorder %v791, 0.0
      %vm832 = vcmp.ge.f32.partialorder %v793, 0.0
      %vm833 = vcmp.ge.f32.partialorder %v724, 0.0
      %vm834 = vcmp.ge.f32.partialorder %v726, 0.0
      %vm835 = vcmp.ge.f32.partialorder %v797, 0.0
      %vm836 = vcmp.ge.f32.partialorder %v799, 0.0
      %vm837 = vcmp.ge.f32.partialorder %v728, 0.0
      %vm838 = vcmp.ge.f32.partialorder %v730, 0.0
      %vm839 = vcmp.ge.f32.partialorder %v801, 0.0
      %vm840 = vcmp.ge.f32.partialorder %v803, 0.0
      %vm841 = vcmp.ge.f32.partialorder %v734, 0.0
      %vm842 = vcmp.ge.f32.partialorder %v736, 0.0
      %vm843 = vcmp.ge.f32.partialorder %v807, 0.0
      %vm844 = vcmp.ge.f32.partialorder %v809, 0.0
      %vm845 = vcmp.ge.f32.partialorder %v738, 0.0
      %vm846 = vcmp.ge.f32.partialorder %v740, 0.0
      %vm847 = vcmp.ge.f32.partialorder %v811, 0.0
      %vm848 = vcmp.ge.f32.partialorder %v813, 0.0
      %vm849 = vcmp.ge.f32.partialorder %v744, 0.0
      %vm850 = vcmp.ge.f32.partialorder %v746, 0.0
      %vm851 = vcmp.ge.f32.partialorder %v817, 0.0
      %vm852 = vcmp.ge.f32.partialorder %v819, 0.0
      %vm853 = vcmp.ge.f32.partialorder %v748, 0.0
      %vm854 = vcmp.ge.f32.partialorder %v750, 0.0
      %vm855 = vcmp.ge.f32.partialorder %v821, 0.0
      %vm856 = vcmp.ge.f32.partialorder %v823, 0.0
      %v857 = vmul.f32 %v714, 0.2
      %v858 = vmul.f32 %v716, 0.2
      %v859 = vmul.f32 %v787, 0.2
      %v860 = vmul.f32 %v789, 0.2
      %v861 = vmul.f32 %v718, 0.2
      %v862 = vmul.f32 %v720, 0.2
      %v863 = vmul.f32 %v791, 0.2
      %v864 = vmul.f32 %v793, 0.2
      %v865 = vmul.f32 %v724, 0.2
      %v866 = vmul.f32 %v726, 0.2
      %v867 = vmul.f32 %v797, 0.2
      %v868 = vmul.f32 %v799, 0.2
      %v869 = vmul.f32 %v728, 0.2
      %v870 = vmul.f32 %v730, 0.2
      %v871 = vmul.f32 %v801, 0.2
      %v872 = vmul.f32 %v803, 0.2
      %v873 = vmul.f32 %v734, 0.2
      %v874 = vmul.f32 %v736, 0.2
      %v875 = vmul.f32 %v807, 0.2
      %v876 = vmul.f32 %v809, 0.2
      %v877 = vmul.f32 %v738, 0.2
      %v878 = vmul.f32 %v740, 0.2
      %v879 = vmul.f32 %v811, 0.2
      %v880 = vmul.f32 %v813, 0.2
      %v881 = vmul.f32 %v744, 0.2
      %v882 = vmul.f32 %v746, 0.2
      %v883 = vmul.f32 %v817, 0.2
      %v884 = vmul.f32 %v819, 0.2
      %v885 = vmul.f32 %v748, 0.2
      %v886 = vmul.f32 %v750, 0.2
      %v887 = vmul.f32 %v821, 0.2
      %v888 = vmul.f32 %v823, 0.2
      %v889 = vsel %vm825, %v714, %v857
      %v890 = vsel %vm826, %v716, %v858
      %v891 = vsel %vm827, %v787, %v859
      %v892 = vsel %vm828, %v789, %v860
      %v893 = vsel %vm829, %v718, %v861
      %v894 = vsel %vm830, %v720, %v862
      %v895 = vsel %vm831, %v791, %v863
      %v896 = vsel %vm832, %v793, %v864
      %v897 = vsel %vm833, %v724, %v865
      %v898 = vsel %vm834, %v726, %v866
      %v899 = vsel %vm835, %v797, %v867
      %v900 = vsel %vm836, %v799, %v868
      %v901 = vsel %vm837, %v728, %v869
      %v902 = vsel %vm838, %v730, %v870
      %v903 = vsel %vm839, %v801, %v871
      %v904 = vsel %vm840, %v803, %v872
      %v905 = vsel %vm841, %v734, %v873
      %v906 = vsel %vm842, %v736, %v874
      %v907 = vsel %vm843, %v807, %v875
      %v908 = vsel %vm844, %v809, %v876
      %v909 = vsel %vm845, %v738, %v877
      %v910 = vsel %vm846, %v740, %v878
      %v911 = vsel %vm847, %v811, %v879
      %v912 = vsel %vm848, %v813, %v880
      %v913 = vsel %vm849, %v744, %v881
      %v914 = vsel %vm850, %v746, %v882
      %v915 = vsel %vm851, %v817, %v883
      %v916 = vsel %vm852, %v819, %v884
      %v917 = vsel %vm853, %v748, %v885
      %v918 = vsel %vm854, %v750, %v886
      %v919 = vsel %vm855, %v821, %v887
      %v920 = vsel %vm856, %v823, %v888
      %v921 = vpack.c.bf16 %v893, %v889
      %v922 = vpack.c.bf16 %v894, %v890
      %v923 = vpack.c.bf16 %v895, %v891
      %v924 = vpack.c.bf16 %v896, %v892
      %v925 = vpack.c.bf16 %v901, %v897
      %v926 = vpack.c.bf16 %v902, %v898
      %v927 = vpack.c.bf16 %v903, %v899
      %v928 = vpack.c.bf16 %v904, %v900
      %v929 = vpack.c.bf16 %v909, %v905
      %v930 = vpack.c.bf16 %v910, %v906
      %v931 = vpack.c.bf16 %v911, %v907
      %v932 = vpack.c.bf16 %v912, %v908
      %v933 = vpack.c.bf16 %v917, %v913
      %v934 = vpack.c.bf16 %v918, %v914
      %v935 = vpack.c.bf16 %v919, %v915
      %v936 = vpack.c.bf16 %v920, %v916
      %v937 = vld [vmem:[%s3] sm:$0xff]
      %v938 = vld [vmem:[%s3 + $0x8] sm:$0xff]
      %v939 = vld [vmem:[%s3 + $0x10] sm:$0xff]
      %v940 = vld [vmem:[%s3 + $0x18] sm:$0xff]
      %v941 = vld [vmem:[%s3 + $0x20] sm:$0xff]
      %v942 = vld [vmem:[%s3 + $0x28] sm:$0xff]
      %v943 = vld [vmem:[%s3 + $0x30] sm:$0xff]
      %v944 = vld [vmem:[%s3 + $0x38] sm:$0xff]
      %v945 = vld [vmem:[%s3 + $0x40] sm:$0xff]
      %v946 = vld [vmem:[%s3 + $0x48] sm:$0xff]
      %v947 = vld [vmem:[%s3 + $0x50] sm:$0xff]
      %v948 = vld [vmem:[%s3 + $0x58] sm:$0xff]
      %v949 = vld [vmem:[%s3 + $0x60] sm:$0xff]
      %v950 = vld [vmem:[%s3 + $0x68] sm:$0xff]
      %v951 = vld [vmem:[%s3 + $0x70] sm:$0xff]
      %v952 = vld [vmem:[%s3 + $0x78] sm:$0xff]
      %v953 = vld [vmem:[%s3 + $0x80] sm:$0xff]
      %v954 = vld [vmem:[%s3 + $0x88] sm:$0xff]
      %v955 = vld [vmem:[%s3 + $0x90] sm:$0xff]
      %v956 = vld [vmem:[%s3 + $0x98] sm:$0xff]
      %v957 = vld [vmem:[%s3 + $0xa0] sm:$0xff]
      %v958 = vld [vmem:[%s3 + $0xa8] sm:$0xff]
      %v959 = vld [vmem:[%s3 + $0xb0] sm:$0xff]
      %v960 = vld [vmem:[%s3 + $0xb8] sm:$0xff]
      %v961 = vld [vmem:[%s3 + $0xc0] sm:$0xff]
      %v962 = vld [vmem:[%s3 + $0xc8] sm:$0xff]
      %v963 = vld [vmem:[%s3 + $0xd0] sm:$0xff]
      %v964 = vld [vmem:[%s3 + $0xd8] sm:$0xff]
      %v965 = vld [vmem:[%s3 + $0xe0] sm:$0xff]
      %v966 = vld [vmem:[%s3 + $0xe8] sm:$0xff]
      %v967 = vld [vmem:[%s3 + $0xf0] sm:$0xff]
      %v968 = vld [vmem:[%s3 + $0xf8] sm:$0xff]
      %v969 = vld [vmem:[%s3 + $0x100] sm:$0xff]
      %v970 = vld [vmem:[%s3 + $0x108] sm:$0xff]
      %v971 = vld [vmem:[%s3 + $0x110] sm:$0xff]
      %v972 = vld [vmem:[%s3 + $0x118] sm:$0xff]
      %v973 = vld [vmem:[%s3 + $0x120] sm:$0xff]
      %v974 = vld [vmem:[%s3 + $0x128] sm:$0xff]
      %v975 = vld [vmem:[%s3 + $0x130] sm:$0xff]
      %v976 = vld [vmem:[%s3 + $0x138] sm:$0xff]
      %v977 = vld [vmem:[%s3 + $0x140] sm:$0xff]
      %v978 = vld [vmem:[%s3 + $0x148] sm:$0xff]
      %v979 = vld [vmem:[%s3 + $0x150] sm:$0xff]
      %v980 = vld [vmem:[%s3 + $0x158] sm:$0xff]
      %v981 = vld [vmem:[%s3 + $0x160] sm:$0xff]
      %v982 = vld [vmem:[%s3 + $0x168] sm:$0xff]
      %v983 = vld [vmem:[%s3 + $0x170] sm:$0xff]
      %v984 = vld [vmem:[%s3 + $0x178] sm:$0xff]
      %v985 = vld [vmem:[%s3 + $0x180] sm:$0xff]
      %v986 = vld [vmem:[%s3 + $0x188] sm:$0xff]
      %v987 = vld [vmem:[%s3 + $0x190] sm:$0xff]
      %v988 = vld [vmem:[%s3 + $0x198] sm:$0xff]
      %v989 = vld [vmem:[%s3 + $0x1a0] sm:$0xff]
      %v990 = vld [vmem:[%s3 + $0x1a8] sm:$0xff]
      %v991 = vld [vmem:[%s3 + $0x1b0] sm:$0xff]
      %v992 = vld [vmem:[%s3 + $0x1b8] sm:$0xff]
      %v993 = vld [vmem:[%s3 + $0x1c0] sm:$0xff]
      %v994 = vld [vmem:[%s3 + $0x1c8] sm:$0xff]
      %v995 = vld [vmem:[%s3 + $0x1d0] sm:$0xff]
      %v996 = vld [vmem:[%s3 + $0x1d8] sm:$0xff]
      %v997 = vld [vmem:[%s3 + $0x1e0] sm:$0xff]
      %v998 = vld [vmem:[%s3 + $0x1e8] sm:$0xff]
      %v999 = vld [vmem:[%s3 + $0x1f0] sm:$0xff]
      %v1000 = vld [vmem:[%s3 + $0x1f8] sm:$0xff]
      %v1001 = vld [vmem:[%s4] sm:$0x3]
      %v1003 = vlaneseq
      %v1004 = vshrl.u32 %v1003, 7
      %v1005 = vsub.s32 0, %v1004
      %v1006 = vrot.slane %v1001, %v1005
      %v1007 = vlaneseq
      %v1008 = vshrl.u32 %v1007, 7
      %v1009 = vsub.s32 1, %v1008
      %v1010 = vrot.slane %v1001, %v1009
      %v1077 = vunpack.c.l.b16 %v937
      %v1078 = vunpack.c.h.b16 %v937
      %v1079 = vunpack.c.l.b16 %v938
      %v1080 = vunpack.c.h.b16 %v938
      %v1081 = vunpack.c.l.b16 %v939
      %v1082 = vunpack.c.h.b16 %v939
      %v1083 = vunpack.c.l.b16 %v940
      %v1084 = vunpack.c.h.b16 %v940
      %v1085 = vunpack.c.l.b16 %v941
      %v1086 = vunpack.c.h.b16 %v941
      %v1087 = vunpack.c.l.b16 %v942
      %v1088 = vunpack.c.h.b16 %v942
      %v1089 = vunpack.c.l.b16 %v943
      %v1090 = vunpack.c.h.b16 %v943
      %v1091 = vunpack.c.l.b16 %v944
      %v1092 = vunpack.c.h.b16 %v944
      %v1093 = vunpack.c.l.b16 %v945
      %v1094 = vunpack.c.h.b16 %v945
      %v1095 = vunpack.c.l.b16 %v946
      %v1096 = vunpack.c.h.b16 %v946
      %v1097 = vunpack.c.l.b16 %v947
      %v1098 = vunpack.c.h.b16 %v947
      %v1099 = vunpack.c.l.b16 %v948
      %v1100 = vunpack.c.h.b16 %v948
      %v1101 = vunpack.c.l.b16 %v949
      %v1102 = vunpack.c.h.b16 %v949
      %v1103 = vunpack.c.l.b16 %v950
      %v1104 = vunpack.c.h.b16 %v950
      %v1105 = vunpack.c.l.b16 %v951
      %v1106 = vunpack.c.h.b16 %v951
      %v1107 = vunpack.c.l.b16 %v952
      %v1108 = vunpack.c.h.b16 %v952
      %v1109 = vunpack.c.l.b16 %v953
      %v1110 = vunpack.c.h.b16 %v953
      %v1111 = vunpack.c.l.b16 %v954
      %v1112 = vunpack.c.h.b16 %v954
      %v1113 = vunpack.c.l.b16 %v955
      %v1114 = vunpack.c.h.b16 %v955
      %v1115 = vunpack.c.l.b16 %v956
      %v1116 = vunpack.c.h.b16 %v956
      %v1117 = vunpack.c.l.b16 %v957
      %v1118 = vunpack.c.h.b16 %v957
      %v1119 = vunpack.c.l.b16 %v958
      %v1120 = vunpack.c.h.b16 %v958
      %v1121 = vunpack.c.l.b16 %v959
      %v1122 = vunpack.c.h.b16 %v959
      %v1123 = vunpack.c.l.b16 %v960
      %v1124 = vunpack.c.h.b16 %v960
      %v1125 = vunpack.c.l.b16 %v961
      %v1126 = vunpack.c.h.b16 %v961
      %v1127 = vunpack.c.l.b16 %v962
      %v1128 = vunpack.c.h.b16 %v962
      %v1129 = vunpack.c.l.b16 %v963
      %v1130 = vunpack.c.h.b16 %v963
      %v1131 = vunpack.c.l.b16 %v964
      %v1132 = vunpack.c.h.b16 %v964
      %v1133 = vunpack.c.l.b16 %v965
      %v1134 = vunpack.c.h.b16 %v965
      %v1135 = vunpack.c.l.b16 %v966
      %v1136 = vunpack.c.h.b16 %v966
      %v1137 = vunpack.c.l.b16 %v967
      %v1138 = vunpack.c.h.b16 %v967
      %v1139 = vunpack.c.l.b16 %v968
      %v1140 = vunpack.c.h.b16 %v968
      %v1141 = vunpack.c.l.b16 %v969
      %v1142 = vunpack.c.h.b16 %v969
      %v1143 = vunpack.c.l.b16 %v970
      %v1144 = vunpack.c.h.b16 %v970
      %v1145 = vunpack.c.l.b16 %v971
      %v1146 = vunpack.c.h.b16 %v971
      %v1147 = vunpack.c.l.b16 %v972
      %v1148 = vunpack.c.h.b16 %v972
      %v1149 = vunpack.c.l.b16 %v973
      %v1150 = vunpack.c.h.b16 %v973
      %v1151 = vunpack.c.l.b16 %v974
      %v1152 = vunpack.c.h.b16 %v974
      %v1153 = vunpack.c.l.b16 %v975
      %v1154 = vunpack.c.h.b16 %v975
      %v1155 = vunpack.c.l.b16 %v976
      %v1156 = vunpack.c.h.b16 %v976
      %v1157 = vunpack.c.l.b16 %v977
      %v1158 = vunpack.c.h.b16 %v977
      %v1159 = vunpack.c.l.b16 %v978
      %v1160 = vunpack.c.h.b16 %v978
      %v1161 = vunpack.c.l.b16 %v979
      %v1162 = vunpack.c.h.b16 %v979
      %v1163 = vunpack.c.l.b16 %v980
      %v1164 = vunpack.c.h.b16 %v980
      %v1165 = vunpack.c.l.b16 %v981
      %v1166 = vunpack.c.h.b16 %v981
      %v1167 = vunpack.c.l.b16 %v982
      %v1168 = vunpack.c.h.b16 %v982
      %v1169 = vunpack.c.l.b16 %v983
      %v1170 = vunpack.c.h.b16 %v983
      %v1171 = vunpack.c.l.b16 %v984
      %v1172 = vunpack.c.h.b16 %v984
      %v1173 = vunpack.c.l.b16 %v985
      %v1174 = vunpack.c.h.b16 %v985
      %v1175 = vunpack.c.l.b16 %v986
      %v1176 = vunpack.c.h.b16 %v986
      %v1177 = vunpack.c.l.b16 %v987
      %v1178 = vunpack.c.h.b16 %v987
      %v1179 = vunpack.c.l.b16 %v988
      %v1180 = vunpack.c.h.b16 %v988
      %v1181 = vunpack.c.l.b16 %v989
      %v1182 = vunpack.c.h.b16 %v989
      %v1183 = vunpack.c.l.b16 %v990
      %v1184 = vunpack.c.h.b16 %v990
      %v1185 = vunpack.c.l.b16 %v991
      %v1186 = vunpack.c.h.b16 %v991
      %v1187 = vunpack.c.l.b16 %v992
      %v1188 = vunpack.c.h.b16 %v992
      %v1189 = vunpack.c.l.b16 %v993
      %v1190 = vunpack.c.h.b16 %v993
      %v1191 = vunpack.c.l.b16 %v994
      %v1192 = vunpack.c.h.b16 %v994
      %v1193 = vunpack.c.l.b16 %v995
      %v1194 = vunpack.c.h.b16 %v995
      %v1195 = vunpack.c.l.b16 %v996
      %v1196 = vunpack.c.h.b16 %v996
      %v1197 = vunpack.c.l.b16 %v997
      %v1198 = vunpack.c.h.b16 %v997
      %v1199 = vunpack.c.l.b16 %v998
      %v1200 = vunpack.c.h.b16 %v998
      %v1201 = vunpack.c.l.b16 %v999
      %v1202 = vunpack.c.h.b16 %v999
      %v1203 = vunpack.c.l.b16 %v1000
      %v1204 = vunpack.c.h.b16 %v1000
      %v1205 = vpack.c.b16 %v1079, %v1077
      %v1206 = vpack.c.b16 %v1080, %v1078
      %v1207 = vpack.c.b16 %v1083, %v1081
      %v1208 = vpack.c.b16 %v1084, %v1082
      %v1209 = vpack.c.b16 %v1087, %v1085
      %v1210 = vpack.c.b16 %v1088, %v1086
      %v1211 = vpack.c.b16 %v1091, %v1089
      %v1212 = vpack.c.b16 %v1092, %v1090
      %v1213 = vpack.c.b16 %v1095, %v1093
      %v1214 = vpack.c.b16 %v1096, %v1094
      %v1215 = vpack.c.b16 %v1099, %v1097
      %v1216 = vpack.c.b16 %v1100, %v1098
      %v1217 = vpack.c.b16 %v1103, %v1101
      %v1218 = vpack.c.b16 %v1104, %v1102
      %v1219 = vpack.c.b16 %v1107, %v1105
      %v1220 = vpack.c.b16 %v1108, %v1106
      %v1221 = vpack.c.b16 %v1111, %v1109
      %v1222 = vpack.c.b16 %v1112, %v1110
      %v1223 = vpack.c.b16 %v1115, %v1113
      %v1224 = vpack.c.b16 %v1116, %v1114
      %v1225 = vpack.c.b16 %v1119, %v1117
      %v1226 = vpack.c.b16 %v1120, %v1118
      %v1227 = vpack.c.b16 %v1123, %v1121
      %v1228 = vpack.c.b16 %v1124, %v1122
      %v1229 = vpack.c.b16 %v1127, %v1125
      %v1230 = vpack.c.b16 %v1128, %v1126
      %v1231 = vpack.c.b16 %v1131, %v1129
      %v1232 = vpack.c.b16 %v1132, %v1130
      %v1233 = vpack.c.b16 %v1135, %v1133
      %v1234 = vpack.c.b16 %v1136, %v1134
      %v1235 = vpack.c.b16 %v1139, %v1137
      %v1236 = vpack.c.b16 %v1140, %v1138
      %v1237 = vpack.c.b16 %v1143, %v1141
      %v1238 = vpack.c.b16 %v1144, %v1142
      %v1239 = vpack.c.b16 %v1147, %v1145
      %v1240 = vpack.c.b16 %v1148, %v1146
      %v1241 = vpack.c.b16 %v1151, %v1149
      %v1242 = vpack.c.b16 %v1152, %v1150
      %v1243 = vpack.c.b16 %v1155, %v1153
      %v1244 = vpack.c.b16 %v1156, %v1154
      %v1245 = vpack.c.b16 %v1159, %v1157
      %v1246 = vpack.c.b16 %v1160, %v1158
      %v1247 = vpack.c.b16 %v1163, %v1161
      %v1248 = vpack.c.b16 %v1164, %v1162
      %v1249 = vpack.c.b16 %v1167, %v1165
      %v1250 = vpack.c.b16 %v1168, %v1166
      %v1251 = vpack.c.b16 %v1171, %v1169
      %v1252 = vpack.c.b16 %v1172, %v1170
      %v1253 = vpack.c.b16 %v1175, %v1173
      %v1254 = vpack.c.b16 %v1176, %v1174
      %v1255 = vpack.c.b16 %v1179, %v1177
      %v1256 = vpack.c.b16 %v1180, %v1178
      %v1257 = vpack.c.b16 %v1183, %v1181
      %v1258 = vpack.c.b16 %v1184, %v1182
      %v1259 = vpack.c.b16 %v1187, %v1185
      %v1260 = vpack.c.b16 %v1188, %v1186
      %v1261 = vpack.c.b16 %v1191, %v1189
      %v1262 = vpack.c.b16 %v1192, %v1190
      %v1263 = vpack.c.b16 %v1195, %v1193
      %v1264 = vpack.c.b16 %v1196, %v1194
      %v1265 = vpack.c.b16 %v1199, %v1197
      %v1266 = vpack.c.b16 %v1200, %v1198
      %v1267 = vpack.c.b16 %v1203, %v1201
      %v1268 = vpack.c.b16 %v1204, %v1202
      %1333 = vmatprep.subr.bf16.mxu0 %v1206
      %1334 = vmatpush1.bf16.msra.mxu0 %v1205
      %1335 = vmatprep.subr.bf16.mxu0 %v1208
      %1336 = vmatpush1.bf16.msra.mxu0 %v1207
      %1337 = vmatprep.subr.bf16.mxu0 %v1210
      %1338 = vmatpush1.bf16.msra.mxu0 %v1209
      %1339 = vmatprep.subr.bf16.mxu0 %v1212
      %1340 = vmatpush1.bf16.msra.mxu0 %v1211
      %1341 = vmatprep.subr.bf16.mxu0 %v1214
      %1342 = vmatpush1.bf16.msra.mxu0 %v1213
      %1343 = vmatprep.subr.bf16.mxu0 %v1216
      %1344 = vmatpush1.bf16.msra.mxu0 %v1215
      %1345 = vmatprep.subr.bf16.mxu0 %v1218
      %1346 = vmatpush1.bf16.msra.mxu0 %v1217
      %1347 = vmatprep.subr.bf16.mxu0 %v1220
      %1348 = vmatpush1.bf16.msra.mxu0 %v1219
      %1349 = vmatprep.subr.bf16.mxu0 %v1222
      %1350 = vmatpush1.bf16.msra.mxu0 %v1221
      %1351 = vmatprep.subr.bf16.mxu0 %v1224
      %1352 = vmatpush1.bf16.msra.mxu0 %v1223
      %1353 = vmatprep.subr.bf16.mxu0 %v1226
      %1354 = vmatpush1.bf16.msra.mxu0 %v1225
      %1355 = vmatprep.subr.bf16.mxu0 %v1228
      %1356 = vmatpush1.bf16.msra.mxu0 %v1227
      %1357 = vmatprep.subr.bf16.mxu0 %v1230
      %1358 = vmatpush1.bf16.msra.mxu0 %v1229
      %1359 = vmatprep.subr.bf16.mxu0 %v1232
      %1360 = vmatpush1.bf16.msra.mxu0 %v1231
      %1361 = vmatprep.subr.bf16.mxu0 %v1234
      %1362 = vmatpush1.bf16.msra.mxu0 %v1233
      %1363 = vmatprep.subr.bf16.mxu0 %v1236
      %1364 = vmatpush1.bf16.msra.mxu0 %v1235
      %1365 = vmatprep.mubr.bf16.mxu0 %v922
      %1366 = vmatmul.mubr.bf16.gmra.mrb[0].mxu0 %v921
      %v1367 = vpop.f32.mrb[0].mxu0
      %v1368 = vadd.f32 %v1006, %v1367
      %v1369 = vpop.f32.mrb[0].mxu0
      %v1370 = vadd.f32 %v1010, %v1369
      %v1371 = vpop.f32.mrb[0].mxu0
      %v1372 = vadd.f32 %v1006, %v1371
      %v1373 = vpop.f32.mrb[0].mxu0
      %v1374 = vadd.f32 %v1010, %v1373
      %1375 = vmatprep.mubr.bf16.mxu0 %v926
      %1376 = vmatmul.mubr.bf16.gmra.mrb[0].mxu0 %v925
      %v1377 = vpop.f32.mrb[0].mxu0
      %v1378 = vadd.f32 %v1006, %v1377
      %v1379 = vpop.f32.mrb[0].mxu0
      %v1380 = vadd.f32 %v1010, %v1379
      %v1381 = vpop.f32.mrb[0].mxu0
      %v1382 = vadd.f32 %v1006, %v1381
      %v1383 = vpop.f32.mrb[0].mxu0
      %v1384 = vadd.f32 %v1010, %v1383
      %1385 = vmatprep.mubr.bf16.mxu0 %v930
      %1386 = vmatmul.mubr.bf16.gmra.mrb[0].mxu0 %v929
      %v1387 = vpop.f32.mrb[0].mxu0
      %v1388 = vadd.f32 %v1006, %v1387
      %v1389 = vpop.f32.mrb[0].mxu0
      %v1390 = vadd.f32 %v1010, %v1389
      %v1391 = vpop.f32.mrb[0].mxu0
      %v1392 = vadd.f32 %v1006, %v1391
      %v1393 = vpop.f32.mrb[0].mxu0
      %v1394 = vadd.f32 %v1010, %v1393
      %1395 = vmatprep.mubr.bf16.mxu0 %v934
      %1396 = vmatmul.mubr.bf16.gmra.mrb[0].mxu0 %v933
      %v1397 = vpop.f32.mrb[0].mxu0
      %v1398 = vadd.f32 %v1006, %v1397
      %v1399 = vpop.f32.mrb[0].mxu0
      %v1400 = vadd.f32 %v1010, %v1399
      %v1401 = vpop.f32.mrb[0].mxu0
      %v1402 = vadd.f32 %v1006, %v1401
      %v1403 = vpop.f32.mrb[0].mxu0
      %v1404 = vadd.f32 %v1010, %v1403
      %1405 = vdwg.mxu0
      %1406 = vmatprep.subr.bf16.mxu0 %v1238
      %1407 = vmatpush1.bf16.msra.mxu0 %v1237
      %1408 = vmatprep.subr.bf16.mxu0 %v1240
      %1409 = vmatpush1.bf16.msra.mxu0 %v1239
      %1410 = vmatprep.subr.bf16.mxu0 %v1242
      %1411 = vmatpush1.bf16.msra.mxu0 %v1241
      %1412 = vmatprep.subr.bf16.mxu0 %v1244
      %1413 = vmatpush1.bf16.msra.mxu0 %v1243
      %1414 = vmatprep.subr.bf16.mxu0 %v1246
      %1415 = vmatpush1.bf16.msra.mxu0 %v1245
      %1416 = vmatprep.subr.bf16.mxu0 %v1248
      %1417 = vmatpush1.bf16.msra.mxu0 %v1247
      %1418 = vmatprep.subr.bf16.mxu0 %v1250
      %1419 = vmatpush1.bf16.msra.mxu0 %v1249
      %1420 = vmatprep.subr.bf16.mxu0 %v1252
      %1421 = vmatpush1.bf16.msra.mxu0 %v1251
      %1422 = vmatprep.subr.bf16.mxu0 %v1254
      %1423 = vmatpush1.bf16.msra.mxu0 %v1253
      %1424 = vmatprep.subr.bf16.mxu0 %v1256
      %1425 = vmatpush1.bf16.msra.mxu0 %v1255
      %1426 = vmatprep.subr.bf16.mxu0 %v1258
      %1427 = vmatpush1.bf16.msra.mxu0 %v1257
      %1428 = vmatprep.subr.bf16.mxu0 %v1260
      %1429 = vmatpush1.bf16.msra.mxu0 %v1259
      %1430 = vmatprep.subr.bf16.mxu0 %v1262
      %1431 = vmatpush1.bf16.msra.mxu0 %v1261
      %1432 = vmatprep.subr.bf16.mxu0 %v1264
      %1433 = vmatpush1.bf16.msra.mxu0 %v1263
      %1434 = vmatprep.subr.bf16.mxu0 %v1266
      %1435 = vmatpush1.bf16.msra.mxu0 %v1265
      %1436 = vmatprep.subr.bf16.mxu0 %v1268
      %1437 = vmatpush1.bf16.msra.mxu0 %v1267
      %1438 = vmatprep.mubr.bf16.mxu0 %v924
      %1439 = vmatmul.mubr.bf16.gmra.mrb[0].mxu0 %v923
      %v1440 = vpop.f32.mrb[0].mxu0
      %v1441 = vadd.f32 %v1368, %v1440
      %v1442 = vpop.f32.mrb[0].mxu0
      %v1443 = vadd.f32 %v1370, %v1442
      %v1444 = vpop.f32.mrb[0].mxu0
      %v1445 = vadd.f32 %v1372, %v1444
      %v1446 = vpop.f32.mrb[0].mxu0
      %v1447 = vadd.f32 %v1374, %v1446
      %1448 = vmatprep.mubr.bf16.mxu0 %v928
      %1449 = vmatmul.mubr.bf16.gmra.mrb[0].mxu0 %v927
      %v1450 = vpop.f32.mrb[0].mxu0
      %v1451 = vadd.f32 %v1378, %v1450
      %v1452 = vpop.f32.mrb[0].mxu0
      %v1453 = vadd.f32 %v1380, %v1452
      %v1454 = vpop.f32.mrb[0].mxu0
      %v1455 = vadd.f32 %v1382, %v1454
      %v1456 = vpop.f32.mrb[0].mxu0
      %v1457 = vadd.f32 %v1384, %v1456
      %1458 = vmatprep.mubr.bf16.mxu0 %v932
      %1459 = vmatmul.mubr.bf16.gmra.mrb[0].mxu0 %v931
      %v1460 = vpop.f32.mrb[0].mxu0
      %v1461 = vadd.f32 %v1388, %v1460
      %v1462 = vpop.f32.mrb[0].mxu0
      %v1463 = vadd.f32 %v1390, %v1462
      %v1464 = vpop.f32.mrb[0].mxu0
      %v1465 = vadd.f32 %v1392, %v1464
      %v1466 = vpop.f32.mrb[0].mxu0
      %v1467 = vadd.f32 %v1394, %v1466
      %1468 = vmatprep.mubr.bf16.mxu0 %v936
      %1469 = vmatmul.mubr.bf16.gmra.mrb[0].mxu0 %v935
      %v1470 = vpop.f32.mrb[0].mxu0
      %v1471 = vadd.f32 %v1398, %v1470
      %v1472 = vpop.f32.mrb[0].mxu0
      %v1473 = vadd.f32 %v1400, %v1472
      %v1474 = vpop.f32.mrb[0].mxu0
      %v1475 = vadd.f32 %v1402, %v1474
      %v1476 = vpop.f32.mrb[0].mxu0
      %v1477 = vadd.f32 %v1404, %v1476
      %1478 = vdwg.mxu0
      %vm1479 = vcmp.ge.f32.partialorder %v1441, 0.0
      %vm1480 = vcmp.ge.f32.partialorder %v1443, 0.0
      %vm1481 = vcmp.ge.f32.partialorder %v1445, 0.0
      %vm1482 = vcmp.ge.f32.partialorder %v1447, 0.0
      %vm1483 = vcmp.ge.f32.partialorder %v1451, 0.0
      %vm1484 = vcmp.ge.f32.partialorder %v1453, 0.0
      %vm1485 = vcmp.ge.f32.partialorder %v1455, 0.0
      %vm1486 = vcmp.ge.f32.partialorder %v1457, 0.0
      %vm1487 = vcmp.ge.f32.partialorder %v1461, 0.0
      %vm1488 = vcmp.ge.f32.partialorder %v1463, 0.0
      %vm1489 = vcmp.ge.f32.partialorder %v1465, 0.0
      %vm1490 = vcmp.ge.f32.partialorder %v1467, 0.0
      %vm1491 = vcmp.ge.f32.partialorder %v1471, 0.0
      %vm1492 = vcmp.ge.f32.partialorder %v1473, 0.0
      %vm1493 = vcmp.ge.f32.partialorder %v1475, 0.0
      %vm1494 = vcmp.ge.f32.partialorder %v1477, 0.0
      %v1495 = vmul.f32 %v1441, 0.2
      %v1496 = vmul.f32 %v1443, 0.2
      %v1497 = vmul.f32 %v1445, 0.2
      %v1498 = vmul.f32 %v1447, 0.2
      %v1499 = vmul.f32 %v1451, 0.2
      %v1500 = vmul.f32 %v1453, 0.2
      %v1501 = vmul.f32 %v1455, 0.2
      %v1502 = vmul.f32 %v1457, 0.2
      %v1503 = vmul.f32 %v1461, 0.2
      %v1504 = vmul.f32 %v1463, 0.2
      %v1505 = vmul.f32 %v1465, 0.2
      %v1506 = vmul.f32 %v1467, 0.2
      %v1507 = vmul.f32 %v1471, 0.2
      %v1508 = vmul.f32 %v1473, 0.2
      %v1509 = vmul.f32 %v1475, 0.2
      %v1510 = vmul.f32 %v1477, 0.2
      %v1511 = vsel %vm1479, %v1441, %v1495
      %v1512 = vsel %vm1480, %v1443, %v1496
      %v1513 = vsel %vm1481, %v1445, %v1497
      %v1514 = vsel %vm1482, %v1447, %v1498
      %v1515 = vsel %vm1483, %v1451, %v1499
      %v1516 = vsel %vm1484, %v1453, %v1500
      %v1517 = vsel %vm1485, %v1455, %v1501
      %v1518 = vsel %vm1486, %v1457, %v1502
      %v1519 = vsel %vm1487, %v1461, %v1503
      %v1520 = vsel %vm1488, %v1463, %v1504
      %v1521 = vsel %vm1489, %v1465, %v1505
      %v1522 = vsel %vm1490, %v1467, %v1506
      %v1523 = vsel %vm1491, %v1471, %v1507
      %v1524 = vsel %vm1492, %v1473, %v1508
      %v1525 = vsel %vm1493, %v1475, %v1509
      %v1526 = vsel %vm1494, %v1477, %v1510
      %v1527 = vpack.c.bf16 %v1513, %v1511
      %v1528 = vpack.c.bf16 %v1514, %v1512
      %v1529 = vpack.c.bf16 %v1517, %v1515
      %v1530 = vpack.c.bf16 %v1518, %v1516
      %v1531 = vpack.c.bf16 %v1521, %v1519
      %v1532 = vpack.c.bf16 %v1522, %v1520
      %v1533 = vpack.c.bf16 %v1525, %v1523
      %v1534 = vpack.c.bf16 %v1526, %v1524
      %v1535 = vld [vmem:[%s5] sm:$0xf]
      %v1536 = vld [vmem:[%s5 + $0x4] sm:$0xf]
      %v1537 = vld [vmem:[%s5 + $0x8] sm:$0xf]
      %v1538 = vld [vmem:[%s5 + $0xc] sm:$0xf]
      %v1539 = vld [vmem:[%s5 + $0x10] sm:$0xf]
      %v1540 = vld [vmem:[%s5 + $0x14] sm:$0xf]
      %v1541 = vld [vmem:[%s5 + $0x18] sm:$0xf]
      %v1542 = vld [vmem:[%s5 + $0x1c] sm:$0xf]
      %v1543 = vld [vmem:[%s5 + $0x20] sm:$0xf]
      %v1544 = vld [vmem:[%s5 + $0x24] sm:$0xf]
      %v1545 = vld [vmem:[%s5 + $0x28] sm:$0xf]
      %v1546 = vld [vmem:[%s5 + $0x2c] sm:$0xf]
      %v1547 = vld [vmem:[%s5 + $0x30] sm:$0xf]
      %v1548 = vld [vmem:[%s5 + $0x34] sm:$0xf]
      %v1549 = vld [vmem:[%s5 + $0x38] sm:$0xf]
      %v1550 = vld [vmem:[%s5 + $0x3c] sm:$0xf]
      %v1551 = vld [vmem:[%s5 + $0x40] sm:$0xf]
      %v1552 = vld [vmem:[%s5 + $0x44] sm:$0xf]
      %v1553 = vld [vmem:[%s5 + $0x48] sm:$0xf]
      %v1554 = vld [vmem:[%s5 + $0x4c] sm:$0xf]
      %v1555 = vld [vmem:[%s5 + $0x50] sm:$0xf]
      %v1556 = vld [vmem:[%s5 + $0x54] sm:$0xf]
      %v1557 = vld [vmem:[%s5 + $0x58] sm:$0xf]
      %v1558 = vld [vmem:[%s5 + $0x5c] sm:$0xf]
      %v1559 = vld [vmem:[%s5 + $0x60] sm:$0xf]
      %v1560 = vld [vmem:[%s5 + $0x64] sm:$0xf]
      %v1561 = vld [vmem:[%s5 + $0x68] sm:$0xf]
      %v1562 = vld [vmem:[%s5 + $0x6c] sm:$0xf]
      %v1563 = vld [vmem:[%s5 + $0x70] sm:$0xf]
      %v1564 = vld [vmem:[%s5 + $0x74] sm:$0xf]
      %v1565 = vld [vmem:[%s5 + $0x78] sm:$0xf]
      %v1566 = vld [vmem:[%s5 + $0x7c] sm:$0xf]
      %v1599 = vunpack.c.l.b16 %v1535
      %v1600 = vunpack.c.l.b16 %v1536
      %v1601 = vunpack.c.l.b16 %v1537
      %v1602 = vunpack.c.l.b16 %v1538
      %v1603 = vunpack.c.l.b16 %v1539
      %v1604 = vunpack.c.l.b16 %v1540
      %v1605 = vunpack.c.l.b16 %v1541
      %v1606 = vunpack.c.l.b16 %v1542
      %v1607 = vunpack.c.l.b16 %v1543
      %v1608 = vunpack.c.l.b16 %v1544
      %v1609 = vunpack.c.l.b16 %v1545
      %v1610 = vunpack.c.l.b16 %v1546
      %v1611 = vunpack.c.l.b16 %v1547
      %v1612 = vunpack.c.l.b16 %v1548
      %v1613 = vunpack.c.l.b16 %v1549
      %v1614 = vunpack.c.l.b16 %v1550
      %v1615 = vunpack.c.l.b16 %v1551
      %v1616 = vunpack.c.l.b16 %v1552
      %v1617 = vunpack.c.l.b16 %v1553
      %v1618 = vunpack.c.l.b16 %v1554
      %v1619 = vunpack.c.l.b16 %v1555
      %v1620 = vunpack.c.l.b16 %v1556
      %v1621 = vunpack.c.l.b16 %v1557
      %v1622 = vunpack.c.l.b16 %v1558
      %v1623 = vunpack.c.l.b16 %v1559
      %v1624 = vunpack.c.l.b16 %v1560
      %v1625 = vunpack.c.l.b16 %v1561
      %v1626 = vunpack.c.l.b16 %v1562
      %v1627 = vunpack.c.l.b16 %v1563
      %v1628 = vunpack.c.l.b16 %v1564
      %v1629 = vunpack.c.l.b16 %v1565
      %v1630 = vunpack.c.l.b16 %v1566
      %v1631 = vpack.c.b16 %v1600, %v1599
      %v1632 = vpack.c.b16 %v1602, %v1601
      %v1633 = vpack.c.b16 %v1604, %v1603
      %v1634 = vpack.c.b16 %v1606, %v1605
      %v1635 = vpack.c.b16 %v1608, %v1607
      %v1636 = vpack.c.b16 %v1610, %v1609
      %v1637 = vpack.c.b16 %v1612, %v1611
      %v1638 = vpack.c.b16 %v1614, %v1613
      %v1639 = vpack.c.b16 %v1616, %v1615
      %v1640 = vpack.c.b16 %v1618, %v1617
      %v1641 = vpack.c.b16 %v1620, %v1619
      %v1642 = vpack.c.b16 %v1622, %v1621
      %v1643 = vpack.c.b16 %v1624, %v1623
      %v1644 = vpack.c.b16 %v1626, %v1625
      %v1645 = vpack.c.b16 %v1628, %v1627
      %v1646 = vpack.c.b16 %v1630, %v1629
      %1663 = vmatprep.subr.bf16.mxu0 0
      %1664 = vmatpush1.bf16.msra.mxu0 %v1631
      %1665 = vmatprep.subr.bf16.mxu0 0
      %1666 = vmatpush1.bf16.msra.mxu0 %v1632
      %1667 = vmatprep.subr.bf16.mxu0 0
      %1668 = vmatpush1.bf16.msra.mxu0 %v1633
      %1669 = vmatprep.subr.bf16.mxu0 0
      %1670 = vmatpush1.bf16.msra.mxu0 %v1634
      %1671 = vmatprep.subr.bf16.mxu0 0
      %1672 = vmatpush1.bf16.msra.mxu0 %v1635
      %1673 = vmatprep.subr.bf16.mxu0 0
      %1674 = vmatpush1.bf16.msra.mxu0 %v1636
      %1675 = vmatprep.subr.bf16.mxu0 0
      %1676 = vmatpush1.bf16.msra.mxu0 %v1637
      %1677 = vmatprep.subr.bf16.mxu0 0
      %1678 = vmatpush1.bf16.msra.mxu0 %v1638
      %1679 = vmatprep.subr.bf16.mxu0 0
      %1680 = vmatpush1.bf16.msra.mxu0 %v1639
      %1681 = vmatprep.subr.bf16.mxu0 0
      %1682 = vmatpush1.bf16.msra.mxu0 %v1640
      %1683 = vmatprep.subr.bf16.mxu0 0
      %1684 = vmatpush1.bf16.msra.mxu0 %v1641
      %1685 = vmatprep.subr.bf16.mxu0 0
      %1686 = vmatpush1.bf16.msra.mxu0 %v1642
      %1687 = vmatprep.subr.bf16.mxu0 0
      %1688 = vmatpush1.bf16.msra.mxu0 %v1643
      %1689 = vmatprep.subr.bf16.mxu0 0
      %1690 = vmatpush1.bf16.msra.mxu0 %v1644
      %1691 = vmatprep.subr.bf16.mxu0 0
      %1692 = vmatpush1.bf16.msra.mxu0 %v1645
      %1693 = vmatprep.subr.bf16.mxu0 0
      %1694 = vmatpush1.bf16.msra.mxu0 %v1646
      %1695 = vmatprep.mubr.bf16.mxu0 %v1528
      %1696 = vmatmul.mubr.bf16.gmra.mrb[0].mxu0 %v1527
      %v1697 = vpop.f32.mrb[0].mxu0
      %v1698 = vadd.f32 0.0, %v1697
      %v1699 = vpop.f32.mrb[0].mxu0
      %v1700 = vpop.f32.mrb[0].mxu0
      %v1701 = vadd.f32 0.0, %v1700
      %v1702 = vpop.f32.mrb[0].mxu0
      %1703 = vmatprep.mubr.bf16.mxu0 %v1530
      %1704 = vmatmul.mubr.bf16.gmra.mrb[0].mxu0 %v1529
      %v1705 = vpop.f32.mrb[0].mxu0
      %v1706 = vadd.f32 0.0, %v1705
      %v1707 = vpop.f32.mrb[0].mxu0
      %v1708 = vpop.f32.mrb[0].mxu0
      %v1709 = vadd.f32 0.0, %v1708
      %v1710 = vpop.f32.mrb[0].mxu0
      %1711 = vmatprep.mubr.bf16.mxu0 %v1532
      %1712 = vmatmul.mubr.bf16.gmra.mrb[0].mxu0 %v1531
      %v1713 = vpop.f32.mrb[0].mxu0
      %v1714 = vadd.f32 0.0, %v1713
      %v1715 = vpop.f32.mrb[0].mxu0
      %v1716 = vpop.f32.mrb[0].mxu0
      %v1717 = vadd.f32 0.0, %v1716
      %v1718 = vpop.f32.mrb[0].mxu0
      %1719 = vmatprep.mubr.bf16.mxu0 %v1534
      %1720 = vmatmul.mubr.bf16.gmra.mrb[0].mxu0 %v1533
      %v1721 = vpop.f32.mrb[0].mxu0
      %v1722 = vadd.f32 0.0, %v1721
      %v1723 = vpop.f32.mrb[0].mxu0
      %v1724 = vpop.f32.mrb[0].mxu0
      %v1725 = vadd.f32 0.0, %v1724
      %v1726 = vpop.f32.mrb[0].mxu0
      %1727 = vdwg.mxu0
      %vm1728 = vcmask 105472
      %1729 = vst.msk [vmem:[%s309] sm:$0xff] %vm1728, %v1698
      %1730 = vst.msk [vmem:[%s309 + $0x8] sm:$0xff] %vm1728, %v1701
      %1731 = vst.msk [vmem:[%s309 + $0x10] sm:$0xff] %vm1728, %v1706
      %1732 = vst.msk [vmem:[%s309 + $0x18] sm:$0xff] %vm1728, %v1709
      %1733 = vst.msk [vmem:[%s309 + $0x20] sm:$0xff] %vm1728, %v1714
      %1734 = vst.msk [vmem:[%s309 + $0x28] sm:$0xff] %vm1728, %v1717
      %1735 = vst.msk [vmem:[%s309 + $0x30] sm:$0xff] %vm1728, %v1722
      %1736 = vst.msk [vmem:[%s309 + $0x38] sm:$0xff] %vm1728, %v1725
      %s1737 = smul.u32 8, %s22
      %p1738 = scmp.lt.s32.totalorder %s21, 1
      %s1739 = scalar_select %p1738, %s21, 1
      %p1740 = scmp.lt.s32.totalorder %s1737, 7
      %s1741 = scalar_select %p1740, %s1737, 7
      %s1742 = smul.addr %s1739, 8
      %s1743 = sadd.s32 %s1741, %s1742
      %s1744 = smul.addr %s1743, 8
      %s1745 = scalar_lea.vmem %s6, %s1744
      // Predicated region
      $region45: #{dgcnn_sem_seg_forward.15} parent=43 // pred_check
        %p1746 = pneg %p187
      $region46: #{dgcnn_sem_seg_forward.15} parent=43 // pred_check_branch
        %1748 = sbr.rel (%p1746) target = $region48
      $region47: #{dgcnn_sem_seg_forward.15} parent=43 // pred_region
        %s1749 = smul.u32 8, %s22
      $region48: #{dgcnn_sem_seg_forward.15} parent=43 // pred_fallthru
        _
    $region44: #{dgcnn_sem_seg_forward.15} parent=5 // pred_fallthru
      _
    %p1750 = scmp.le.s32.totalorder 2, %s12
    // Predicated region
    $region49: #{dgcnn_sem_seg_forward.15} parent=5 // pred_check
      %p1751 = pneg %p1750
    $region50: #{dgcnn_sem_seg_forward.15} parent=5 // pred_check_branch
      %1753 = sbr.rel (%p1751) target = $region52
    $region51: #{dgcnn_sem_seg_forward.15} parent=5 // pred_region
      %s1754 = ssub.s32 %s12, 2
      // Predicated region
      $region53: #{dgcnn_sem_seg_forward.15} parent=51 // pred_check
        %p1755 = pneg %p193
      $region54: #{dgcnn_sem_seg_forward.15} parent=51 // pred_check_branch
        %1757 = sbr.rel (%p1755) target = $region56
      $region55: #{dgcnn_sem_seg_forward.15} parent=51 // pred_region
        %s1758 = smul.u32 8, %s24
        %p1759 = scmp.lt.s32.totalorder %s23, 1
        %s1760 = scalar_select %p1759, %s23, 1
        %p1761 = scmp.lt.s32.totalorder %s1758, 7
        %s1762 = scalar_select %p1761, %s1758, 7
        %s1763 = smul.addr %s1760, 8
        %s1764 = sadd.s32 %s1762, %s1763
        %s1765 = smul.addr %s1764, 8
        %s1766 = scalar_lea.vmem %s6, %s1765
      $region56: #{dgcnn_sem_seg_forward.15} parent=51 // pred_fallthru
        _
    $region52: #{dgcnn_sem_seg_forward.15} parent=5 // pred_fallthru
      _
  $region6: #{dgcnn_sem_seg_forward.15} parent=0 // loop_footer
    %s16 = sadd.s32 1, %s12
  $region7: #{dgcnn_sem_seg_forward.15} parent=0 // loop_footer_branch
    %11 = sbr.rel target = $region3
  $region8: #{dgcnn_sem_seg_forward.15} parent=0 // loop_exit
    _

</llo_original>
